<compile_context>
chip_gen: v7x
topology: tpu7x:2x2x1
jax: 0.10.0
libtpu: 0.0.40
codegen_flags: <defaults>
</compile_context>

<pallas_src>
import functools

import jax
import jax.numpy as jnp
from jax import lax
from jax.experimental import pallas as pl
from jax.experimental.pallas import tpu as pltpu


_LN_EPS = 1e-5  # PyTorch nn.LayerNorm default


# ----------------------------------------------------------------------------
# Fused per-branch kernel: embedding -> encoder layer -> encoder norm -> linear
# ----------------------------------------------------------------------------
def _fused_branch_kernel(
    x_ref,
    w_emb_ref, b_emb_ref,
    w_qkv_ref, b_qkv_ref,
    w_o_ref, b_o_ref,
    n1g_ref, n1b_ref,
    w1_ref, b1_ref,
    w2_ref, b2_ref,
    n2g_ref, n2b_ref,
    neg_ref, neb_ref,
    w_out_ref, b_out_ref,
    o_ref, a_ref,
    *, n_head,
):
    f32 = jnp.float32
    bf16 = jnp.bfloat16

    def mm(a, w_ref, b_ref):
        # bf16 operands, f32 accumulation on the MXU; bias add in f32.
        return jnp.dot(a.astype(bf16), w_ref[...].astype(bf16),
                       preferred_element_type=f32) + b_ref[...]

    def layer_norm(z, g_ref, b_ref):
        mu = jnp.mean(z, axis=-1, keepdims=True)
        zc = z - mu
        var = jnp.mean(zc * zc, axis=-1, keepdims=True)
        return zc * lax.rsqrt(var + _LN_EPS) * g_ref[...] + b_ref[...]

    # ---- token embedding (Linear c_in -> d_model) ----
    x = x_ref[0]                                   # (N, C_in) f32
    emb = mm(x, w_emb_ref, b_emb_ref)              # (N, D)

    # ---- multi-head self-attention (fused QKV) ----
    qkv = mm(emb, w_qkv_ref, b_qkv_ref)            # (N, 3D)
    D = qkv.shape[-1] // 3
    Dh = D // n_head
    scale = 1.0 / (Dh ** 0.5)
    q = qkv[:, 0 * D:1 * D]
    k = qkv[:, 1 * D:2 * D]
    v = qkv[:, 2 * D:3 * D]

    ctx_parts = []
    for h in range(n_head):                        # static unroll (n_head small)
        lo, hi = h * Dh, (h + 1) * Dh
        qh = q[:, lo:hi].astype(bf16)
        kh = k[:, lo:hi].astype(bf16)
        vh = v[:, lo:hi].astype(bf16)
        # scores: q @ k^T  (contract the head dim of both operands)
        s = lax.dot_general(qh, kh, (((1,), (1,)), ((), ())),
                            preferred_element_type=f32) * scale
        s = s - jnp.max(s, axis=-1, keepdims=True)
        e = jnp.exp(s)
        a = e * pl.reciprocal(jnp.sum(e, axis=-1, keepdims=True), approx=True)
        a_ref[0, h] = a.astype(a_ref.dtype)
        ctx_parts.append(jnp.dot(a.astype(bf16), vh, preferred_element_type=f32))
    ctx = jnp.concatenate(ctx_parts, axis=-1)      # (N, D) lane-dense

    attn_out = mm(ctx, w_o_ref, b_o_ref)           # (N, D)

    # ---- encoder layer: norm1(x + attn), FFN, norm2(x + y) ----
    x1 = layer_norm(emb + attn_out, n1g_ref, n1b_ref)
    y = jnp.maximum(mm(x1, w1_ref, b1_ref), 0.0)   # (N, d_ff), conv1(k=1)+relu
    y = mm(y, w2_ref, b2_ref)                      # (N, D),    conv2(k=1)
    x2 = layer_norm(x1 + y, n2g_ref, n2b_ref)

    # ---- encoder final LayerNorm + branch output linear ----
    x3 = layer_norm(x2, neg_ref, neb_ref)
    out = mm(x3, w_out_ref, b_out_ref)             # (N, C_out)
    o_ref[0] = out.astype(o_ref.dtype)


def fused_encoder_branch(x, p, n_head):
    """One GTFormer branch. x: (B, N, C_in) -> (out (B, N, C_out), A (B, H, N, N))."""
    B, N, C_in = x.shape
    C_out = p["w_out"].shape[1]

    def const2d(arr):
        return pl.BlockSpec(arr.shape, lambda b: (0, 0))

    weights = [
        p["w_emb"], p["b_emb"],
        p["w_qkv"], p["b_qkv"],
        p["w_o"], p["b_o"],
        p["norm1_g"], p["norm1_b"],
        p["w1"], p["b1"],
        p["w2"], p["b2"],
        p["norm2_g"], p["norm2_b"],
        p["enc_norm_g"], p["enc_norm_b"],
        p["w_out"], p["b_out"],
    ]

    in_specs = [pl.BlockSpec((1, N, C_in), lambda b: (b, 0, 0))]
    in_specs += [const2d(w) for w in weights]
    out_specs = (
        pl.BlockSpec((1, N, C_out), lambda b: (b, 0, 0)),
        pl.BlockSpec((1, n_head, N, N), lambda b: (b, 0, 0, 0)),
    )

    return pl.pallas_call(
        functools.partial(_fused_branch_kernel, n_head=n_head),
        out_shape=(
            jax.ShapeDtypeStruct((B, N, C_out), x.dtype),
            jax.ShapeDtypeStruct((B, n_head, N, N), jnp.float32),
        ),
        grid=(B,),
        in_specs=in_specs,
        out_specs=out_specs,
        compiler_params=pltpu.CompilerParams(dimension_semantics=("parallel",)),
    )(x, *weights)


# ----------------------------------------------------------------------------
# GTFormer_block forward (use_only == None: both branches)
# ----------------------------------------------------------------------------
def gtformer_block(X, params, n_head):
    # temporal branch: tokens = L time steps, features = num_tiles**2
    temp_out, A_temporal = fused_encoder_branch(X, params["temporal"], n_head)
    # spatial branch: tokens = num_tiles**2, features = L time steps
    Xs = jnp.transpose(X, (0, 2, 1))
    spat_out, A_spatial = fused_encoder_branch(Xs, params["spatial"], n_head)
    out = temp_out + jnp.transpose(spat_out, (0, 2, 1))  # (B, L, T2)
    # final self.dropout(out) is identity in eval mode
    return out, A_temporal, A_spatial


# ----------------------------------------------------------------------------
# Deterministic parameter init
# ----------------------------------------------------------------------------
def _dense(key, din, dout, scale=0.05):
    kw, kb = jax.random.split(key)
    return (scale * jax.random.normal(kw, (din, dout), jnp.float32),
            scale * jax.random.normal(kb, (1, dout), jnp.float32))


def _branch_params(key, c_in, c_out, d_model, d_ff):
    ks = jax.random.split(key, 6)
    w_emb, b_emb = _dense(ks[0], c_in, d_model)
    w_qkv, b_qkv = _dense(ks[1], d_model, 3 * d_model)   # fused Q/K/V projection
    w_o, b_o = _dense(ks[2], d_model, d_model)
    w1, b1 = _dense(ks[3], d_model, d_ff)
    w2, b2 = _dense(ks[4], d_ff, d_model)
    w_out, b_out = _dense(ks[5], d_model, c_out)
    ones = jnp.ones((1, d_model), jnp.float32)
    zeros = jnp.zeros((1, d_model), jnp.float32)
    return dict(
        w_emb=w_emb, b_emb=b_emb, w_qkv=w_qkv, b_qkv=b_qkv,
        w_o=w_o, b_o=b_o, w1=w1, b1=b1, w2=w2, b2=b2,
        w_out=w_out, b_out=b_out,
        norm1_g=ones, norm1_b=zeros,
        norm2_g=ones, norm2_b=zeros,
        enc_norm_g=ones, enc_norm_b=zeros,
    )


def init_params(key, seq_len, num_tiles, d_model):
    L, T2, d_ff = seq_len + 1, num_tiles ** 2, 4 * d_model
    kt, ks = jax.random.split(key)
    return dict(
        temporal=_branch_params(kt, T2, T2, d_model, d_ff),
        spatial=_branch_params(ks, L, L, d_model, d_ff),
    )


# ----------------------------------------------------------------------------
# Pure-jnp f32 reference (correctness sanity check)
# ----------------------------------------------------------------------------
def _ref_ln(x, g, b):
    mu = jnp.mean(x, axis=-1, keepdims=True)
    var = jnp.mean((x - mu) ** 2, axis=-1, keepdims=True)
    return (x - mu) / jnp.sqrt(var + _LN_EPS) * g + b


def _ref_branch(x, p, H):
    B, N, _ = x.shape
    D = p["w_emb"].shape[1]
    Dh = D // H
    emb = x @ p["w_emb"] + p["b_emb"]
    qkv = emb @ p["w_qkv"] + p["b_qkv"]
    q, k, v = qkv[..., :D], qkv[..., D:2 * D], qkv[..., 2 * D:]

    def heads(t):
        return t.reshape(B, N, H, Dh).transpose(0, 2, 1, 3)

    q, k, v = heads(q), heads(k), heads(v)
    s = jnp.einsum("bhnd,bhmd->bhnm", q, k) / (Dh ** 0.5)
    A = jax.nn.softmax(s, axis=-1)
    ctx = jnp.einsum("bhnm,bhmd->bhnd", A, v).transpose(0, 2, 1, 3).reshape(B, N, D)
    attn_out = ctx @ p["w_o"] + p["b_o"]
    x1 = _ref_ln(emb + attn_out, p["norm1_g"], p["norm1_b"])
    y = jnp.maximum(x1 @ p["w1"] + p["b1"], 0.0) @ p["w2"] + p["b2"]
    x2 = _ref_ln(x1 + y, p["norm2_g"], p["norm2_b"])
    x3 = _ref_ln(x2, p["enc_norm_g"], p["enc_norm_b"])
    return x3 @ p["w_out"] + p["b_out"], A


def _ref_forward(X, params, H):
    t, At = _ref_branch(X, params["temporal"], H)
    s, As = _ref_branch(jnp.transpose(X, (0, 2, 1)), params["spatial"], H)
    return t + jnp.transpose(s, (0, 2, 1)), At, As


# ----------------------------------------------------------------------------
if __name__ == "__main__":
    B, seq_len, num_tiles, d_model, n_head = 2, 8, 4, 32, 4
    L, T2 = seq_len + 1, num_tiles ** 2

    key = jax.random.PRNGKey(0)
    kx, kp = jax.random.split(key)
    X = jax.random.normal(kx, (B, L, T2), dtype=jnp.float32)
    params = init_params(kp, seq_len, num_tiles, d_model)

    fwd = jax.jit(functools.partial(gtformer_block, n_head=n_head))
    out, A_t, A_s = fwd(X, params)
    jax.block_until_ready((out, A_t, A_s))

    # sanity check against pure-JAX f32 reference (kernel uses bf16 matmul
    # operands + approx softmax reciprocal, hence the looser tolerances)
    r_out, r_At, r_As = _ref_forward(X, params, n_head)
    assert out.shape == (B, L, T2)
    assert A_t.shape == (B, n_head, L, L) and A_s.shape == (B, n_head, T2, T2)
    assert jnp.allclose(out, r_out, atol=3e-2, rtol=3e-2), float(
        jnp.max(jnp.abs(out - r_out)))
    assert jnp.allclose(A_t, r_At, atol=3e-3, rtol=3e-3)
    assert jnp.allclose(A_s, r_As, atol=3e-3, rtol=3e-3)

    print("KERNEL_OK")
</pallas_src>

<mosaic_0001>
module attributes {stable_mosaic.version = 11 : i64} {
  func.func @_fused_branch_kernel(%arg0: i32, %arg1: memref<1x9x16xf32, #tpu.memory_space<vmem>>, %arg2: memref<16x32xf32, #tpu.memory_space<vmem>>, %arg3: memref<1x32xf32, #tpu.memory_space<vmem>>, %arg4: memref<32x96xf32, #tpu.memory_space<vmem>>, %arg5: memref<1x96xf32, #tpu.memory_space<vmem>>, %arg6: memref<32x32xf32, #tpu.memory_space<vmem>>, %arg7: memref<1x32xf32, #tpu.memory_space<vmem>>, %arg8: memref<1x32xf32, #tpu.memory_space<vmem>>, %arg9: memref<1x32xf32, #tpu.memory_space<vmem>>, %arg10: memref<32x128xf32, #tpu.memory_space<vmem>>, %arg11: memref<1x128xf32, #tpu.memory_space<vmem>>, %arg12: memref<128x32xf32, #tpu.memory_space<vmem>>, %arg13: memref<1x32xf32, #tpu.memory_space<vmem>>, %arg14: memref<1x32xf32, #tpu.memory_space<vmem>>, %arg15: memref<1x32xf32, #tpu.memory_space<vmem>>, %arg16: memref<1x32xf32, #tpu.memory_space<vmem>>, %arg17: memref<1x32xf32, #tpu.memory_space<vmem>>, %arg18: memref<32x16xf32, #tpu.memory_space<vmem>>, %arg19: memref<1x16xf32, #tpu.memory_space<vmem>>, %arg20: memref<1x9x16xf32, #tpu.memory_space<vmem>>, %arg21: memref<1x4x9x9xf32, #tpu.memory_space<vmem>>) attributes {dimension_semantics = [#tpu.dimension_semantics<parallel>], iteration_bounds = array<i64: 2>, scalar_prefetch = 0 : i64, scratch_operands = 0 : i64, tpu.core_type = #tpu.core_type<tc>, window_params = [{transform_indices = @transform_0, window_bounds = array<i64: 1, 9, 16>}, {pipeline_mode = #tpu.pipeline_mode<synchronous>, transform_indices = @transform_1, window_bounds = array<i64: 16, 32>}, {pipeline_mode = #tpu.pipeline_mode<synchronous>, transform_indices = @transform_2, window_bounds = array<i64: 1, 32>}, {pipeline_mode = #tpu.pipeline_mode<synchronous>, transform_indices = @transform_3, window_bounds = array<i64: 32, 96>}, {pipeline_mode = #tpu.pipeline_mode<synchronous>, transform_indices = @transform_4, window_bounds = array<i64: 1, 96>}, {pipeline_mode = #tpu.pipeline_mode<synchronous>, transform_indices = @transform_5, window_bounds = array<i64: 32, 32>}, {pipeline_mode = #tpu.pipeline_mode<synchronous>, transform_indices = @transform_6, window_bounds = array<i64: 1, 32>}, {pipeline_mode = #tpu.pipeline_mode<synchronous>, transform_indices = @transform_7, window_bounds = array<i64: 1, 32>}, {pipeline_mode = #tpu.pipeline_mode<synchronous>, transform_indices = @transform_8, window_bounds = array<i64: 1, 32>}, {pipeline_mode = #tpu.pipeline_mode<synchronous>, transform_indices = @transform_9, window_bounds = array<i64: 32, 128>}, {pipeline_mode = #tpu.pipeline_mode<synchronous>, transform_indices = @transform_10, window_bounds = array<i64: 1, 128>}, {pipeline_mode = #tpu.pipeline_mode<synchronous>, transform_indices = @transform_11, window_bounds = array<i64: 128, 32>}, {pipeline_mode = #tpu.pipeline_mode<synchronous>, transform_indices = @transform_12, window_bounds = array<i64: 1, 32>}, {pipeline_mode = #tpu.pipeline_mode<synchronous>, transform_indices = @transform_13, window_bounds = array<i64: 1, 32>}, {pipeline_mode = #tpu.pipeline_mode<synchronous>, transform_indices = @transform_14, window_bounds = array<i64: 1, 32>}, {pipeline_mode = #tpu.pipeline_mode<synchronous>, transform_indices = @transform_15, window_bounds = array<i64: 1, 32>}, {pipeline_mode = #tpu.pipeline_mode<synchronous>, transform_indices = @transform_16, window_bounds = array<i64: 1, 32>}, {pipeline_mode = #tpu.pipeline_mode<synchronous>, transform_indices = @transform_17, window_bounds = array<i64: 32, 16>}, {pipeline_mode = #tpu.pipeline_mode<synchronous>, transform_indices = @transform_18, window_bounds = array<i64: 1, 16>}, {transform_indices = @transform_19, window_bounds = array<i64: 1, 9, 16>}, {transform_indices = @transform_20, window_bounds = array<i64: 1, 4, 9, 9>}]} {
    %c0 = arith.constant 0 : index
    %c0_0 = arith.constant 0 : index
    %c0_1 = arith.constant 0 : index
    %0 = vector.load %arg1[%c0, %c0_0, %c0_1] : memref<1x9x16xf32, #tpu.memory_space<vmem>>, vector<1x9x16xf32>
    %1 = vector.shape_cast %0 : vector<1x9x16xf32> to vector<9x16xf32>
    %2 = arith.truncf %1 : vector<9x16xf32> to vector<9x16xbf16>
    %c0_2 = arith.constant 0 : index
    %c0_3 = arith.constant 0 : index
    %3 = vector.load %arg2[%c0_2, %c0_3] : memref<16x32xf32, #tpu.memory_space<vmem>>, vector<16x32xf32>
    %4 = arith.truncf %3 : vector<16x32xf32> to vector<16x32xbf16>
    %cst = arith.constant dense<0.000000e+00> : vector<9x32xf32>
    %5 = tpu.matmul %2, %4, %cst {dimension_numbers = #tpu.dot_dimension_numbers<[1], [0], [0], [1], [0, 0, 1, 1], [], []>} : vector<9x16xbf16>, vector<16x32xbf16>, vector<9x32xf32> -> vector<9x32xf32>
    %c0_4 = arith.constant 0 : index
    %c0_5 = arith.constant 0 : index
    %6 = vector.load %arg3[%c0_4, %c0_5] : memref<1x32xf32, #tpu.memory_space<vmem>>, vector<1x32xf32>
    %7 = vector.broadcast %6 : vector<1x32xf32> to vector<9x32xf32>
    %8 = arith.addf %5, %7 : vector<9x32xf32>
    %9 = arith.truncf %8 : vector<9x32xf32> to vector<9x32xbf16>
    %c0_6 = arith.constant 0 : index
    %c0_7 = arith.constant 0 : index
    %10 = vector.load %arg4[%c0_6, %c0_7] : memref<32x96xf32, #tpu.memory_space<vmem>>, vector<32x96xf32>
    %11 = arith.truncf %10 : vector<32x96xf32> to vector<32x96xbf16>
    %cst_8 = arith.constant dense<0.000000e+00> : vector<9x96xf32>
    %12 = tpu.matmul %9, %11, %cst_8 {dimension_numbers = #tpu.dot_dimension_numbers<[1], [0], [0], [1], [0, 0, 1, 1], [], []>} : vector<9x32xbf16>, vector<32x96xbf16>, vector<9x96xf32> -> vector<9x96xf32>
    %c0_9 = arith.constant 0 : index
    %c0_10 = arith.constant 0 : index
    %13 = vector.load %arg5[%c0_9, %c0_10] : memref<1x96xf32, #tpu.memory_space<vmem>>, vector<1x96xf32>
    %14 = vector.broadcast %13 : vector<1x96xf32> to vector<9x96xf32>
    %15 = arith.addf %12, %14 : vector<9x96xf32>
    %16 = vector.extract_strided_slice %15 {offsets = [0, 0], sizes = [9, 32], strides = [1, 1]} : vector<9x96xf32> to vector<9x32xf32>
    %17 = vector.extract_strided_slice %15 {offsets = [0, 32], sizes = [9, 32], strides = [1, 1]} : vector<9x96xf32> to vector<9x32xf32>
    %18 = vector.extract_strided_slice %15 {offsets = [0, 64], sizes = [9, 32], strides = [1, 1]} : vector<9x96xf32> to vector<9x32xf32>
    %19 = vector.extract_strided_slice %16 {offsets = [0, 0], sizes = [9, 8], strides = [1, 1]} : vector<9x32xf32> to vector<9x8xf32>
    %20 = arith.truncf %19 : vector<9x8xf32> to vector<9x8xbf16>
    %21 = vector.extract_strided_slice %17 {offsets = [0, 0], sizes = [9, 8], strides = [1, 1]} : vector<9x32xf32> to vector<9x8xf32>
    %22 = arith.truncf %21 : vector<9x8xf32> to vector<9x8xbf16>
    %23 = vector.extract_strided_slice %18 {offsets = [0, 0], sizes = [9, 8], strides = [1, 1]} : vector<9x32xf32> to vector<9x8xf32>
    %24 = arith.truncf %23 : vector<9x8xf32> to vector<9x8xbf16>
    %cst_11 = arith.constant dense<0.000000e+00> : vector<9x9xf32>
    %25 = tpu.matmul %20, %22, %cst_11 {dimension_numbers = #tpu.dot_dimension_numbers<[1], [1], [0], [0], [0, 0, 1, 0], [], []>} : vector<9x8xbf16>, vector<9x8xbf16>, vector<9x9xf32> -> vector<9x9xf32>
    %cst_12 = arith.constant 0.353553385 : f32
    %26 = vector.broadcast %cst_12 : f32 to vector<9x9xf32>
    %27 = arith.mulf %25, %26 : vector<9x9xf32>
    %cst_13 = arith.constant dense<0xFF800000> : vector<9xf32>
    %28 = vector.multi_reduction <maximumf>, %27, %cst_13 [1] : vector<9x9xf32> to vector<9xf32>
    %29 = vector.shape_cast %28 : vector<9xf32> to vector<9x1xf32>
    %30 = vector.broadcast %29 : vector<9x1xf32> to vector<9x9xf32>
    %31 = arith.subf %27, %30 : vector<9x9xf32>
    %32 = math.exp %31 : vector<9x9xf32>
    %cst_14 = arith.constant dense<0.000000e+00> : vector<9xf32>
    %33 = vector.multi_reduction <add>, %32, %cst_14 [1] : vector<9x9xf32> to vector<9xf32>
    %34 = vector.shape_cast %33 : vector<9xf32> to vector<9x1xf32>
    %35 = tpu.reciprocal %34 {approx = true} : vector<9x1xf32> -> vector<9x1xf32>
    %36 = vector.broadcast %35 : vector<9x1xf32> to vector<9x9xf32>
    %37 = arith.mulf %32, %36 : vector<9x9xf32>
    %c0_15 = arith.constant 0 : index
    %c0_16 = arith.constant 0 : index
    %c0_17 = arith.constant 0 : index
    %c0_18 = arith.constant 0 : index
    %38 = vector.load %arg21[%c0_15, %c0_16, %c0_17, %c0_18] : memref<1x4x9x9xf32, #tpu.memory_space<vmem>>, vector<1x1x9x9xf32>
    %39 = vector.shape_cast %38 : vector<1x1x9x9xf32> to vector<9x9xf32>
    %40 = vector.shape_cast %37 : vector<9x9xf32> to vector<1x1x9x9xf32>
    tpu.vector_store %arg21[%c0_15, %c0_16, %c0_17, %c0_18], %40 {strides = array<i32>} : memref<1x4x9x9xf32, #tpu.memory_space<vmem>>, vector<1x1x9x9xf32>,
    %41 = arith.truncf %37 : vector<9x9xf32> to vector<9x9xbf16>
    %cst_19 = arith.constant dense<0.000000e+00> : vector<9x8xf32>
    %42 = tpu.matmul %41, %24, %cst_19 {dimension_numbers = #tpu.dot_dimension_numbers<[1], [0], [0], [1], [0, 0, 1, 1], [], []>} : vector<9x9xbf16>, vector<9x8xbf16>, vector<9x8xf32> -> vector<9x8xf32>
    %43 = vector.extract_strided_slice %16 {offsets = [0, 8], sizes = [9, 8], strides = [1, 1]} : vector<9x32xf32> to vector<9x8xf32>
    %44 = arith.truncf %43 : vector<9x8xf32> to vector<9x8xbf16>
    %45 = vector.extract_strided_slice %17 {offsets = [0, 8], sizes = [9, 8], strides = [1, 1]} : vector<9x32xf32> to vector<9x8xf32>
    %46 = arith.truncf %45 : vector<9x8xf32> to vector<9x8xbf16>
    %47 = vector.extract_strided_slice %18 {offsets = [0, 8], sizes = [9, 8], strides = [1, 1]} : vector<9x32xf32> to vector<9x8xf32>
    %48 = arith.truncf %47 : vector<9x8xf32> to vector<9x8xbf16>
    %cst_20 = arith.constant dense<0.000000e+00> : vector<9x9xf32>
    %49 = tpu.matmul %44, %46, %cst_20 {dimension_numbers = #tpu.dot_dimension_numbers<[1], [1], [0], [0], [0, 0, 1, 0], [], []>} : vector<9x8xbf16>, vector<9x8xbf16>, vector<9x9xf32> -> vector<9x9xf32>
    %cst_21 = arith.constant 0.353553385 : f32
    %50 = vector.broadcast %cst_21 : f32 to vector<9x9xf32>
    %51 = arith.mulf %49, %50 : vector<9x9xf32>
    %cst_22 = arith.constant dense<0xFF800000> : vector<9xf32>
    %52 = vector.multi_reduction <maximumf>, %51, %cst_22 [1] : vector<9x9xf32> to vector<9xf32>
    %53 = vector.shape_cast %52 : vector<9xf32> to vector<9x1xf32>
    %54 = vector.broadcast %53 : vector<9x1xf32> to vector<9x9xf32>
    %55 = arith.subf %51, %54 : vector<9x9xf32>
    %56 = math.exp %55 : vector<9x9xf32>
    %cst_23 = arith.constant dense<0.000000e+00> : vector<9xf32>
    %57 = vector.multi_reduction <add>, %56, %cst_23 [1] : vector<9x9xf32> to vector<9xf32>
    %58 = vector.shape_cast %57 : vector<9xf32> to vector<9x1xf32>
    %59 = tpu.reciprocal %58 {approx = true} : vector<9x1xf32> -> vector<9x1xf32>
    %60 = vector.broadcast %59 : vector<9x1xf32> to vector<9x9xf32>
    %61 = arith.mulf %56, %60 : vector<9x9xf32>
    %c0_24 = arith.constant 0 : index
    %c1 = arith.constant 1 : index
    %c0_25 = arith.constant 0 : index
    %c0_26 = arith.constant 0 : index
    %62 = vector.load %arg21[%c0_24, %c1, %c0_25, %c0_26] : memref<1x4x9x9xf32, #tpu.memory_space<vmem>>, vector<1x1x9x9xf32>
    %63 = vector.shape_cast %62 : vector<1x1x9x9xf32> to vector<9x9xf32>
    %64 = vector.shape_cast %61 : vector<9x9xf32> to vector<1x1x9x9xf32>
    tpu.vector_store %arg21[%c0_24, %c1, %c0_25, %c0_26], %64 {strides = array<i32>} : memref<1x4x9x9xf32, #tpu.memory_space<vmem>>, vector<1x1x9x9xf32>,
    %65 = arith.truncf %61 : vector<9x9xf32> to vector<9x9xbf16>
    %cst_27 = arith.constant dense<0.000000e+00> : vector<9x8xf32>
    %66 = tpu.matmul %65, %48, %cst_27 {dimension_numbers = #tpu.dot_dimension_numbers<[1], [0], [0], [1], [0, 0, 1, 1], [], []>} : vector<9x9xbf16>, vector<9x8xbf16>, vector<9x8xf32> -> vector<9x8xf32>
    %67 = vector.extract_strided_slice %16 {offsets = [0, 16], sizes = [9, 8], strides = [1, 1]} : vector<9x32xf32> to vector<9x8xf32>
    %68 = arith.truncf %67 : vector<9x8xf32> to vector<9x8xbf16>
    %69 = vector.extract_strided_slice %17 {offsets = [0, 16], sizes = [9, 8], strides = [1, 1]} : vector<9x32xf32> to vector<9x8xf32>
    %70 = arith.truncf %69 : vector<9x8xf32> to vector<9x8xbf16>
    %71 = vector.extract_strided_slice %18 {offsets = [0, 16], sizes = [9, 8], strides = [1, 1]} : vector<9x32xf32> to vector<9x8xf32>
    %72 = arith.truncf %71 : vector<9x8xf32> to vector<9x8xbf16>
    %cst_28 = arith.constant dense<0.000000e+00> : vector<9x9xf32>
    %73 = tpu.matmul %68, %70, %cst_28 {dimension_numbers = #tpu.dot_dimension_numbers<[1], [1], [0], [0], [0, 0, 1, 0], [], []>} : vector<9x8xbf16>, vector<9x8xbf16>, vector<9x9xf32> -> vector<9x9xf32>
    %cst_29 = arith.constant 0.353553385 : f32
    %74 = vector.broadcast %cst_29 : f32 to vector<9x9xf32>
    %75 = arith.mulf %73, %74 : vector<9x9xf32>
    %cst_30 = arith.constant dense<0xFF800000> : vector<9xf32>
    %76 = vector.multi_reduction <maximumf>, %75, %cst_30 [1] : vector<9x9xf32> to vector<9xf32>
    %77 = vector.shape_cast %76 : vector<9xf32> to vector<9x1xf32>
    %78 = vector.broadcast %77 : vector<9x1xf32> to vector<9x9xf32>
    %79 = arith.subf %75, %78 : vector<9x9xf32>
    %80 = math.exp %79 : vector<9x9xf32>
    %cst_31 = arith.constant dense<0.000000e+00> : vector<9xf32>
    %81 = vector.multi_reduction <add>, %80, %cst_31 [1] : vector<9x9xf32> to vector<9xf32>
    %82 = vector.shape_cast %81 : vector<9xf32> to vector<9x1xf32>
    %83 = tpu.reciprocal %82 {approx = true} : vector<9x1xf32> -> vector<9x1xf32>
    %84 = vector.broadcast %83 : vector<9x1xf32> to vector<9x9xf32>
    %85 = arith.mulf %80, %84 : vector<9x9xf32>
    %c0_32 = arith.constant 0 : index
    %c2 = arith.constant 2 : index
    %c0_33 = arith.constant 0 : index
    %c0_34 = arith.constant 0 : index
    %86 = vector.load %arg21[%c0_32, %c2, %c0_33, %c0_34] : memref<1x4x9x9xf32, #tpu.memory_space<vmem>>, vector<1x1x9x9xf32>
    %87 = vector.shape_cast %86 : vector<1x1x9x9xf32> to vector<9x9xf32>
    %88 = vector.shape_cast %85 : vector<9x9xf32> to vector<1x1x9x9xf32>
    tpu.vector_store %arg21[%c0_32, %c2, %c0_33, %c0_34], %88 {strides = array<i32>} : memref<1x4x9x9xf32, #tpu.memory_space<vmem>>, vector<1x1x9x9xf32>,
    %89 = arith.truncf %85 : vector<9x9xf32> to vector<9x9xbf16>
    %cst_35 = arith.constant dense<0.000000e+00> : vector<9x8xf32>
    %90 = tpu.matmul %89, %72, %cst_35 {dimension_numbers = #tpu.dot_dimension_numbers<[1], [0], [0], [1], [0, 0, 1, 1], [], []>} : vector<9x9xbf16>, vector<9x8xbf16>, vector<9x8xf32> -> vector<9x8xf32>
    %91 = vector.extract_strided_slice %16 {offsets = [0, 24], sizes = [9, 8], strides = [1, 1]} : vector<9x32xf32> to vector<9x8xf32>
    %92 = arith.truncf %91 : vector<9x8xf32> to vector<9x8xbf16>
    %93 = vector.extract_strided_slice %17 {offsets = [0, 24], sizes = [9, 8], strides = [1, 1]} : vector<9x32xf32> to vector<9x8xf32>
    %94 = arith.truncf %93 : vector<9x8xf32> to vector<9x8xbf16>
    %95 = vector.extract_strided_slice %18 {offsets = [0, 24], sizes = [9, 8], strides = [1, 1]} : vector<9x32xf32> to vector<9x8xf32>
    %96 = arith.truncf %95 : vector<9x8xf32> to vector<9x8xbf16>
    %cst_36 = arith.constant dense<0.000000e+00> : vector<9x9xf32>
    %97 = tpu.matmul %92, %94, %cst_36 {dimension_numbers = #tpu.dot_dimension_numbers<[1], [1], [0], [0], [0, 0, 1, 0], [], []>} : vector<9x8xbf16>, vector<9x8xbf16>, vector<9x9xf32> -> vector<9x9xf32>
    %cst_37 = arith.constant 0.353553385 : f32
    %98 = vector.broadcast %cst_37 : f32 to vector<9x9xf32>
    %99 = arith.mulf %97, %98 : vector<9x9xf32>
    %cst_38 = arith.constant dense<0xFF800000> : vector<9xf32>
    %100 = vector.multi_reduction <maximumf>, %99, %cst_38 [1] : vector<9x9xf32> to vector<9xf32>
    %101 = vector.shape_cast %100 : vector<9xf32> to vector<9x1xf32>
    %102 = vector.broadcast %101 : vector<9x1xf32> to vector<9x9xf32>
    %103 = arith.subf %99, %102 : vector<9x9xf32>
    %104 = math.exp %103 : vector<9x9xf32>
    %cst_39 = arith.constant dense<0.000000e+00> : vector<9xf32>
    %105 = vector.multi_reduction <add>, %104, %cst_39 [1] : vector<9x9xf32> to vector<9xf32>
    %106 = vector.shape_cast %105 : vector<9xf32> to vector<9x1xf32>
    %107 = tpu.reciprocal %106 {approx = true} : vector<9x1xf32> -> vector<9x1xf32>
    %108 = vector.broadcast %107 : vector<9x1xf32> to vector<9x9xf32>
    %109 = arith.mulf %104, %108 : vector<9x9xf32>
    %c0_40 = arith.constant 0 : index
    %c3 = arith.constant 3 : index
    %c0_41 = arith.constant 0 : index
    %c0_42 = arith.constant 0 : index
    %110 = vector.load %arg21[%c0_40, %c3, %c0_41, %c0_42] : memref<1x4x9x9xf32, #tpu.memory_space<vmem>>, vector<1x1x9x9xf32>
    %111 = vector.shape_cast %110 : vector<1x1x9x9xf32> to vector<9x9xf32>
    %112 = vector.shape_cast %109 : vector<9x9xf32> to vector<1x1x9x9xf32>
    tpu.vector_store %arg21[%c0_40, %c3, %c0_41, %c0_42], %112 {strides = array<i32>} : memref<1x4x9x9xf32, #tpu.memory_space<vmem>>, vector<1x1x9x9xf32>,
    %113 = arith.truncf %109 : vector<9x9xf32> to vector<9x9xbf16>
    %cst_43 = arith.constant dense<0.000000e+00> : vector<9x8xf32>
    %114 = tpu.matmul %113, %96, %cst_43 {dimension_numbers = #tpu.dot_dimension_numbers<[1], [0], [0], [1], [0, 0, 1, 1], [], []>} : vector<9x9xbf16>, vector<9x8xbf16>, vector<9x8xf32> -> vector<9x8xf32>
    %115 = tpu.concatenate %42, %66, %90, %114 in 1 : vector<9x8xf32>, vector<9x8xf32>, vector<9x8xf32>, vector<9x8xf32> -> vector<9x32xf32>
    %116 = arith.truncf %115 : vector<9x32xf32> to vector<9x32xbf16>
    %c0_44 = arith.constant 0 : index
    %c0_45 = arith.constant 0 : index
    %117 = vector.load %arg6[%c0_44, %c0_45] : memref<32x32xf32, #tpu.memory_space<vmem>>, vector<32x32xf32>
    %118 = arith.truncf %117 : vector<32x32xf32> to vector<32x32xbf16>
    %cst_46 = arith.constant dense<0.000000e+00> : vector<9x32xf32>
    %119 = tpu.matmul %116, %118, %cst_46 {dimension_numbers = #tpu.dot_dimension_numbers<[1], [0], [0], [1], [0, 0, 1, 1], [], []>} : vector<9x32xbf16>, vector<32x32xbf16>, vector<9x32xf32> -> vector<9x32xf32>
    %c0_47 = arith.constant 0 : index
    %c0_48 = arith.constant 0 : index
    %120 = vector.load %arg7[%c0_47, %c0_48] : memref<1x32xf32, #tpu.memory_space<vmem>>, vector<1x32xf32>
    %121 = vector.broadcast %120 : vector<1x32xf32> to vector<9x32xf32>
    %122 = arith.addf %119, %121 : vector<9x32xf32>
    %123 = arith.addf %8, %122 : vector<9x32xf32>
    %cst_49 = arith.constant dense<0.000000e+00> : vector<9xf32>
    %124 = vector.multi_reduction <add>, %123, %cst_49 [1] : vector<9x32xf32> to vector<9xf32>
    %125 = vector.shape_cast %124 : vector<9xf32> to vector<9x1xf32>
    %cst_50 = arith.constant 3.200000e+01 : f32
    %126 = vector.broadcast %cst_50 : f32 to vector<9x1xf32>
    %127 = arith.divf %125, %126 : vector<9x1xf32>
    %128 = vector.broadcast %127 : vector<9x1xf32> to vector<9x32xf32>
    %129 = arith.subf %123, %128 : vector<9x32xf32>
    %130 = arith.mulf %129, %129 : vector<9x32xf32>
    %cst_51 = arith.constant dense<0.000000e+00> : vector<9xf32>
    %131 = vector.multi_reduction <add>, %130, %cst_51 [1] : vector<9x32xf32> to vector<9xf32>
    %132 = vector.shape_cast %131 : vector<9xf32> to vector<9x1xf32>
    %cst_52 = arith.constant 3.200000e+01 : f32
    %133 = vector.broadcast %cst_52 : f32 to vector<9x1xf32>
    %134 = arith.divf %132, %133 : vector<9x1xf32>
    %cst_53 = arith.constant 9.99999974E-6 : f32
    %135 = vector.broadcast %cst_53 : f32 to vector<9x1xf32>
    %136 = arith.addf %134, %135 : vector<9x1xf32>
    %137 = math.rsqrt %136 : vector<9x1xf32>
    %138 = vector.broadcast %137 : vector<9x1xf32> to vector<9x32xf32>
    %139 = arith.mulf %129, %138 : vector<9x32xf32>
    %c0_54 = arith.constant 0 : index
    %c0_55 = arith.constant 0 : index
    %140 = vector.load %arg8[%c0_54, %c0_55] : memref<1x32xf32, #tpu.memory_space<vmem>>, vector<1x32xf32>
    %141 = vector.broadcast %140 : vector<1x32xf32> to vector<9x32xf32>
    %142 = arith.mulf %139, %141 : vector<9x32xf32>
    %c0_56 = arith.constant 0 : index
    %c0_57 = arith.constant 0 : index
    %143 = vector.load %arg9[%c0_56, %c0_57] : memref<1x32xf32, #tpu.memory_space<vmem>>, vector<1x32xf32>
    %144 = vector.broadcast %143 : vector<1x32xf32> to vector<9x32xf32>
    %145 = arith.addf %142, %144 : vector<9x32xf32>
    %146 = arith.truncf %145 : vector<9x32xf32> to vector<9x32xbf16>
    %c0_58 = arith.constant 0 : index
    %c0_59 = arith.constant 0 : index
    %147 = vector.load %arg10[%c0_58, %c0_59] : memref<32x128xf32, #tpu.memory_space<vmem>>, vector<32x128xf32>
    %148 = arith.truncf %147 : vector<32x128xf32> to vector<32x128xbf16>
    %cst_60 = arith.constant dense<0.000000e+00> : vector<9x128xf32>
    %149 = tpu.matmul %146, %148, %cst_60 {dimension_numbers = #tpu.dot_dimension_numbers<[1], [0], [0], [1], [0, 0, 1, 1], [], []>} : vector<9x32xbf16>, vector<32x128xbf16>, vector<9x128xf32> -> vector<9x128xf32>
    %c0_61 = arith.constant 0 : index
    %c0_62 = arith.constant 0 : index
    %150 = vector.load %arg11[%c0_61, %c0_62] : memref<1x128xf32, #tpu.memory_space<vmem>>, vector<1x128xf32>
    %151 = vector.broadcast %150 : vector<1x128xf32> to vector<9x128xf32>
    %152 = arith.addf %149, %151 : vector<9x128xf32>
    %cst_63 = arith.constant 0.000000e+00 : f32
    %153 = vector.broadcast %cst_63 : f32 to vector<9x128xf32>
    %154 = arith.maximumf %152, %153 : vector<9x128xf32>
    %155 = arith.truncf %154 : vector<9x128xf32> to vector<9x128xbf16>
    %c0_64 = arith.constant 0 : index
    %c0_65 = arith.constant 0 : index
    %156 = vector.load %arg12[%c0_64, %c0_65] : memref<128x32xf32, #tpu.memory_space<vmem>>, vector<128x32xf32>
    %157 = arith.truncf %156 : vector<128x32xf32> to vector<128x32xbf16>
    %cst_66 = arith.constant dense<0.000000e+00> : vector<9x32xf32>
    %158 = tpu.matmul %155, %157, %cst_66 {dimension_numbers = #tpu.dot_dimension_numbers<[1], [0], [0], [1], [0, 0, 1, 1], [], []>} : vector<9x128xbf16>, vector<128x32xbf16>, vector<9x32xf32> -> vector<9x32xf32>
    %c0_67 = arith.constant 0 : index
    %c0_68 = arith.constant 0 : index
    %159 = vector.load %arg13[%c0_67, %c0_68] : memref<1x32xf32, #tpu.memory_space<vmem>>, vector<1x32xf32>
    %160 = vector.broadcast %159 : vector<1x32xf32> to vector<9x32xf32>
    %161 = arith.addf %158, %160 : vector<9x32xf32>
    %162 = arith.addf %145, %161 : vector<9x32xf32>
    %cst_69 = arith.constant dense<0.000000e+00> : vector<9xf32>
    %163 = vector.multi_reduction <add>, %162, %cst_69 [1] : vector<9x32xf32> to vector<9xf32>
    %164 = vector.shape_cast %163 : vector<9xf32> to vector<9x1xf32>
    %cst_70 = arith.constant 3.200000e+01 : f32
    %165 = vector.broadcast %cst_70 : f32 to vector<9x1xf32>
    %166 = arith.divf %164, %165 : vector<9x1xf32>
    %167 = vector.broadcast %166 : vector<9x1xf32> to vector<9x32xf32>
    %168 = arith.subf %162, %167 : vector<9x32xf32>
    %169 = arith.mulf %168, %168 : vector<9x32xf32>
    %cst_71 = arith.constant dense<0.000000e+00> : vector<9xf32>
    %170 = vector.multi_reduction <add>, %169, %cst_71 [1] : vector<9x32xf32> to vector<9xf32>
    %171 = vector.shape_cast %170 : vector<9xf32> to vector<9x1xf32>
    %cst_72 = arith.constant 3.200000e+01 : f32
    %172 = vector.broadcast %cst_72 : f32 to vector<9x1xf32>
    %173 = arith.divf %171, %172 : vector<9x1xf32>
    %cst_73 = arith.constant 9.99999974E-6 : f32
    %174 = vector.broadcast %cst_73 : f32 to vector<9x1xf32>
    %175 = arith.addf %173, %174 : vector<9x1xf32>
    %176 = math.rsqrt %175 : vector<9x1xf32>
    %177 = vector.broadcast %176 : vector<9x1xf32> to vector<9x32xf32>
    %178 = arith.mulf %168, %177 : vector<9x32xf32>
    %c0_74 = arith.constant 0 : index
    %c0_75 = arith.constant 0 : index
    %179 = vector.load %arg14[%c0_74, %c0_75] : memref<1x32xf32, #tpu.memory_space<vmem>>, vector<1x32xf32>
    %180 = vector.broadcast %179 : vector<1x32xf32> to vector<9x32xf32>
    %181 = arith.mulf %178, %180 : vector<9x32xf32>
    %c0_76 = arith.constant 0 : index
    %c0_77 = arith.constant 0 : index
    %182 = vector.load %arg15[%c0_76, %c0_77] : memref<1x32xf32, #tpu.memory_space<vmem>>, vector<1x32xf32>
    %183 = vector.broadcast %182 : vector<1x32xf32> to vector<9x32xf32>
    %184 = arith.addf %181, %183 : vector<9x32xf32>
    %cst_78 = arith.constant dense<0.000000e+00> : vector<9xf32>
    %185 = vector.multi_reduction <add>, %184, %cst_78 [1] : vector<9x32xf32> to vector<9xf32>
    %186 = vector.shape_cast %185 : vector<9xf32> to vector<9x1xf32>
    %cst_79 = arith.constant 3.200000e+01 : f32
    %187 = vector.broadcast %cst_79 : f32 to vector<9x1xf32>
    %188 = arith.divf %186, %187 : vector<9x1xf32>
    %189 = vector.broadcast %188 : vector<9x1xf32> to vector<9x32xf32>
    %190 = arith.subf %184, %189 : vector<9x32xf32>
    %191 = arith.mulf %190, %190 : vector<9x32xf32>
    %cst_80 = arith.constant dense<0.000000e+00> : vector<9xf32>
    %192 = vector.multi_reduction <add>, %191, %cst_80 [1] : vector<9x32xf32> to vector<9xf32>
    %193 = vector.shape_cast %192 : vector<9xf32> to vector<9x1xf32>
    %cst_81 = arith.constant 3.200000e+01 : f32
    %194 = vector.broadcast %cst_81 : f32 to vector<9x1xf32>
    %195 = arith.divf %193, %194 : vector<9x1xf32>
    %cst_82 = arith.constant 9.99999974E-6 : f32
    %196 = vector.broadcast %cst_82 : f32 to vector<9x1xf32>
    %197 = arith.addf %195, %196 : vector<9x1xf32>
    %198 = math.rsqrt %197 : vector<9x1xf32>
    %199 = vector.broadcast %198 : vector<9x1xf32> to vector<9x32xf32>
    %200 = arith.mulf %190, %199 : vector<9x32xf32>
    %c0_83 = arith.constant 0 : index
    %c0_84 = arith.constant 0 : index
    %201 = vector.load %arg16[%c0_83, %c0_84] : memref<1x32xf32, #tpu.memory_space<vmem>>, vector<1x32xf32>
    %202 = vector.broadcast %201 : vector<1x32xf32> to vector<9x32xf32>
    %203 = arith.mulf %200, %202 : vector<9x32xf32>
    %c0_85 = arith.constant 0 : index
    %c0_86 = arith.constant 0 : index
    %204 = vector.load %arg17[%c0_85, %c0_86] : memref<1x32xf32, #tpu.memory_space<vmem>>, vector<1x32xf32>
    %205 = vector.broadcast %204 : vector<1x32xf32> to vector<9x32xf32>
    %206 = arith.addf %203, %205 : vector<9x32xf32>
    %207 = arith.truncf %206 : vector<9x32xf32> to vector<9x32xbf16>
    %c0_87 = arith.constant 0 : index
    %c0_88 = arith.constant 0 : index
    %208 = vector.load %arg18[%c0_87, %c0_88] : memref<32x16xf32, #tpu.memory_space<vmem>>, vector<32x16xf32>
    %209 = arith.truncf %208 : vector<32x16xf32> to vector<32x16xbf16>
    %cst_89 = arith.constant dense<0.000000e+00> : vector<9x16xf32>
    %210 = tpu.matmul %207, %209, %cst_89 {dimension_numbers = #tpu.dot_dimension_numbers<[1], [0], [0], [1], [0, 0, 1, 1], [], []>} : vector<9x32xbf16>, vector<32x16xbf16>, vector<9x16xf32> -> vector<9x16xf32>
    %c0_90 = arith.constant 0 : index
    %c0_91 = arith.constant 0 : index
    %211 = vector.load %arg19[%c0_90, %c0_91] : memref<1x16xf32, #tpu.memory_space<vmem>>, vector<1x16xf32>
    %212 = vector.broadcast %211 : vector<1x16xf32> to vector<9x16xf32>
    %213 = arith.addf %210, %212 : vector<9x16xf32>
    %c0_92 = arith.constant 0 : index
    %c0_93 = arith.constant 0 : index
    %c0_94 = arith.constant 0 : index
    %214 = vector.load %arg20[%c0_92, %c0_93, %c0_94] : memref<1x9x16xf32, #tpu.memory_space<vmem>>, vector<1x9x16xf32>
    %215 = vector.shape_cast %214 : vector<1x9x16xf32> to vector<9x16xf32>
    %216 = vector.shape_cast %213 : vector<9x16xf32> to vector<1x9x16xf32>
    tpu.vector_store %arg20[%c0_92, %c0_93, %c0_94], %216 {strides = array<i32>} : memref<1x9x16xf32, #tpu.memory_space<vmem>>, vector<1x9x16xf32>,
    return
  }
  func.func @transform_0(%arg0: i32) -> (i32, i32, i32) {
    %c0_i32 = arith.constant 0 : i32
    %c0_i32_0 = arith.constant 0 : i32
    %c0_i32_1 = arith.constant 0 : i32
    return %arg0, %c0_i32, %c0_i32_0 : i32, i32, i32
  }
  func.func @transform_1(%arg0: i32) -> (i32, i32) {
    %c0_i32 = arith.constant 0 : i32
    %c0_i32_0 = arith.constant 0 : i32
    %c0_i32_1 = arith.constant 0 : i32
    return %c0_i32, %c0_i32_0 : i32, i32
  }
  func.func @transform_2(%arg0: i32) -> (i32, i32) {
    %c0_i32 = arith.constant 0 : i32
    %c0_i32_0 = arith.constant 0 : i32
    %c0_i32_1 = arith.constant 0 : i32
    return %c0_i32, %c0_i32_0 : i32, i32
  }
  func.func @transform_3(%arg0: i32) -> (i32, i32) {
    %c0_i32 = arith.constant 0 : i32
    %c0_i32_0 = arith.constant 0 : i32
    %c0_i32_1 = arith.constant 0 : i32
    return %c0_i32, %c0_i32_0 : i32, i32
  }
  func.func @transform_4(%arg0: i32) -> (i32, i32) {
    %c0_i32 = arith.constant 0 : i32
    %c0_i32_0 = arith.constant 0 : i32
    %c0_i32_1 = arith.constant 0 : i32
    return %c0_i32, %c0_i32_0 : i32, i32
  }
  func.func @transform_5(%arg0: i32) -> (i32, i32) {
    %c0_i32 = arith.constant 0 : i32
    %c0_i32_0 = arith.constant 0 : i32
    %c0_i32_1 = arith.constant 0 : i32
    return %c0_i32, %c0_i32_0 : i32, i32
  }
  func.func @transform_6(%arg0: i32) -> (i32, i32) {
    %c0_i32 = arith.constant 0 : i32
    %c0_i32_0 = arith.constant 0 : i32
    %c0_i32_1 = arith.constant 0 : i32
    return %c0_i32, %c0_i32_0 : i32, i32
  }
  func.func @transform_7(%arg0: i32) -> (i32, i32) {
    %c0_i32 = arith.constant 0 : i32
    %c0_i32_0 = arith.constant 0 : i32
    %c0_i32_1 = arith.constant 0 : i32
    return %c0_i32, %c0_i32_0 : i32, i32
  }
  func.func @transform_8(%arg0: i32) -> (i32, i32) {
    %c0_i32 = arith.constant 0 : i32
    %c0_i32_0 = arith.constant 0 : i32
    %c0_i32_1 = arith.constant 0 : i32
    return %c0_i32, %c0_i32_0 : i32, i32
  }
  func.func @transform_9(%arg0: i32) -> (i32, i32) {
    %c0_i32 = arith.constant 0 : i32
    %c0_i32_0 = arith.constant 0 : i32
    %c0_i32_1 = arith.constant 0 : i32
    return %c0_i32, %c0_i32_0 : i32, i32
  }
  func.func @transform_10(%arg0: i32) -> (i32, i32) {
    %c0_i32 = arith.constant 0 : i32
    %c0_i32_0 = arith.constant 0 : i32
    %c0_i32_1 = arith.constant 0 : i32
    return %c0_i32, %c0_i32_0 : i32, i32
  }
  func.func @transform_11(%arg0: i32) -> (i32, i32) {
    %c0_i32 = arith.constant 0 : i32
    %c0_i32_0 = arith.constant 0 : i32
    %c0_i32_1 = arith.constant 0 : i32
    return %c0_i32, %c0_i32_0 : i32, i32
  }
  func.func @transform_12(%arg0: i32) -> (i32, i32) {
    %c0_i32 = arith.constant 0 : i32
    %c0_i32_0 = arith.constant 0 : i32
    %c0_i32_1 = arith.constant 0 : i32
    return %c0_i32, %c0_i32_0 : i32, i32
  }
  func.func @transform_13(%arg0: i32) -> (i32, i32) {
    %c0_i32 = arith.constant 0 : i32
    %c0_i32_0 = arith.constant 0 : i32
    %c0_i32_1 = arith.constant 0 : i32
    return %c0_i32, %c0_i32_0 : i32, i32
  }
  func.func @transform_14(%arg0: i32) -> (i32, i32) {
    %c0_i32 = arith.constant 0 : i32
    %c0_i32_0 = arith.constant 0 : i32
    %c0_i32_1 = arith.constant 0 : i32
    return %c0_i32, %c0_i32_0 : i32, i32
  }
  func.func @transform_15(%arg0: i32) -> (i32, i32) {
    %c0_i32 = arith.constant 0 : i32
    %c0_i32_0 = arith.constant 0 : i32
    %c0_i32_1 = arith.constant 0 : i32
    return %c0_i32, %c0_i32_0 : i32, i32
  }
  func.func @transform_16(%arg0: i32) -> (i32, i32) {
    %c0_i32 = arith.constant 0 : i32
    %c0_i32_0 = arith.constant 0 : i32
    %c0_i32_1 = arith.constant 0 : i32
    return %c0_i32, %c0_i32_0 : i32, i32
  }
  func.func @transform_17(%arg0: i32) -> (i32, i32) {
    %c0_i32 = arith.constant 0 : i32
    %c0_i32_0 = arith.constant 0 : i32
    %c0_i32_1 = arith.constant 0 : i32
    return %c0_i32, %c0_i32_0 : i32, i32
  }
  func.func @transform_18(%arg0: i32) -> (i32, i32) {
    %c0_i32 = arith.constant 0 : i32
    %c0_i32_0 = arith.constant 0 : i32
    %c0_i32_1 = arith.constant 0 : i32
    return %c0_i32, %c0_i32_0 : i32, i32
  }
  func.func @transform_19(%arg0: i32) -> (i32, i32, i32) {
    %c0_i32 = arith.constant 0 : i32
    %c0_i32_0 = arith.constant 0 : i32
    %c0_i32_1 = arith.constant 0 : i32
    return %arg0, %c0_i32, %c0_i32_0 : i32, i32, i32
  }
  func.func @transform_20(%arg0: i32) -> (i32, i32, i32, i32) {
    %c0_i32 = arith.constant 0 : i32
    %c0_i32_0 = arith.constant 0 : i32
    %c0_i32_1 = arith.constant 0 : i32
    %c0_i32_2 = arith.constant 0 : i32
    return %arg0, %c0_i32, %c0_i32_0, %c0_i32_1 : i32, i32, i32, i32
  }
}

module attributes {stable_mosaic.version = 11 : i64} {
  func.func @_fused_branch_kernel(%arg0: i32, %arg1: memref<1x16x9xf32, #tpu.memory_space<vmem>>, %arg2: memref<9x32xf32, #tpu.memory_space<vmem>>, %arg3: memref<1x32xf32, #tpu.memory_space<vmem>>, %arg4: memref<32x96xf32, #tpu.memory_space<vmem>>, %arg5: memref<1x96xf32, #tpu.memory_space<vmem>>, %arg6: memref<32x32xf32, #tpu.memory_space<vmem>>, %arg7: memref<1x32xf32, #tpu.memory_space<vmem>>, %arg8: memref<1x32xf32, #tpu.memory_space<vmem>>, %arg9: memref<1x32xf32, #tpu.memory_space<vmem>>, %arg10: memref<32x128xf32, #tpu.memory_space<vmem>>, %arg11: memref<1x128xf32, #tpu.memory_space<vmem>>, %arg12: memref<128x32xf32, #tpu.memory_space<vmem>>, %arg13: memref<1x32xf32, #tpu.memory_space<vmem>>, %arg14: memref<1x32xf32, #tpu.memory_space<vmem>>, %arg15: memref<1x32xf32, #tpu.memory_space<vmem>>, %arg16: memref<1x32xf32, #tpu.memory_space<vmem>>, %arg17: memref<1x32xf32, #tpu.memory_space<vmem>>, %arg18: memref<32x9xf32, #tpu.memory_space<vmem>>, %arg19: memref<1x9xf32, #tpu.memory_space<vmem>>, %arg20: memref<1x16x9xf32, #tpu.memory_space<vmem>>, %arg21: memref<1x4x16x16xf32, #tpu.memory_space<vmem>>) attributes {dimension_semantics = [#tpu.dimension_semantics<parallel>], iteration_bounds = array<i64: 2>, scalar_prefetch = 0 : i64, scratch_operands = 0 : i64, tpu.core_type = #tpu.core_type<tc>, window_params = [{transform_indices = @transform_0, window_bounds = array<i64: 1, 16, 9>}, {pipeline_mode = #tpu.pipeline_mode<synchronous>, transform_indices = @transform_1, window_bounds = array<i64: 9, 32>}, {pipeline_mode = #tpu.pipeline_mode<synchronous>, transform_indices = @transform_2, window_bounds = array<i64: 1, 32>}, {pipeline_mode = #tpu.pipeline_mode<synchronous>, transform_indices = @transform_3, window_bounds = array<i64: 32, 96>}, {pipeline_mode = #tpu.pipeline_mode<synchronous>, transform_indices = @transform_4, window_bounds = array<i64: 1, 96>}, {pipeline_mode = #tpu.pipeline_mode<synchronous>, transform_indices = @transform_5, window_bounds = array<i64: 32, 32>}, {pipeline_mode = #tpu.pipeline_mode<synchronous>, transform_indices = @transform_6, window_bounds = array<i64: 1, 32>}, {pipeline_mode = #tpu.pipeline_mode<synchronous>, transform_indices = @transform_7, window_bounds = array<i64: 1, 32>}, {pipeline_mode = #tpu.pipeline_mode<synchronous>, transform_indices = @transform_8, window_bounds = array<i64: 1, 32>}, {pipeline_mode = #tpu.pipeline_mode<synchronous>, transform_indices = @transform_9, window_bounds = array<i64: 32, 128>}, {pipeline_mode = #tpu.pipeline_mode<synchronous>, transform_indices = @transform_10, window_bounds = array<i64: 1, 128>}, {pipeline_mode = #tpu.pipeline_mode<synchronous>, transform_indices = @transform_11, window_bounds = array<i64: 128, 32>}, {pipeline_mode = #tpu.pipeline_mode<synchronous>, transform_indices = @transform_12, window_bounds = array<i64: 1, 32>}, {pipeline_mode = #tpu.pipeline_mode<synchronous>, transform_indices = @transform_13, window_bounds = array<i64: 1, 32>}, {pipeline_mode = #tpu.pipeline_mode<synchronous>, transform_indices = @transform_14, window_bounds = array<i64: 1, 32>}, {pipeline_mode = #tpu.pipeline_mode<synchronous>, transform_indices = @transform_15, window_bounds = array<i64: 1, 32>}, {pipeline_mode = #tpu.pipeline_mode<synchronous>, transform_indices = @transform_16, window_bounds = array<i64: 1, 32>}, {pipeline_mode = #tpu.pipeline_mode<synchronous>, transform_indices = @transform_17, window_bounds = array<i64: 32, 9>}, {pipeline_mode = #tpu.pipeline_mode<synchronous>, transform_indices = @transform_18, window_bounds = array<i64: 1, 9>}, {transform_indices = @transform_19, window_bounds = array<i64: 1, 16, 9>}, {transform_indices = @transform_20, window_bounds = array<i64: 1, 4, 16, 16>}]} {
    %c0 = arith.constant 0 : index
    %c0_0 = arith.constant 0 : index
    %c0_1 = arith.constant 0 : index
    %0 = vector.load %arg1[%c0, %c0_0, %c0_1] : memref<1x16x9xf32, #tpu.memory_space<vmem>>, vector<1x16x9xf32>
    %1 = vector.shape_cast %0 : vector<1x16x9xf32> to vector<16x9xf32>
    %2 = arith.truncf %1 : vector<16x9xf32> to vector<16x9xbf16>
    %c0_2 = arith.constant 0 : index
    %c0_3 = arith.constant 0 : index
    %3 = vector.load %arg2[%c0_2, %c0_3] : memref<9x32xf32, #tpu.memory_space<vmem>>, vector<9x32xf32>
    %4 = arith.truncf %3 : vector<9x32xf32> to vector<9x32xbf16>
    %cst = arith.constant dense<0.000000e+00> : vector<16x32xf32>
    %5 = tpu.matmul %2, %4, %cst {dimension_numbers = #tpu.dot_dimension_numbers<[1], [0], [0], [1], [0, 0, 1, 1], [], []>} : vector<16x9xbf16>, vector<9x32xbf16>, vector<16x32xf32> -> vector<16x32xf32>
    %c0_4 = arith.constant 0 : index
    %c0_5 = arith.constant 0 : index
    %6 = vector.load %arg3[%c0_4, %c0_5] : memref<1x32xf32, #tpu.memory_space<vmem>>, vector<1x32xf32>
    %7 = vector.broadcast %6 : vector<1x32xf32> to vector<16x32xf32>
    %8 = arith.addf %5, %7 : vector<16x32xf32>
    %9 = arith.truncf %8 : vector<16x32xf32> to vector<16x32xbf16>
    %c0_6 = arith.constant 0 : index
    %c0_7 = arith.constant 0 : index
    %10 = vector.load %arg4[%c0_6, %c0_7] : memref<32x96xf32, #tpu.memory_space<vmem>>, vector<32x96xf32>
    %11 = arith.truncf %10 : vector<32x96xf32> to vector<32x96xbf16>
    %cst_8 = arith.constant dense<0.000000e+00> : vector<16x96xf32>
    %12 = tpu.matmul %9, %11, %cst_8 {dimension_numbers = #tpu.dot_dimension_numbers<[1], [0], [0], [1], [0, 0, 1, 1], [], []>} : vector<16x32xbf16>, vector<32x96xbf16>, vector<16x96xf32> -> vector<16x96xf32>
    %c0_9 = arith.constant 0 : index
    %c0_10 = arith.constant 0 : index
    %13 = vector.load %arg5[%c0_9, %c0_10] : memref<1x96xf32, #tpu.memory_space<vmem>>, vector<1x96xf32>
    %14 = vector.broadcast %13 : vector<1x96xf32> to vector<16x96xf32>
    %15 = arith.addf %12, %14 : vector<16x96xf32>
    %16 = vector.extract_strided_slice %15 {offsets = [0, 0], sizes = [16, 32], strides = [1, 1]} : vector<16x96xf32> to vector<16x32xf32>
    %17 = vector.extract_strided_slice %15 {offsets = [0, 32], sizes = [16, 32], strides = [1, 1]} : vector<16x96xf32> to vector<16x32xf32>
    %18 = vector.extract_strided_slice %15 {offsets = [0, 64], sizes = [16, 32], strides = [1, 1]} : vector<16x96xf32> to vector<16x32xf32>
    %19 = vector.extract_strided_slice %16 {offsets = [0, 0], sizes = [16, 8], strides = [1, 1]} : vector<16x32xf32> to vector<16x8xf32>
    %20 = arith.truncf %19 : vector<16x8xf32> to vector<16x8xbf16>
    %21 = vector.extract_strided_slice %17 {offsets = [0, 0], sizes = [16, 8], strides = [1, 1]} : vector<16x32xf32> to vector<16x8xf32>
    %22 = arith.truncf %21 : vector<16x8xf32> to vector<16x8xbf16>
    %23 = vector.extract_strided_slice %18 {offsets = [0, 0], sizes = [16, 8], strides = [1, 1]} : vector<16x32xf32> to vector<16x8xf32>
    %24 = arith.truncf %23 : vector<16x8xf32> to vector<16x8xbf16>
    %cst_11 = arith.constant dense<0.000000e+00> : vector<16x16xf32>
    %25 = tpu.matmul %20, %22, %cst_11 {dimension_numbers = #tpu.dot_dimension_numbers<[1], [1], [0], [0], [0, 0, 1, 0], [], []>} : vector<16x8xbf16>, vector<16x8xbf16>, vector<16x16xf32> -> vector<16x16xf32>
    %cst_12 = arith.constant 0.353553385 : f32
    %26 = vector.broadcast %cst_12 : f32 to vector<16x16xf32>
    %27 = arith.mulf %25, %26 : vector<16x16xf32>
    %cst_13 = arith.constant dense<0xFF800000> : vector<16xf32>
    %28 = vector.multi_reduction <maximumf>, %27, %cst_13 [1] : vector<16x16xf32> to vector<16xf32>
    %29 = vector.shape_cast %28 : vector<16xf32> to vector<16x1xf32>
    %30 = vector.broadcast %29 : vector<16x1xf32> to vector<16x16xf32>
    %31 = arith.subf %27, %30 : vector<16x16xf32>
    %32 = math.exp %31 : vector<16x16xf32>
    %cst_14 = arith.constant dense<0.000000e+00> : vector<16xf32>
    %33 = vector.multi_reduction <add>, %32, %cst_14 [1] : vector<16x16xf32> to vector<16xf32>
    %34 = vector.shape_cast %33 : vector<16xf32> to vector<16x1xf32>
    %35 = tpu.reciprocal %34 {approx = true} : vector<16x1xf32> -> vector<16x1xf32>
    %36 = vector.broadcast %35 : vector<16x1xf32> to vector<16x16xf32>
    %37 = arith.mulf %32, %36 : vector<16x16xf32>
    %c0_15 = arith.constant 0 : index
    %c0_16 = arith.constant 0 : index
    %c0_17 = arith.constant 0 : index
    %c0_18 = arith.constant 0 : index
    %38 = vector.load %arg21[%c0_15, %c0_16, %c0_17, %c0_18] : memref<1x4x16x16xf32, #tpu.memory_space<vmem>>, vector<1x1x16x16xf32>
    %39 = vector.shape_cast %38 : vector<1x1x16x16xf32> to vector<16x16xf32>
    %40 = vector.shape_cast %37 : vector<16x16xf32> to vector<1x1x16x16xf32>
    tpu.vector_store %arg21[%c0_15, %c0_16, %c0_17, %c0_18], %40 {strides = array<i32>} : memref<1x4x16x16xf32, #tpu.memory_space<vmem>>, vector<1x1x16x16xf32>,
    %41 = arith.truncf %37 : vector<16x16xf32> to vector<16x16xbf16>
    %cst_19 = arith.constant dense<0.000000e+00> : vector<16x8xf32>
    %42 = tpu.matmul %41, %24, %cst_19 {dimension_numbers = #tpu.dot_dimension_numbers<[1], [0], [0], [1], [0, 0, 1, 1], [], []>} : vector<16x16xbf16>, vector<16x8xbf16>, vector<16x8xf32> -> vector<16x8xf32>
    %43 = vector.extract_strided_slice %16 {offsets = [0, 8], sizes = [16, 8], strides = [1, 1]} : vector<16x32xf32> to vector<16x8xf32>
    %44 = arith.truncf %43 : vector<16x8xf32> to vector<16x8xbf16>
    %45 = vector.extract_strided_slice %17 {offsets = [0, 8], sizes = [16, 8], strides = [1, 1]} : vector<16x32xf32> to vector<16x8xf32>
    %46 = arith.truncf %45 : vector<16x8xf32> to vector<16x8xbf16>
    %47 = vector.extract_strided_slice %18 {offsets = [0, 8], sizes = [16, 8], strides = [1, 1]} : vector<16x32xf32> to vector<16x8xf32>
    %48 = arith.truncf %47 : vector<16x8xf32> to vector<16x8xbf16>
    %cst_20 = arith.constant dense<0.000000e+00> : vector<16x16xf32>
    %49 = tpu.matmul %44, %46, %cst_20 {dimension_numbers = #tpu.dot_dimension_numbers<[1], [1], [0], [0], [0, 0, 1, 0], [], []>} : vector<16x8xbf16>, vector<16x8xbf16>, vector<16x16xf32> -> vector<16x16xf32>
    %cst_21 = arith.constant 0.353553385 : f32
    %50 = vector.broadcast %cst_21 : f32 to vector<16x16xf32>
    %51 = arith.mulf %49, %50 : vector<16x16xf32>
    %cst_22 = arith.constant dense<0xFF800000> : vector<16xf32>
    %52 = vector.multi_reduction <maximumf>, %51, %cst_22 [1] : vector<16x16xf32> to vector<16xf32>
    %53 = vector.shape_cast %52 : vector<16xf32> to vector<16x1xf32>
    %54 = vector.broadcast %53 : vector<16x1xf32> to vector<16x16xf32>
    %55 = arith.subf %51, %54 : vector<16x16xf32>
    %56 = math.exp %55 : vector<16x16xf32>
    %cst_23 = arith.constant dense<0.000000e+00> : vector<16xf32>
    %57 = vector.multi_reduction <add>, %56, %cst_23 [1] : vector<16x16xf32> to vector<16xf32>
    %58 = vector.shape_cast %57 : vector<16xf32> to vector<16x1xf32>
    %59 = tpu.reciprocal %58 {approx = true} : vector<16x1xf32> -> vector<16x1xf32>
    %60 = vector.broadcast %59 : vector<16x1xf32> to vector<16x16xf32>
    %61 = arith.mulf %56, %60 : vector<16x16xf32>
    %c0_24 = arith.constant 0 : index
    %c1 = arith.constant 1 : index
    %c0_25 = arith.constant 0 : index
    %c0_26 = arith.constant 0 : index
    %62 = vector.load %arg21[%c0_24, %c1, %c0_25, %c0_26] : memref<1x4x16x16xf32, #tpu.memory_space<vmem>>, vector<1x1x16x16xf32>
    %63 = vector.shape_cast %62 : vector<1x1x16x16xf32> to vector<16x16xf32>
    %64 = vector.shape_cast %61 : vector<16x16xf32> to vector<1x1x16x16xf32>
    tpu.vector_store %arg21[%c0_24, %c1, %c0_25, %c0_26], %64 {strides = array<i32>} : memref<1x4x16x16xf32, #tpu.memory_space<vmem>>, vector<1x1x16x16xf32>,
    %65 = arith.truncf %61 : vector<16x16xf32> to vector<16x16xbf16>
    %cst_27 = arith.constant dense<0.000000e+00> : vector<16x8xf32>
    %66 = tpu.matmul %65, %48, %cst_27 {dimension_numbers = #tpu.dot_dimension_numbers<[1], [0], [0], [1], [0, 0, 1, 1], [], []>} : vector<16x16xbf16>, vector<16x8xbf16>, vector<16x8xf32> -> vector<16x8xf32>
    %67 = vector.extract_strided_slice %16 {offsets = [0, 16], sizes = [16, 8], strides = [1, 1]} : vector<16x32xf32> to vector<16x8xf32>
    %68 = arith.truncf %67 : vector<16x8xf32> to vector<16x8xbf16>
    %69 = vector.extract_strided_slice %17 {offsets = [0, 16], sizes = [16, 8], strides = [1, 1]} : vector<16x32xf32> to vector<16x8xf32>
    %70 = arith.truncf %69 : vector<16x8xf32> to vector<16x8xbf16>
    %71 = vector.extract_strided_slice %18 {offsets = [0, 16], sizes = [16, 8], strides = [1, 1]} : vector<16x32xf32> to vector<16x8xf32>
    %72 = arith.truncf %71 : vector<16x8xf32> to vector<16x8xbf16>
    %cst_28 = arith.constant dense<0.000000e+00> : vector<16x16xf32>
    %73 = tpu.matmul %68, %70, %cst_28 {dimension_numbers = #tpu.dot_dimension_numbers<[1], [1], [0], [0], [0, 0, 1, 0], [], []>} : vector<16x8xbf16>, vector<16x8xbf16>, vector<16x16xf32> -> vector<16x16xf32>
    %cst_29 = arith.constant 0.353553385 : f32
    %74 = vector.broadcast %cst_29 : f32 to vector<16x16xf32>
    %75 = arith.mulf %73, %74 : vector<16x16xf32>
    %cst_30 = arith.constant dense<0xFF800000> : vector<16xf32>
    %76 = vector.multi_reduction <maximumf>, %75, %cst_30 [1] : vector<16x16xf32> to vector<16xf32>
    %77 = vector.shape_cast %76 : vector<16xf32> to vector<16x1xf32>
    %78 = vector.broadcast %77 : vector<16x1xf32> to vector<16x16xf32>
    %79 = arith.subf %75, %78 : vector<16x16xf32>
    %80 = math.exp %79 : vector<16x16xf32>
    %cst_31 = arith.constant dense<0.000000e+00> : vector<16xf32>
    %81 = vector.multi_reduction <add>, %80, %cst_31 [1] : vector<16x16xf32> to vector<16xf32>
    %82 = vector.shape_cast %81 : vector<16xf32> to vector<16x1xf32>
    %83 = tpu.reciprocal %82 {approx = true} : vector<16x1xf32> -> vector<16x1xf32>
    %84 = vector.broadcast %83 : vector<16x1xf32> to vector<16x16xf32>
    %85 = arith.mulf %80, %84 : vector<16x16xf32>
    %c0_32 = arith.constant 0 : index
    %c2 = arith.constant 2 : index
    %c0_33 = arith.constant 0 : index
    %c0_34 = arith.constant 0 : index
    %86 = vector.load %arg21[%c0_32, %c2, %c0_33, %c0_34] : memref<1x4x16x16xf32, #tpu.memory_space<vmem>>, vector<1x1x16x16xf32>
    %87 = vector.shape_cast %86 : vector<1x1x16x16xf32> to vector<16x16xf32>
    %88 = vector.shape_cast %85 : vector<16x16xf32> to vector<1x1x16x16xf32>
    tpu.vector_store %arg21[%c0_32, %c2, %c0_33, %c0_34], %88 {strides = array<i32>} : memref<1x4x16x16xf32, #tpu.memory_space<vmem>>, vector<1x1x16x16xf32>,
    %89 = arith.truncf %85 : vector<16x16xf32> to vector<16x16xbf16>
    %cst_35 = arith.constant dense<0.000000e+00> : vector<16x8xf32>
    %90 = tpu.matmul %89, %72, %cst_35 {dimension_numbers = #tpu.dot_dimension_numbers<[1], [0], [0], [1], [0, 0, 1, 1], [], []>} : vector<16x16xbf16>, vector<16x8xbf16>, vector<16x8xf32> -> vector<16x8xf32>
    %91 = vector.extract_strided_slice %16 {offsets = [0, 24], sizes = [16, 8], strides = [1, 1]} : vector<16x32xf32> to vector<16x8xf32>
    %92 = arith.truncf %91 : vector<16x8xf32> to vector<16x8xbf16>
    %93 = vector.extract_strided_slice %17 {offsets = [0, 24], sizes = [16, 8], strides = [1, 1]} : vector<16x32xf32> to vector<16x8xf32>
    %94 = arith.truncf %93 : vector<16x8xf32> to vector<16x8xbf16>
    %95 = vector.extract_strided_slice %18 {offsets = [0, 24], sizes = [16, 8], strides = [1, 1]} : vector<16x32xf32> to vector<16x8xf32>
    %96 = arith.truncf %95 : vector<16x8xf32> to vector<16x8xbf16>
    %cst_36 = arith.constant dense<0.000000e+00> : vector<16x16xf32>
    %97 = tpu.matmul %92, %94, %cst_36 {dimension_numbers = #tpu.dot_dimension_numbers<[1], [1], [0], [0], [0, 0, 1, 0], [], []>} : vector<16x8xbf16>, vector<16x8xbf16>, vector<16x16xf32> -> vector<16x16xf32>
    %cst_37 = arith.constant 0.353553385 : f32
    %98 = vector.broadcast %cst_37 : f32 to vector<16x16xf32>
    %99 = arith.mulf %97, %98 : vector<16x16xf32>
    %cst_38 = arith.constant dense<0xFF800000> : vector<16xf32>
    %100 = vector.multi_reduction <maximumf>, %99, %cst_38 [1] : vector<16x16xf32> to vector<16xf32>
    %101 = vector.shape_cast %100 : vector<16xf32> to vector<16x1xf32>
    %102 = vector.broadcast %101 : vector<16x1xf32> to vector<16x16xf32>
    %103 = arith.subf %99, %102 : vector<16x16xf32>
    %104 = math.exp %103 : vector<16x16xf32>
    %cst_39 = arith.constant dense<0.000000e+00> : vector<16xf32>
    %105 = vector.multi_reduction <add>, %104, %cst_39 [1] : vector<16x16xf32> to vector<16xf32>
    %106 = vector.shape_cast %105 : vector<16xf32> to vector<16x1xf32>
    %107 = tpu.reciprocal %106 {approx = true} : vector<16x1xf32> -> vector<16x1xf32>
    %108 = vector.broadcast %107 : vector<16x1xf32> to vector<16x16xf32>
    %109 = arith.mulf %104, %108 : vector<16x16xf32>
    %c0_40 = arith.constant 0 : index
    %c3 = arith.constant 3 : index
    %c0_41 = arith.constant 0 : index
    %c0_42 = arith.constant 0 : index
    %110 = vector.load %arg21[%c0_40, %c3, %c0_41, %c0_42] : memref<1x4x16x16xf32, #tpu.memory_space<vmem>>, vector<1x1x16x16xf32>
    %111 = vector.shape_cast %110 : vector<1x1x16x16xf32> to vector<16x16xf32>
    %112 = vector.shape_cast %109 : vector<16x16xf32> to vector<1x1x16x16xf32>
    tpu.vector_store %arg21[%c0_40, %c3, %c0_41, %c0_42], %112 {strides = array<i32>} : memref<1x4x16x16xf32, #tpu.memory_space<vmem>>, vector<1x1x16x16xf32>,
    %113 = arith.truncf %109 : vector<16x16xf32> to vector<16x16xbf16>
    %cst_43 = arith.constant dense<0.000000e+00> : vector<16x8xf32>
    %114 = tpu.matmul %113, %96, %cst_43 {dimension_numbers = #tpu.dot_dimension_numbers<[1], [0], [0], [1], [0, 0, 1, 1], [], []>} : vector<16x16xbf16>, vector<16x8xbf16>, vector<16x8xf32> -> vector<16x8xf32>
    %115 = tpu.concatenate %42, %66, %90, %114 in 1 : vector<16x8xf32>, vector<16x8xf32>, vector<16x8xf32>, vector<16x8xf32> -> vector<16x32xf32>
    %116 = arith.truncf %115 : vector<16x32xf32> to vector<16x32xbf16>
    %c0_44 = arith.constant 0 : index
    %c0_45 = arith.constant 0 : index
    %117 = vector.load %arg6[%c0_44, %c0_45] : memref<32x32xf32, #tpu.memory_space<vmem>>, vector<32x32xf32>
    %118 = arith.truncf %117 : vector<32x32xf32> to vector<32x32xbf16>
    %cst_46 = arith.constant dense<0.000000e+00> : vector<16x32xf32>
    %119 = tpu.matmul %116, %118, %cst_46 {dimension_numbers = #tpu.dot_dimension_numbers<[1], [0], [0], [1], [0, 0, 1, 1], [], []>} : vector<16x32xbf16>, vector<32x32xbf16>, vector<16x32xf32> -> vector<16x32xf32>
    %c0_47 = arith.constant 0 : index
    %c0_48 = arith.constant 0 : index
    %120 = vector.load %arg7[%c0_47, %c0_48] : memref<1x32xf32, #tpu.memory_space<vmem>>, vector<1x32xf32>
    %121 = vector.broadcast %120 : vector<1x32xf32> to vector<16x32xf32>
    %122 = arith.addf %119, %121 : vector<16x32xf32>
    %123 = arith.addf %8, %122 : vector<16x32xf32>
    %cst_49 = arith.constant dense<0.000000e+00> : vector<16xf32>
    %124 = vector.multi_reduction <add>, %123, %cst_49 [1] : vector<16x32xf32> to vector<16xf32>
    %125 = vector.shape_cast %124 : vector<16xf32> to vector<16x1xf32>
    %cst_50 = arith.constant 3.200000e+01 : f32
    %126 = vector.broadcast %cst_50 : f32 to vector<16x1xf32>
    %127 = arith.divf %125, %126 : vector<16x1xf32>
    %128 = vector.broadcast %127 : vector<16x1xf32> to vector<16x32xf32>
    %129 = arith.subf %123, %128 : vector<16x32xf32>
    %130 = arith.mulf %129, %129 : vector<16x32xf32>
    %cst_51 = arith.constant dense<0.000000e+00> : vector<16xf32>
    %131 = vector.multi_reduction <add>, %130, %cst_51 [1] : vector<16x32xf32> to vector<16xf32>
    %132 = vector.shape_cast %131 : vector<16xf32> to vector<16x1xf32>
    %cst_52 = arith.constant 3.200000e+01 : f32
    %133 = vector.broadcast %cst_52 : f32 to vector<16x1xf32>
    %134 = arith.divf %132, %133 : vector<16x1xf32>
    %cst_53 = arith.constant 9.99999974E-6 : f32
    %135 = vector.broadcast %cst_53 : f32 to vector<16x1xf32>
    %136 = arith.addf %134, %135 : vector<16x1xf32>
    %137 = math.rsqrt %136 : vector<16x1xf32>
    %138 = vector.broadcast %137 : vector<16x1xf32> to vector<16x32xf32>
    %139 = arith.mulf %129, %138 : vector<16x32xf32>
    %c0_54 = arith.constant 0 : index
    %c0_55 = arith.constant 0 : index
    %140 = vector.load %arg8[%c0_54, %c0_55] : memref<1x32xf32, #tpu.memory_space<vmem>>, vector<1x32xf32>
    %141 = vector.broadcast %140 : vector<1x32xf32> to vector<16x32xf32>
    %142 = arith.mulf %139, %141 : vector<16x32xf32>
    %c0_56 = arith.constant 0 : index
    %c0_57 = arith.constant 0 : index
    %143 = vector.load %arg9[%c0_56, %c0_57] : memref<1x32xf32, #tpu.memory_space<vmem>>, vector<1x32xf32>
    %144 = vector.broadcast %143 : vector<1x32xf32> to vector<16x32xf32>
    %145 = arith.addf %142, %144 : vector<16x32xf32>
    %146 = arith.truncf %145 : vector<16x32xf32> to vector<16x32xbf16>
    %c0_58 = arith.constant 0 : index
    %c0_59 = arith.constant 0 : index
    %147 = vector.load %arg10[%c0_58, %c0_59] : memref<32x128xf32, #tpu.memory_space<vmem>>, vector<32x128xf32>
    %148 = arith.truncf %147 : vector<32x128xf32> to vector<32x128xbf16>
    %cst_60 = arith.constant dense<0.000000e+00> : vector<16x128xf32>
    %149 = tpu.matmul %146, %148, %cst_60 {dimension_numbers = #tpu.dot_dimension_numbers<[1], [0], [0], [1], [0, 0, 1, 1], [], []>} : vector<16x32xbf16>, vector<32x128xbf16>, vector<16x128xf32> -> vector<16x128xf32>
    %c0_61 = arith.constant 0 : index
    %c0_62 = arith.constant 0 : index
    %150 = vector.load %arg11[%c0_61, %c0_62] : memref<1x128xf32, #tpu.memory_space<vmem>>, vector<1x128xf32>
    %151 = vector.broadcast %150 : vector<1x128xf32> to vector<16x128xf32>
    %152 = arith.addf %149, %151 : vector<16x128xf32>
    %cst_63 = arith.constant 0.000000e+00 : f32
    %153 = vector.broadcast %cst_63 : f32 to vector<16x128xf32>
    %154 = arith.maximumf %152, %153 : vector<16x128xf32>
    %155 = arith.truncf %154 : vector<16x128xf32> to vector<16x128xbf16>
    %c0_64 = arith.constant 0 : index
    %c0_65 = arith.constant 0 : index
    %156 = vector.load %arg12[%c0_64, %c0_65] : memref<128x32xf32, #tpu.memory_space<vmem>>, vector<128x32xf32>
    %157 = arith.truncf %156 : vector<128x32xf32> to vector<128x32xbf16>
    %cst_66 = arith.constant dense<0.000000e+00> : vector<16x32xf32>
    %158 = tpu.matmul %155, %157, %cst_66 {dimension_numbers = #tpu.dot_dimension_numbers<[1], [0], [0], [1], [0, 0, 1, 1], [], []>} : vector<16x128xbf16>, vector<128x32xbf16>, vector<16x32xf32> -> vector<16x32xf32>
    %c0_67 = arith.constant 0 : index
    %c0_68 = arith.constant 0 : index
    %159 = vector.load %arg13[%c0_67, %c0_68] : memref<1x32xf32, #tpu.memory_space<vmem>>, vector<1x32xf32>
    %160 = vector.broadcast %159 : vector<1x32xf32> to vector<16x32xf32>
    %161 = arith.addf %158, %160 : vector<16x32xf32>
    %162 = arith.addf %145, %161 : vector<16x32xf32>
    %cst_69 = arith.constant dense<0.000000e+00> : vector<16xf32>
    %163 = vector.multi_reduction <add>, %162, %cst_69 [1] : vector<16x32xf32> to vector<16xf32>
    %164 = vector.shape_cast %163 : vector<16xf32> to vector<16x1xf32>
    %cst_70 = arith.constant 3.200000e+01 : f32
    %165 = vector.broadcast %cst_70 : f32 to vector<16x1xf32>
    %166 = arith.divf %164, %165 : vector<16x1xf32>
    %167 = vector.broadcast %166 : vector<16x1xf32> to vector<16x32xf32>
    %168 = arith.subf %162, %167 : vector<16x32xf32>
    %169 = arith.mulf %168, %168 : vector<16x32xf32>
    %cst_71 = arith.constant dense<0.000000e+00> : vector<16xf32>
    %170 = vector.multi_reduction <add>, %169, %cst_71 [1] : vector<16x32xf32> to vector<16xf32>
    %171 = vector.shape_cast %170 : vector<16xf32> to vector<16x1xf32>
    %cst_72 = arith.constant 3.200000e+01 : f32
    %172 = vector.broadcast %cst_72 : f32 to vector<16x1xf32>
    %173 = arith.divf %171, %172 : vector<16x1xf32>
    %cst_73 = arith.constant 9.99999974E-6 : f32
    %174 = vector.broadcast %cst_73 : f32 to vector<16x1xf32>
    %175 = arith.addf %173, %174 : vector<16x1xf32>
    %176 = math.rsqrt %175 : vector<16x1xf32>
    %177 = vector.broadcast %176 : vector<16x1xf32> to vector<16x32xf32>
    %178 = arith.mulf %168, %177 : vector<16x32xf32>
    %c0_74 = arith.constant 0 : index
    %c0_75 = arith.constant 0 : index
    %179 = vector.load %arg14[%c0_74, %c0_75] : memref<1x32xf32, #tpu.memory_space<vmem>>, vector<1x32xf32>
    %180 = vector.broadcast %179 : vector<1x32xf32> to vector<16x32xf32>
    %181 = arith.mulf %178, %180 : vector<16x32xf32>
    %c0_76 = arith.constant 0 : index
    %c0_77 = arith.constant 0 : index
    %182 = vector.load %arg15[%c0_76, %c0_77] : memref<1x32xf32, #tpu.memory_space<vmem>>, vector<1x32xf32>
    %183 = vector.broadcast %182 : vector<1x32xf32> to vector<16x32xf32>
    %184 = arith.addf %181, %183 : vector<16x32xf32>
    %cst_78 = arith.constant dense<0.000000e+00> : vector<16xf32>
    %185 = vector.multi_reduction <add>, %184, %cst_78 [1] : vector<16x32xf32> to vector<16xf32>
    %186 = vector.shape_cast %185 : vector<16xf32> to vector<16x1xf32>
    %cst_79 = arith.constant 3.200000e+01 : f32
    %187 = vector.broadcast %cst_79 : f32 to vector<16x1xf32>
    %188 = arith.divf %186, %187 : vector<16x1xf32>
    %189 = vector.broadcast %188 : vector<16x1xf32> to vector<16x32xf32>
    %190 = arith.subf %184, %189 : vector<16x32xf32>
    %191 = arith.mulf %190, %190 : vector<16x32xf32>
    %cst_80 = arith.constant dense<0.000000e+00> : vector<16xf32>
    %192 = vector.multi_reduction <add>, %191, %cst_80 [1] : vector<16x32xf32> to vector<16xf32>
    %193 = vector.shape_cast %192 : vector<16xf32> to vector<16x1xf32>
    %cst_81 = arith.constant 3.200000e+01 : f32
    %194 = vector.broadcast %cst_81 : f32 to vector<16x1xf32>
    %195 = arith.divf %193, %194 : vector<16x1xf32>
    %cst_82 = arith.constant 9.99999974E-6 : f32
    %196 = vector.broadcast %cst_82 : f32 to vector<16x1xf32>
    %197 = arith.addf %195, %196 : vector<16x1xf32>
    %198 = math.rsqrt %197 : vector<16x1xf32>
    %199 = vector.broadcast %198 : vector<16x1xf32> to vector<16x32xf32>
    %200 = arith.mulf %190, %199 : vector<16x32xf32>
    %c0_83 = arith.constant 0 : index
    %c0_84 = arith.constant 0 : index
    %201 = vector.load %arg16[%c0_83, %c0_84] : memref<1x32xf32, #tpu.memory_space<vmem>>, vector<1x32xf32>
    %202 = vector.broadcast %201 : vector<1x32xf32> to vector<16x32xf32>
    %203 = arith.mulf %200, %202 : vector<16x32xf32>
    %c0_85 = arith.constant 0 : index
    %c0_86 = arith.constant 0 : index
    %204 = vector.load %arg17[%c0_85, %c0_86] : memref<1x32xf32, #tpu.memory_space<vmem>>, vector<1x32xf32>
    %205 = vector.broadcast %204 : vector<1x32xf32> to vector<16x32xf32>
    %206 = arith.addf %203, %205 : vector<16x32xf32>
    %207 = arith.truncf %206 : vector<16x32xf32> to vector<16x32xbf16>
    %c0_87 = arith.constant 0 : index
    %c0_88 = arith.constant 0 : index
    %208 = vector.load %arg18[%c0_87, %c0_88] : memref<32x9xf32, #tpu.memory_space<vmem>>, vector<32x9xf32>
    %209 = arith.truncf %208 : vector<32x9xf32> to vector<32x9xbf16>
    %cst_89 = arith.constant dense<0.000000e+00> : vector<16x9xf32>
    %210 = tpu.matmul %207, %209, %cst_89 {dimension_numbers = #tpu.dot_dimension_numbers<[1], [0], [0], [1], [0, 0, 1, 1], [], []>} : vector<16x32xbf16>, vector<32x9xbf16>, vector<16x9xf32> -> vector<16x9xf32>
    %c0_90 = arith.constant 0 : index
    %c0_91 = arith.constant 0 : index
    %211 = vector.load %arg19[%c0_90, %c0_91] : memref<1x9xf32, #tpu.memory_space<vmem>>, vector<1x9xf32>
    %212 = vector.broadcast %211 : vector<1x9xf32> to vector<16x9xf32>
    %213 = arith.addf %210, %212 : vector<16x9xf32>
    %c0_92 = arith.constant 0 : index
    %c0_93 = arith.constant 0 : index
    %c0_94 = arith.constant 0 : index
    %214 = vector.load %arg20[%c0_92, %c0_93, %c0_94] : memref<1x16x9xf32, #tpu.memory_space<vmem>>, vector<1x16x9xf32>
    %215 = vector.shape_cast %214 : vector<1x16x9xf32> to vector<16x9xf32>
    %216 = vector.shape_cast %213 : vector<16x9xf32> to vector<1x16x9xf32>
    tpu.vector_store %arg20[%c0_92, %c0_93, %c0_94], %216 {strides = array<i32>} : memref<1x16x9xf32, #tpu.memory_space<vmem>>, vector<1x16x9xf32>,
    return
  }
  func.func @transform_0(%arg0: i32) -> (i32, i32, i32) {
    %c0_i32 = arith.constant 0 : i32
    %c0_i32_0 = arith.constant 0 : i32
    %c0_i32_1 = arith.constant 0 : i32
    return %arg0, %c0_i32, %c0_i32_0 : i32, i32, i32
  }
  func.func @transform_1(%arg0: i32) -> (i32, i32) {
    %c0_i32 = arith.constant 0 : i32
    %c0_i32_0 = arith.constant 0 : i32
    %c0_i32_1 = arith.constant 0 : i32
    return %c0_i32, %c0_i32_0 : i32, i32
  }
  func.func @transform_2(%arg0: i32) -> (i32, i32) {
    %c0_i32 = arith.constant 0 : i32
    %c0_i32_0 = arith.constant 0 : i32
    %c0_i32_1 = arith.constant 0 : i32
    return %c0_i32, %c0_i32_0 : i32, i32
  }
  func.func @transform_3(%arg0: i32) -> (i32, i32) {
    %c0_i32 = arith.constant 0 : i32
    %c0_i32_0 = arith.constant 0 : i32
    %c0_i32_1 = arith.constant 0 : i32
    return %c0_i32, %c0_i32_0 : i32, i32
  }
  func.func @transform_4(%arg0: i32) -> (i32, i32) {
    %c0_i32 = arith.constant 0 : i32
    %c0_i32_0 = arith.constant 0 : i32
    %c0_i32_1 = arith.constant 0 : i32
    return %c0_i32, %c0_i32_0 : i32, i32
  }
  func.func @transform_5(%arg0: i32) -> (i32, i32) {
    %c0_i32 = arith.constant 0 : i32
    %c0_i32_0 = arith.constant 0 : i32
    %c0_i32_1 = arith.constant 0 : i32
    return %c0_i32, %c0_i32_0 : i32, i32
  }
  func.func @transform_6(%arg0: i32) -> (i32, i32) {
    %c0_i32 = arith.constant 0 : i32
    %c0_i32_0 = arith.constant 0 : i32
    %c0_i32_1 = arith.constant 0 : i32
    return %c0_i32, %c0_i32_0 : i32, i32
  }
  func.func @transform_7(%arg0: i32) -> (i32, i32) {
    %c0_i32 = arith.constant 0 : i32
    %c0_i32_0 = arith.constant 0 : i32
    %c0_i32_1 = arith.constant 0 : i32
    return %c0_i32, %c0_i32_0 : i32, i32
  }
  func.func @transform_8(%arg0: i32) -> (i32, i32) {
    %c0_i32 = arith.constant 0 : i32
    %c0_i32_0 = arith.constant 0 : i32
    %c0_i32_1 = arith.constant 0 : i32
    return %c0_i32, %c0_i32_0 : i32, i32
  }
  func.func @transform_9(%arg0: i32) -> (i32, i32) {
    %c0_i32 = arith.constant 0 : i32
    %c0_i32_0 = arith.constant 0 : i32
    %c0_i32_1 = arith.constant 0 : i32
    return %c0_i32, %c0_i32_0 : i32, i32
  }
  func.func @transform_10(%arg0: i32) -> (i32, i32) {
    %c0_i32 = arith.constant 0 : i32
    %c0_i32_0 = arith.constant 0 : i32
    %c0_i32_1 = arith.constant 0 : i32
    return %c0_i32, %c0_i32_0 : i32, i32
  }
  func.func @transform_11(%arg0: i32) -> (i32, i32) {
    %c0_i32 = arith.constant 0 : i32
    %c0_i32_0 = arith.constant 0 : i32
    %c0_i32_1 = arith.constant 0 : i32
    return %c0_i32, %c0_i32_0 : i32, i32
  }
  func.func @transform_12(%arg0: i32) -> (i32, i32) {
    %c0_i32 = arith.constant 0 : i32
    %c0_i32_0 = arith.constant 0 : i32
    %c0_i32_1 = arith.constant 0 : i32
    return %c0_i32, %c0_i32_0 : i32, i32
  }
  func.func @transform_13(%arg0: i32) -> (i32, i32) {
    %c0_i32 = arith.constant 0 : i32
    %c0_i32_0 = arith.constant 0 : i32
    %c0_i32_1 = arith.constant 0 : i32
    return %c0_i32, %c0_i32_0 : i32, i32
  }
  func.func @transform_14(%arg0: i32) -> (i32, i32) {
    %c0_i32 = arith.constant 0 : i32
    %c0_i32_0 = arith.constant 0 : i32
    %c0_i32_1 = arith.constant 0 : i32
    return %c0_i32, %c0_i32_0 : i32, i32
  }
  func.func @transform_15(%arg0: i32) -> (i32, i32) {
    %c0_i32 = arith.constant 0 : i32
    %c0_i32_0 = arith.constant 0 : i32
    %c0_i32_1 = arith.constant 0 : i32
    return %c0_i32, %c0_i32_0 : i32, i32
  }
  func.func @transform_16(%arg0: i32) -> (i32, i32) {
    %c0_i32 = arith.constant 0 : i32
    %c0_i32_0 = arith.constant 0 : i32
    %c0_i32_1 = arith.constant 0 : i32
    return %c0_i32, %c0_i32_0 : i32, i32
  }
  func.func @transform_17(%arg0: i32) -> (i32, i32) {
    %c0_i32 = arith.constant 0 : i32
    %c0_i32_0 = arith.constant 0 : i32
    %c0_i32_1 = arith.constant 0 : i32
    return %c0_i32, %c0_i32_0 : i32, i32
  }
  func.func @transform_18(%arg0: i32) -> (i32, i32) {
    %c0_i32 = arith.constant 0 : i32
    %c0_i32_0 = arith.constant 0 : i32
    %c0_i32_1 = arith.constant 0 : i32
    return %c0_i32, %c0_i32_0 : i32, i32
  }
  func.func @transform_19(%arg0: i32) -> (i32, i32, i32) {
    %c0_i32 = arith.constant 0 : i32
    %c0_i32_0 = arith.constant 0 : i32
    %c0_i32_1 = arith.constant 0 : i32
    return %arg0, %c0_i32, %c0_i32_0 : i32, i32, i32
  }
  func.func @transform_20(%arg0: i32) -> (i32, i32, i32, i32) {
    %c0_i32 = arith.constant 0 : i32
    %c0_i32_0 = arith.constant 0 : i32
    %c0_i32_1 = arith.constant 0 : i32
    %c0_i32_2 = arith.constant 0 : i32
    return %arg0, %c0_i32, %c0_i32_0, %c0_i32_1 : i32, i32, i32, i32
  }
}

</mosaic_0001>

<llo_original>
// kernel: gtformer_block.2
$region0: #{gtformer_block.2}
  #allocation0 [shape = 'u32[]', space=smem, size = 0x4, offset = 0x4, fixed_abs, tag = 'smem constant byte address 0x4 - core index']
  #allocation1 [shape = 'u32[144,128]{1,0:T(1,128)}', space=vmem, size = 0x12000, scoped, tag = 'internal scratch']
  %s0 = inlined_call_operand.vmem [shape: f32[2,9,16], index: 0, kind: input, shape index: {}]
  %s1 = inlined_call_operand.vmem [shape: f32[16,32], index: 1, kind: input, shape index: {}]
  %s2 = inlined_call_operand.vmem [shape: f32[1,32], index: 2, kind: input, shape index: {}]
  %s3 = inlined_call_operand.vmem [shape: f32[32,96], index: 3, kind: input, shape index: {}]
  %s4 = inlined_call_operand.vmem [shape: f32[1,96], index: 4, kind: input, shape index: {}]
  %s5 = inlined_call_operand.vmem [shape: f32[32,32], index: 5, kind: input, shape index: {}]
  %s6 = inlined_call_operand.vmem [shape: f32[1,32], index: 6, kind: input, shape index: {}]
  %s7 = inlined_call_operand.vmem [shape: f32[1,32], index: 7, kind: input, shape index: {}]
  %s8 = inlined_call_operand.vmem [shape: f32[1,32], index: 8, kind: input, shape index: {}]
  %s9 = inlined_call_operand.vmem [shape: f32[32,128], index: 9, kind: input, shape index: {}]
  %s10 = inlined_call_operand.vmem [shape: f32[1,128], index: 10, kind: input, shape index: {}]
  %s11 = inlined_call_operand.vmem [shape: f32[128,32], index: 11, kind: input, shape index: {}]
  %s12 = inlined_call_operand.vmem [shape: f32[1,32], index: 12, kind: input, shape index: {}]
  %s13 = inlined_call_operand.vmem [shape: f32[1,32], index: 13, kind: input, shape index: {}]
  %s14 = inlined_call_operand.vmem [shape: f32[1,32], index: 14, kind: input, shape index: {}]
  %s15 = inlined_call_operand.vmem [shape: f32[1,32], index: 15, kind: input, shape index: {}]
  %s16 = inlined_call_operand.vmem [shape: f32[1,32], index: 16, kind: input, shape index: {}]
  %s17 = inlined_call_operand.vmem [shape: f32[32,16], index: 17, kind: input, shape index: {}]
  %s18 = inlined_call_operand.vmem [shape: f32[1,16], index: 18, kind: input, shape index: {}]
  %s19 = inlined_call_operand.vmem [shape: f32[2,9,16], index: 19, kind: output, shape index: {0}]
  %s20 = inlined_call_operand.vmem [shape: f32[2,4,9,9], index: 20, kind: output, shape index: {1}]
  %21 = xla_tuple %s19, %s20
  %s22 = sld [smem:[#allocation0]]
  $region117: #{gtformer_block.2} parent=0
    _
  %s24 = ssub.s32 1, %s22
  %s25 = scalar_select 0, %s24, %s22
  loop: start=0, step=1, limit=4
  $region2: #{gtformer_block.2} parent=0 // loop_pre_header
    _
  $region3: #{gtformer_block.2} parent=0 // loop_header
    %s27 = sphi 0, %s31
    %p28 = scmp.ge.s32.totalorder %s27, 4
    %s37 = sphi 0, %s39
    %s40 = sphi 0, %s37
    %s41 = sphi 0, %s40
    %s57 = sphi 0, %s41
    %s61 = sphi 0, %s61
    %s63 = sphi 0, %s61
    %s64 = sphi 0, %s63
    %s78 = sphi 0, %s64
    %s82 = sphi 0, %s82
    %s84 = sphi 0, %s82
    %s85 = sphi 0, %s84
    %s99 = sphi 0, %s85
    %s103 = sphi 0, %s103
    %s105 = sphi 0, %s103
    %s106 = sphi 0, %s105
    %s120 = sphi 0, %s106
    %s124 = sphi 0, %s124
    %s126 = sphi 0, %s124
    %s127 = sphi 0, %s126
    %s141 = sphi 0, %s127
    %s145 = sphi 0, %s145
    %s147 = sphi 0, %s145
    %s148 = sphi 0, %s147
    %s162 = sphi 0, %s148
    %s166 = sphi 0, %s166
    %s168 = sphi 0, %s166
    %s169 = sphi 0, %s168
    %s183 = sphi 0, %s169
    %s187 = sphi 0, %s187
    %s189 = sphi 0, %s187
    %s190 = sphi 0, %s189
    %s204 = sphi 0, %s190
    %s208 = sphi 0, %s208
    %s210 = sphi 0, %s208
    %s211 = sphi 0, %s210
    %s225 = sphi 0, %s211
    %s229 = sphi 0, %s229
    %s231 = sphi 0, %s229
    %s232 = sphi 0, %s231
    %s246 = sphi 0, %s232
    %s250 = sphi 0, %s250
    %s252 = sphi 0, %s250
    %s253 = sphi 0, %s252
    %s267 = sphi 0, %s253
    %s271 = sphi 0, %s271
    %s273 = sphi 0, %s271
    %s274 = sphi 0, %s273
    %s288 = sphi 0, %s274
    %s292 = sphi 0, %s292
    %s294 = sphi 0, %s292
    %s295 = sphi 0, %s294
    %s309 = sphi 0, %s295
    %s313 = sphi 0, %s313
    %s315 = sphi 0, %s313
    %s316 = sphi 0, %s315
    %s330 = sphi 0, %s316
    %s334 = sphi 0, %s334
    %s336 = sphi 0, %s334
    %s337 = sphi 0, %s336
    %s351 = sphi 0, %s337
    %s355 = sphi 0, %s355
    %s357 = sphi 0, %s355
    %s358 = sphi 0, %s357
    %s372 = sphi 0, %s358
    %s376 = sphi 0, %s376
    %s378 = sphi 0, %s376
    %s379 = sphi 0, %s378
    %s393 = sphi 0, %s379
    %s397 = sphi 0, %s397
    %s399 = sphi 0, %s397
    %s400 = sphi 0, %s399
    %s414 = sphi 0, %s400
    %s418 = sphi 0, %s418
    %s420 = sphi 0, %s418
    %s421 = sphi 0, %s420
    %s435 = sphi 0, %s421
    %s441 = sphi 0, %s443
    %s444 = sphi 0, %s441
    %s445 = sphi 0, %s444
    %s461 = sphi 0, %s445
    %s467 = sphi 0, %s469
    %s470 = sphi 0, %s467
    %s471 = sphi 0, %s470
    %s487 = sphi 0, %s471
  $region4: #{gtformer_block.2} parent=0 // loop_header_branch
    %30 = sbr.rel (%p28) target = $region8
  $region5: #{gtformer_block.2} parent=0 // loop_body
    %s32 = ssub.s32 %s27, 1
    %s33 = ssub.s32 %s27, 2
    %s34 = sadd.s32 %s27, 1
    %s35 = ssub.s32 %s27, %s34
    %p36 = scmp.eq.s32.totalorder %s35, 0
    %s38 = sadd.s32 %s37, 1
    %s39 = scalar_select %p36, %s37, %s38
    %p42 = pneg %p36
    %p43 = scmp.eq.s32.totalorder %s27, 1
    %p44 = por %p42, %p43
    %p45 = scmp.ne.s32.totalorder %s37, %s40
    %p46 = scmp.eq.s32.totalorder %s27, 0
    %p47 = por %p45, %p46
    %p48 = scmp.ne.s32.totalorder %s37, %s40
    %p49 = scmp.eq.s32.totalorder %s32, 1
    %p50 = por %p48, %p49
    %p51 = scmp.ne.s32.totalorder %s40, %s41
    %p52 = scmp.eq.s32.totalorder %s32, 0
    %p53 = por %p51, %p52
    %p54 = scmp.ne.s32.totalorder %s40, %s41
    %p55 = scmp.eq.s32.totalorder %s33, 1
    %p56 = por %p54, %p55
    %p58 = scmp.ne.s32.totalorder %s41, %s57
    %p59 = scmp.eq.s32.totalorder %s33, 0
    %p60 = por %p58, %p59
    %s62 = sadd.s32 %s61, 1
    %p65 = scmp.eq.s32.totalorder %s27, 1
    %p66 = scmp.ne.s32.totalorder %s61, %s63
    %p67 = scmp.eq.s32.totalorder %s27, 0
    %p68 = por %p66, %p67
    %p69 = scmp.ne.s32.totalorder %s61, %s63
    %p70 = scmp.eq.s32.totalorder %s32, 1
    %p71 = por %p69, %p70
    %p72 = scmp.ne.s32.totalorder %s63, %s64
    %p73 = scmp.eq.s32.totalorder %s32, 0
    %p74 = por %p72, %p73
    %p75 = scmp.ne.s32.totalorder %s63, %s64
    %p76 = scmp.eq.s32.totalorder %s33, 1
    %p77 = por %p75, %p76
    %p79 = scmp.ne.s32.totalorder %s64, %s78
    %p80 = scmp.eq.s32.totalorder %s33, 0
    %p81 = por %p79, %p80
    %s83 = sadd.s32 %s82, 1
    %p86 = scmp.eq.s32.totalorder %s27, 1
    %p87 = scmp.ne.s32.totalorder %s82, %s84
    %p88 = scmp.eq.s32.totalorder %s27, 0
    %p89 = por %p87, %p88
    %p90 = scmp.ne.s32.totalorder %s82, %s84
    %p91 = scmp.eq.s32.totalorder %s32, 1
    %p92 = por %p90, %p91
    %p93 = scmp.ne.s32.totalorder %s84, %s85
    %p94 = scmp.eq.s32.totalorder %s32, 0
    %p95 = por %p93, %p94
    %p96 = scmp.ne.s32.totalorder %s84, %s85
    %p97 = scmp.eq.s32.totalorder %s33, 1
    %p98 = por %p96, %p97
    %p100 = scmp.ne.s32.totalorder %s85, %s99
    %p101 = scmp.eq.s32.totalorder %s33, 0
    %p102 = por %p100, %p101
    %s104 = sadd.s32 %s103, 1
    %p107 = scmp.eq.s32.totalorder %s27, 1
    %p108 = scmp.ne.s32.totalorder %s103, %s105
    %p109 = scmp.eq.s32.totalorder %s27, 0
    %p110 = por %p108, %p109
    %p111 = scmp.ne.s32.totalorder %s103, %s105
    %p112 = scmp.eq.s32.totalorder %s32, 1
    %p113 = por %p111, %p112
    %p114 = scmp.ne.s32.totalorder %s105, %s106
    %p115 = scmp.eq.s32.totalorder %s32, 0
    %p116 = por %p114, %p115
    %p117 = scmp.ne.s32.totalorder %s105, %s106
    %p118 = scmp.eq.s32.totalorder %s33, 1
    %p119 = por %p117, %p118
    %p121 = scmp.ne.s32.totalorder %s106, %s120
    %p122 = scmp.eq.s32.totalorder %s33, 0
    %p123 = por %p121, %p122
    %s125 = sadd.s32 %s124, 1
    %p128 = scmp.eq.s32.totalorder %s27, 1
    %p129 = scmp.ne.s32.totalorder %s124, %s126
    %p130 = scmp.eq.s32.totalorder %s27, 0
    %p131 = por %p129, %p130
    %p132 = scmp.ne.s32.totalorder %s124, %s126
    %p133 = scmp.eq.s32.totalorder %s32, 1
    %p134 = por %p132, %p133
    %p135 = scmp.ne.s32.totalorder %s126, %s127
    %p136 = scmp.eq.s32.totalorder %s32, 0
    %p137 = por %p135, %p136
    %p138 = scmp.ne.s32.totalorder %s126, %s127
    %p139 = scmp.eq.s32.totalorder %s33, 1
    %p140 = por %p138, %p139
    %p142 = scmp.ne.s32.totalorder %s127, %s141
    %p143 = scmp.eq.s32.totalorder %s33, 0
    %p144 = por %p142, %p143
    %s146 = sadd.s32 %s145, 1
    %p149 = scmp.eq.s32.totalorder %s27, 1
    %p150 = scmp.ne.s32.totalorder %s145, %s147
    %p151 = scmp.eq.s32.totalorder %s27, 0
    %p152 = por %p150, %p151
    %p153 = scmp.ne.s32.totalorder %s145, %s147
    %p154 = scmp.eq.s32.totalorder %s32, 1
    %p155 = por %p153, %p154
    %p156 = scmp.ne.s32.totalorder %s147, %s148
    %p157 = scmp.eq.s32.totalorder %s32, 0
    %p158 = por %p156, %p157
    %p159 = scmp.ne.s32.totalorder %s147, %s148
    %p160 = scmp.eq.s32.totalorder %s33, 1
    %p161 = por %p159, %p160
    %p163 = scmp.ne.s32.totalorder %s148, %s162
    %p164 = scmp.eq.s32.totalorder %s33, 0
    %p165 = por %p163, %p164
    %s167 = sadd.s32 %s166, 1
    %p170 = scmp.eq.s32.totalorder %s27, 1
    %p171 = scmp.ne.s32.totalorder %s166, %s168
    %p172 = scmp.eq.s32.totalorder %s27, 0
    %p173 = por %p171, %p172
    %p174 = scmp.ne.s32.totalorder %s166, %s168
    %p175 = scmp.eq.s32.totalorder %s32, 1
    %p176 = por %p174, %p175
    %p177 = scmp.ne.s32.totalorder %s168, %s169
    %p178 = scmp.eq.s32.totalorder %s32, 0
    %p179 = por %p177, %p178
    %p180 = scmp.ne.s32.totalorder %s168, %s169
    %p181 = scmp.eq.s32.totalorder %s33, 1
    %p182 = por %p180, %p181
    %p184 = scmp.ne.s32.totalorder %s169, %s183
    %p185 = scmp.eq.s32.totalorder %s33, 0
    %p186 = por %p184, %p185
    %s188 = sadd.s32 %s187, 1
    %p191 = scmp.eq.s32.totalorder %s27, 1
    %p192 = scmp.ne.s32.totalorder %s187, %s189
    %p193 = scmp.eq.s32.totalorder %s27, 0
    %p194 = por %p192, %p193
    %p195 = scmp.ne.s32.totalorder %s187, %s189
    %p196 = scmp.eq.s32.totalorder %s32, 1
    %p197 = por %p195, %p196
    %p198 = scmp.ne.s32.totalorder %s189, %s190
    %p199 = scmp.eq.s32.totalorder %s32, 0
    %p200 = por %p198, %p199
    %p201 = scmp.ne.s32.totalorder %s189, %s190
    %p202 = scmp.eq.s32.totalorder %s33, 1
    %p203 = por %p201, %p202
    %p205 = scmp.ne.s32.totalorder %s190, %s204
    %p206 = scmp.eq.s32.totalorder %s33, 0
    %p207 = por %p205, %p206
    %s209 = sadd.s32 %s208, 1
    %p212 = scmp.eq.s32.totalorder %s27, 1
    %p213 = scmp.ne.s32.totalorder %s208, %s210
    %p214 = scmp.eq.s32.totalorder %s27, 0
    %p215 = por %p213, %p214
    %p216 = scmp.ne.s32.totalorder %s208, %s210
    %p217 = scmp.eq.s32.totalorder %s32, 1
    %p218 = por %p216, %p217
    %p219 = scmp.ne.s32.totalorder %s210, %s211
    %p220 = scmp.eq.s32.totalorder %s32, 0
    %p221 = por %p219, %p220
    %p222 = scmp.ne.s32.totalorder %s210, %s211
    %p223 = scmp.eq.s32.totalorder %s33, 1
    %p224 = por %p222, %p223
    %p226 = scmp.ne.s32.totalorder %s211, %s225
    %p227 = scmp.eq.s32.totalorder %s33, 0
    %p228 = por %p226, %p227
    %s230 = sadd.s32 %s229, 1
    %p233 = scmp.eq.s32.totalorder %s27, 1
    %p234 = scmp.ne.s32.totalorder %s229, %s231
    %p235 = scmp.eq.s32.totalorder %s27, 0
    %p236 = por %p234, %p235
    %p237 = scmp.ne.s32.totalorder %s229, %s231
    %p238 = scmp.eq.s32.totalorder %s32, 1
    %p239 = por %p237, %p238
    %p240 = scmp.ne.s32.totalorder %s231, %s232
    %p241 = scmp.eq.s32.totalorder %s32, 0
    %p242 = por %p240, %p241
    %p243 = scmp.ne.s32.totalorder %s231, %s232
    %p244 = scmp.eq.s32.totalorder %s33, 1
    %p245 = por %p243, %p244
    %p247 = scmp.ne.s32.totalorder %s232, %s246
    %p248 = scmp.eq.s32.totalorder %s33, 0
    %p249 = por %p247, %p248
    %s251 = sadd.s32 %s250, 1
    %p254 = scmp.eq.s32.totalorder %s27, 1
    %p255 = scmp.ne.s32.totalorder %s250, %s252
    %p256 = scmp.eq.s32.totalorder %s27, 0
    %p257 = por %p255, %p256
    %p258 = scmp.ne.s32.totalorder %s250, %s252
    %p259 = scmp.eq.s32.totalorder %s32, 1
    %p260 = por %p258, %p259
    %p261 = scmp.ne.s32.totalorder %s252, %s253
    %p262 = scmp.eq.s32.totalorder %s32, 0
    %p263 = por %p261, %p262
    %p264 = scmp.ne.s32.totalorder %s252, %s253
    %p265 = scmp.eq.s32.totalorder %s33, 1
    %p266 = por %p264, %p265
    %p268 = scmp.ne.s32.totalorder %s253, %s267
    %p269 = scmp.eq.s32.totalorder %s33, 0
    %p270 = por %p268, %p269
    %s272 = sadd.s32 %s271, 1
    %p275 = scmp.eq.s32.totalorder %s27, 1
    %p276 = scmp.ne.s32.totalorder %s271, %s273
    %p277 = scmp.eq.s32.totalorder %s27, 0
    %p278 = por %p276, %p277
    %p279 = scmp.ne.s32.totalorder %s271, %s273
    %p280 = scmp.eq.s32.totalorder %s32, 1
    %p281 = por %p279, %p280
    %p282 = scmp.ne.s32.totalorder %s273, %s274
    %p283 = scmp.eq.s32.totalorder %s32, 0
    %p284 = por %p282, %p283
    %p285 = scmp.ne.s32.totalorder %s273, %s274
    %p286 = scmp.eq.s32.totalorder %s33, 1
    %p287 = por %p285, %p286
    %p289 = scmp.ne.s32.totalorder %s274, %s288
    %p290 = scmp.eq.s32.totalorder %s33, 0
    %p291 = por %p289, %p290
    %s293 = sadd.s32 %s292, 1
    %p296 = scmp.eq.s32.totalorder %s27, 1
    %p297 = scmp.ne.s32.totalorder %s292, %s294
    %p298 = scmp.eq.s32.totalorder %s27, 0
    %p299 = por %p297, %p298
    %p300 = scmp.ne.s32.totalorder %s292, %s294
    %p301 = scmp.eq.s32.totalorder %s32, 1
    %p302 = por %p300, %p301
    %p303 = scmp.ne.s32.totalorder %s294, %s295
    %p304 = scmp.eq.s32.totalorder %s32, 0
    %p305 = por %p303, %p304
    %p306 = scmp.ne.s32.totalorder %s294, %s295
    %p307 = scmp.eq.s32.totalorder %s33, 1
    %p308 = por %p306, %p307
    %p310 = scmp.ne.s32.totalorder %s295, %s309
    %p311 = scmp.eq.s32.totalorder %s33, 0
    %p312 = por %p310, %p311
    %s314 = sadd.s32 %s313, 1
    %p317 = scmp.eq.s32.totalorder %s27, 1
    %p318 = scmp.ne.s32.totalorder %s313, %s315
    %p319 = scmp.eq.s32.totalorder %s27, 0
    %p320 = por %p318, %p319
    %p321 = scmp.ne.s32.totalorder %s313, %s315
    %p322 = scmp.eq.s32.totalorder %s32, 1
    %p323 = por %p321, %p322
    %p324 = scmp.ne.s32.totalorder %s315, %s316
    %p325 = scmp.eq.s32.totalorder %s32, 0
    %p326 = por %p324, %p325
    %p327 = scmp.ne.s32.totalorder %s315, %s316
    %p328 = scmp.eq.s32.totalorder %s33, 1
    %p329 = por %p327, %p328
    %p331 = scmp.ne.s32.totalorder %s316, %s330
    %p332 = scmp.eq.s32.totalorder %s33, 0
    %p333 = por %p331, %p332
    %s335 = sadd.s32 %s334, 1
    %p338 = scmp.eq.s32.totalorder %s27, 1
    %p339 = scmp.ne.s32.totalorder %s334, %s336
    %p340 = scmp.eq.s32.totalorder %s27, 0
    %p341 = por %p339, %p340
    %p342 = scmp.ne.s32.totalorder %s334, %s336
    %p343 = scmp.eq.s32.totalorder %s32, 1
    %p344 = por %p342, %p343
    %p345 = scmp.ne.s32.totalorder %s336, %s337
    %p346 = scmp.eq.s32.totalorder %s32, 0
    %p347 = por %p345, %p346
    %p348 = scmp.ne.s32.totalorder %s336, %s337
    %p349 = scmp.eq.s32.totalorder %s33, 1
    %p350 = por %p348, %p349
    %p352 = scmp.ne.s32.totalorder %s337, %s351
    %p353 = scmp.eq.s32.totalorder %s33, 0
    %p354 = por %p352, %p353
    %s356 = sadd.s32 %s355, 1
    %p359 = scmp.eq.s32.totalorder %s27, 1
    %p360 = scmp.ne.s32.totalorder %s355, %s357
    %p361 = scmp.eq.s32.totalorder %s27, 0
    %p362 = por %p360, %p361
    %p363 = scmp.ne.s32.totalorder %s355, %s357
    %p364 = scmp.eq.s32.totalorder %s32, 1
    %p365 = por %p363, %p364
    %p366 = scmp.ne.s32.totalorder %s357, %s358
    %p367 = scmp.eq.s32.totalorder %s32, 0
    %p368 = por %p366, %p367
    %p369 = scmp.ne.s32.totalorder %s357, %s358
    %p370 = scmp.eq.s32.totalorder %s33, 1
    %p371 = por %p369, %p370
    %p373 = scmp.ne.s32.totalorder %s358, %s372
    %p374 = scmp.eq.s32.totalorder %s33, 0
    %p375 = por %p373, %p374
    %s377 = sadd.s32 %s376, 1
    %p380 = scmp.eq.s32.totalorder %s27, 1
    %p381 = scmp.ne.s32.totalorder %s376, %s378
    %p382 = scmp.eq.s32.totalorder %s27, 0
    %p383 = por %p381, %p382
    %p384 = scmp.ne.s32.totalorder %s376, %s378
    %p385 = scmp.eq.s32.totalorder %s32, 1
    %p386 = por %p384, %p385
    %p387 = scmp.ne.s32.totalorder %s378, %s379
    %p388 = scmp.eq.s32.totalorder %s32, 0
    %p389 = por %p387, %p388
    %p390 = scmp.ne.s32.totalorder %s378, %s379
    %p391 = scmp.eq.s32.totalorder %s33, 1
    %p392 = por %p390, %p391
    %p394 = scmp.ne.s32.totalorder %s379, %s393
    %p395 = scmp.eq.s32.totalorder %s33, 0
    %p396 = por %p394, %p395
    %s398 = sadd.s32 %s397, 1
    %p401 = scmp.eq.s32.totalorder %s27, 1
    %p402 = scmp.ne.s32.totalorder %s397, %s399
    %p403 = scmp.eq.s32.totalorder %s27, 0
    %p404 = por %p402, %p403
    %p405 = scmp.ne.s32.totalorder %s397, %s399
    %p406 = scmp.eq.s32.totalorder %s32, 1
    %p407 = por %p405, %p406
    %p408 = scmp.ne.s32.totalorder %s399, %s400
    %p409 = scmp.eq.s32.totalorder %s32, 0
    %p410 = por %p408, %p409
    %p411 = scmp.ne.s32.totalorder %s399, %s400
    %p412 = scmp.eq.s32.totalorder %s33, 1
    %p413 = por %p411, %p412
    %p415 = scmp.ne.s32.totalorder %s400, %s414
    %p416 = scmp.eq.s32.totalorder %s33, 0
    %p417 = por %p415, %p416
    %s419 = sadd.s32 %s418, 1
    %p422 = scmp.eq.s32.totalorder %s27, 1
    %p423 = scmp.ne.s32.totalorder %s418, %s420
    %p424 = scmp.eq.s32.totalorder %s27, 0
    %p425 = por %p423, %p424
    %p426 = scmp.ne.s32.totalorder %s418, %s420
    %p427 = scmp.eq.s32.totalorder %s32, 1
    %p428 = por %p426, %p427
    %p429 = scmp.ne.s32.totalorder %s420, %s421
    %p430 = scmp.eq.s32.totalorder %s32, 0
    %p431 = por %p429, %p430
    %p432 = scmp.ne.s32.totalorder %s420, %s421
    %p433 = scmp.eq.s32.totalorder %s33, 1
    %p434 = por %p432, %p433
    %p436 = scmp.ne.s32.totalorder %s421, %s435
    %p437 = scmp.eq.s32.totalorder %s33, 0
    %p438 = por %p436, %p437
    %s439 = ssub.s32 %s27, %s34
    %p440 = scmp.eq.s32.totalorder %s439, 0
    %s442 = sadd.s32 %s441, 1
    %s443 = scalar_select %p440, %s441, %s442
    %p446 = pneg %p440
    %p447 = scmp.eq.s32.totalorder %s27, 1
    %p448 = por %p446, %p447
    %p449 = scmp.ne.s32.totalorder %s441, %s444
    %p450 = scmp.eq.s32.totalorder %s27, 0
    %p451 = por %p449, %p450
    %p452 = scmp.ne.s32.totalorder %s441, %s444
    %p453 = scmp.eq.s32.totalorder %s32, 1
    %p454 = por %p452, %p453
    %p455 = scmp.ne.s32.totalorder %s444, %s445
    %p456 = scmp.eq.s32.totalorder %s32, 0
    %p457 = por %p455, %p456
    %p458 = scmp.ne.s32.totalorder %s444, %s445
    %p459 = scmp.eq.s32.totalorder %s33, 1
    %p460 = por %p458, %p459
    %p462 = scmp.ne.s32.totalorder %s445, %s461
    %p463 = scmp.eq.s32.totalorder %s33, 0
    %p464 = por %p462, %p463
    %s465 = ssub.s32 %s27, %s34
    %p466 = scmp.eq.s32.totalorder %s465, 0
    %s468 = sadd.s32 %s467, 1
    %s469 = scalar_select %p466, %s467, %s468
    %p472 = pneg %p466
    %p473 = scmp.eq.s32.totalorder %s27, 1
    %p474 = por %p472, %p473
    %p475 = scmp.ne.s32.totalorder %s467, %s470
    %p476 = scmp.eq.s32.totalorder %s27, 0
    %p477 = por %p475, %p476
    %p478 = scmp.ne.s32.totalorder %s467, %s470
    %p479 = scmp.eq.s32.totalorder %s32, 1
    %p480 = por %p478, %p479
    %p481 = scmp.ne.s32.totalorder %s470, %s471
    %p482 = scmp.eq.s32.totalorder %s32, 0
    %p483 = por %p481, %p482
    %p484 = scmp.ne.s32.totalorder %s470, %s471
    %p485 = scmp.eq.s32.totalorder %s33, 1
    %p486 = por %p484, %p485
    %p488 = scmp.ne.s32.totalorder %s471, %s487
    %p489 = scmp.eq.s32.totalorder %s33, 0
    %p490 = por %p488, %p489
    %p491 = scmp.le.s32.totalorder 1, %s27
    %p492 = scmp.lt.s32.totalorder %s27, 3
    %p493 = pnand %p491, %p492
    %p494 = pneg %p493
    // Predicated region
    $region9: #{gtformer_block.2} parent=5 // pred_check
      _
    $region10: #{gtformer_block.2} parent=5 // pred_check_branch
      %496 = sbr.rel (%p493) target = $region12
    $region11: #{gtformer_block.2} parent=5 // pred_region
      %s497 = ssub.s32 %s27, 1
      // Predicated region
      $region13: #{gtformer_block.2} parent=11 // pred_check
        %p498 = pneg %p74
      $region14: #{gtformer_block.2} parent=11 // pred_check_branch
        %500 = sbr.rel (%p498) target = $region16
      $region15: #{gtformer_block.2} parent=11 // pred_region
        _
      $region16: #{gtformer_block.2} parent=11 // pred_fallthru
        _
      // Predicated region
      $region17: #{gtformer_block.2} parent=11 // pred_check
        %p501 = pneg %p95
      $region18: #{gtformer_block.2} parent=11 // pred_check_branch
        %503 = sbr.rel (%p501) target = $region20
      $region19: #{gtformer_block.2} parent=11 // pred_region
        _
      $region20: #{gtformer_block.2} parent=11 // pred_fallthru
        _
      // Predicated region
      $region21: #{gtformer_block.2} parent=11 // pred_check
        %p504 = pneg %p116
      $region22: #{gtformer_block.2} parent=11 // pred_check_branch
        %506 = sbr.rel (%p504) target = $region24
      $region23: #{gtformer_block.2} parent=11 // pred_region
        _
      $region24: #{gtformer_block.2} parent=11 // pred_fallthru
        _
      // Predicated region
      $region25: #{gtformer_block.2} parent=11 // pred_check
        %p507 = pneg %p137
      $region26: #{gtformer_block.2} parent=11 // pred_check_branch
        %509 = sbr.rel (%p507) target = $region28
      $region27: #{gtformer_block.2} parent=11 // pred_region
        _
      $region28: #{gtformer_block.2} parent=11 // pred_fallthru
        _
      // Predicated region
      $region29: #{gtformer_block.2} parent=11 // pred_check
        %p510 = pneg %p158
      $region30: #{gtformer_block.2} parent=11 // pred_check_branch
        %512 = sbr.rel (%p510) target = $region32
      $region31: #{gtformer_block.2} parent=11 // pred_region
        _
      $region32: #{gtformer_block.2} parent=11 // pred_fallthru
        _
      // Predicated region
      $region33: #{gtformer_block.2} parent=11 // pred_check
        %p513 = pneg %p179
      $region34: #{gtformer_block.2} parent=11 // pred_check_branch
        %515 = sbr.rel (%p513) target = $region36
      $region35: #{gtformer_block.2} parent=11 // pred_region
        _
      $region36: #{gtformer_block.2} parent=11 // pred_fallthru
        _
      // Predicated region
      $region37: #{gtformer_block.2} parent=11 // pred_check
        %p516 = pneg %p200
      $region38: #{gtformer_block.2} parent=11 // pred_check_branch
        %518 = sbr.rel (%p516) target = $region40
      $region39: #{gtformer_block.2} parent=11 // pred_region
        _
      $region40: #{gtformer_block.2} parent=11 // pred_fallthru
        _
      // Predicated region
      $region41: #{gtformer_block.2} parent=11 // pred_check
        %p519 = pneg %p221
      $region42: #{gtformer_block.2} parent=11 // pred_check_branch
        %521 = sbr.rel (%p519) target = $region44
      $region43: #{gtformer_block.2} parent=11 // pred_region
        _
      $region44: #{gtformer_block.2} parent=11 // pred_fallthru
        _
      // Predicated region
      $region45: #{gtformer_block.2} parent=11 // pred_check
        %p522 = pneg %p242
      $region46: #{gtformer_block.2} parent=11 // pred_check_branch
        %524 = sbr.rel (%p522) target = $region48
      $region47: #{gtformer_block.2} parent=11 // pred_region
        _
      $region48: #{gtformer_block.2} parent=11 // pred_fallthru
        _
      // Predicated region
      $region49: #{gtformer_block.2} parent=11 // pred_check
        %p525 = pneg %p263
      $region50: #{gtformer_block.2} parent=11 // pred_check_branch
        %527 = sbr.rel (%p525) target = $region52
      $region51: #{gtformer_block.2} parent=11 // pred_region
        _
      $region52: #{gtformer_block.2} parent=11 // pred_fallthru
        _
      // Predicated region
      $region53: #{gtformer_block.2} parent=11 // pred_check
        %p528 = pneg %p284
      $region54: #{gtformer_block.2} parent=11 // pred_check_branch
        %530 = sbr.rel (%p528) target = $region56
      $region55: #{gtformer_block.2} parent=11 // pred_region
        _
      $region56: #{gtformer_block.2} parent=11 // pred_fallthru
        _
      // Predicated region
      $region57: #{gtformer_block.2} parent=11 // pred_check
        %p531 = pneg %p305
      $region58: #{gtformer_block.2} parent=11 // pred_check_branch
        %533 = sbr.rel (%p531) target = $region60
      $region59: #{gtformer_block.2} parent=11 // pred_region
        _
      $region60: #{gtformer_block.2} parent=11 // pred_fallthru
        _
      // Predicated region
      $region61: #{gtformer_block.2} parent=11 // pred_check
        %p534 = pneg %p326
      $region62: #{gtformer_block.2} parent=11 // pred_check_branch
        %536 = sbr.rel (%p534) target = $region64
      $region63: #{gtformer_block.2} parent=11 // pred_region
        _
      $region64: #{gtformer_block.2} parent=11 // pred_fallthru
        _
      // Predicated region
      $region65: #{gtformer_block.2} parent=11 // pred_check
        %p537 = pneg %p347
      $region66: #{gtformer_block.2} parent=11 // pred_check_branch
        %539 = sbr.rel (%p537) target = $region68
      $region67: #{gtformer_block.2} parent=11 // pred_region
        _
      $region68: #{gtformer_block.2} parent=11 // pred_fallthru
        _
      // Predicated region
      $region69: #{gtformer_block.2} parent=11 // pred_check
        %p540 = pneg %p368
      $region70: #{gtformer_block.2} parent=11 // pred_check_branch
        %542 = sbr.rel (%p540) target = $region72
      $region71: #{gtformer_block.2} parent=11 // pred_region
        _
      $region72: #{gtformer_block.2} parent=11 // pred_fallthru
        _
      // Predicated region
      $region73: #{gtformer_block.2} parent=11 // pred_check
        %p543 = pneg %p389
      $region74: #{gtformer_block.2} parent=11 // pred_check_branch
        %545 = sbr.rel (%p543) target = $region76
      $region75: #{gtformer_block.2} parent=11 // pred_region
        _
      $region76: #{gtformer_block.2} parent=11 // pred_fallthru
        _
      // Predicated region
      $region77: #{gtformer_block.2} parent=11 // pred_check
        %p546 = pneg %p410
      $region78: #{gtformer_block.2} parent=11 // pred_check_branch
        %548 = sbr.rel (%p546) target = $region80
      $region79: #{gtformer_block.2} parent=11 // pred_region
        _
      $region80: #{gtformer_block.2} parent=11 // pred_fallthru
        _
      // Predicated region
      $region81: #{gtformer_block.2} parent=11 // pred_check
        %p549 = pneg %p431
      $region82: #{gtformer_block.2} parent=11 // pred_check_branch
        %551 = sbr.rel (%p549) target = $region84
      $region83: #{gtformer_block.2} parent=11 // pred_region
        _
      $region84: #{gtformer_block.2} parent=11 // pred_fallthru
        _
    $region12: #{gtformer_block.2} parent=5 // pred_fallthru
      _
    %p552 = scmp.lt.s32.totalorder %s27, 2
    // Predicated region
    $region85: #{gtformer_block.2} parent=5 // pred_check
      %p553 = pneg %p552
    $region86: #{gtformer_block.2} parent=5 // pred_check_branch
      %555 = sbr.rel (%p553) target = $region88
    $region87: #{gtformer_block.2} parent=5 // pred_region
      // Predicated region
      $region89: #{gtformer_block.2} parent=87 // pred_check
        %p556 = pneg %p47
      $region90: #{gtformer_block.2} parent=87 // pred_check_branch
        %558 = sbr.rel (%p556) target = $region92
      $region91: #{gtformer_block.2} parent=87 // pred_region
        %p559 = scmp.lt.s32.totalorder %s27, 1
        %s560 = scalar_select %p559, %s27, 1
        %s561 = smul.addr %s560, 2
        %s562 = smul.addr %s561, 8
        %s563 = scalar_lea.vmem %s0, %s562
      $region92: #{gtformer_block.2} parent=87 // pred_fallthru
        _
    $region88: #{gtformer_block.2} parent=5 // pred_fallthru
      _
    %p564 = scmp.le.s32.totalorder 1, %s27
    %p565 = scmp.lt.s32.totalorder %s27, 3
    %p566 = pnand %p564, %p565
    %p567 = pneg %p566
    // Predicated region
    $region93: #{gtformer_block.2} parent=5 // pred_check
      _
    $region94: #{gtformer_block.2} parent=5 // pred_check_branch
      %569 = sbr.rel (%p566) target = $region96
    $region95: #{gtformer_block.2} parent=5 // pred_region
      %s570 = ssub.s32 %s27, 1
      %p571 = scmp.lt.s32.totalorder %s32, 1
      %s572 = scalar_select %p571, %s32, 1
      %s573 = smul.addr %s572, 2
      %s574 = smul.addr %s573, 8
      %s575 = scalar_lea.vmem %s0, %s574
      %p576 = pneg %p53
      %p577 = pneg %p50
      %p578 = pneg %p74
      %p579 = pneg %p71
      %p580 = pneg %p95
      %p581 = pneg %p92
      %p582 = pneg %p116
      %p583 = pneg %p113
      %p584 = pneg %p137
      %p585 = pneg %p134
      %p586 = pneg %p158
      %p587 = pneg %p155
      %p588 = pneg %p179
      %p589 = pneg %p176
      %p590 = pneg %p200
      %p591 = pneg %p197
      %p592 = pneg %p221
      %p593 = pneg %p218
      %p594 = pneg %p242
      %p595 = pneg %p239
      %p596 = pneg %p263
      %p597 = pneg %p260
      %p598 = pneg %p284
      %p599 = pneg %p281
      %p600 = pneg %p305
      %p601 = pneg %p302
      %p602 = pneg %p326
      %p603 = pneg %p323
      %p604 = pneg %p347
      %p605 = pneg %p344
      %p606 = pneg %p368
      %p607 = pneg %p365
      %p608 = pneg %p389
      %p609 = pneg %p386
      %p610 = pneg %p410
      %p611 = pneg %p407
      %p612 = pneg %p431
      %p613 = pneg %p428
      %p614 = pneg %p457
      %p615 = pneg %p454
      %p616 = scmp.lt.s32.totalorder %s32, 1
      %s617 = scalar_select %p616, %s32, 1
      %s618 = smul.addr %s617, 2
      %s619 = smul.addr %s618, 8
      %s620 = scalar_lea.vmem %s19, %s619
      %p621 = pneg %p483
      %p622 = pneg %p480
      %p623 = scmp.lt.s32.totalorder %s32, 1
      %s624 = scalar_select %p623, %s32, 1
      %s625 = smul.addr %s624, 8
      %s626 = smul.addr %s625, 8
      %s627 = scalar_lea.vmem %s20, %s626
      %p628 = scmp.lt.s32.totalorder %s32, 1
      %s629 = scalar_select %p628, %s32, 1
      %s630 = smul.addr %s629, 2
      %s631 = smul.addr %s630, 8
      %s632 = scalar_lea.vmem %s0, %s631
      %p633 = scmp.lt.s32.totalorder %s32, 1
      %s634 = scalar_select %p633, %s32, 1
      %s635 = smul.addr %s634, 2
      %s636 = smul.addr %s635, 8
      %s637 = scalar_lea.vmem %s19, %s636
      %p638 = scmp.lt.s32.totalorder %s32, 1
      %s639 = scalar_select %p638, %s32, 1
      %s640 = smul.addr %s639, 8
      %s641 = smul.addr %s640, 8
      %s642 = scalar_lea.vmem %s20, %s641
      %v644 = vld [vmem:[%s632] sm:$0xff]
      %v645 = vld [vmem:[%s632 + $0x8] sm:$0x1]
      %v646 = vpack.c.bf16 %v645, %v644
      %v647 = vld [vmem:[%s1] sm:$0xff]
      %v648 = vld [vmem:[%s1 + $0x8] sm:$0xff]
      %v649 = vpack.c.bf16 %v648, %v647
      %v650 = vld [vmem:[%s2] sm:$0x1]
      %v652 = vlaneseq
      %v653 = vshrl.u32 %v652, 7
      %v654 = vsub.s32 0, %v653
      %v655 = vrot.slane %v650, %v654
      %vm657 = vcmask 130048
      %v659 = vsel %vm657, %v646, 0
      %661 = vmatprep.subr.bf16.mxu0 0
      %662 = vmatpush1.bf16.msra.mxu0 %v649
      %663 = vmatprep.subr.bf16.mxu0 0
      %664 = vmatpush1.bf16.msra.mxu0 0
      %665 = vmatprep.subr.bf16.mxu0 0
      %666 = vmatpush1.bf16.msra.mxu0 0
      %667 = vmatprep.subr.bf16.mxu0 0
      %668 = vmatpush1.bf16.msra.mxu0 0
      %669 = vmatprep.subr.bf16.mxu0 0
      %670 = vmatpush1.bf16.msra.mxu0 0
      %671 = vmatprep.subr.bf16.mxu0 0
      %672 = vmatpush1.bf16.msra.mxu0 0
      %673 = vmatprep.subr.bf16.mxu0 0
      %674 = vmatpush1.bf16.msra.mxu0 0
      %675 = vmatprep.subr.bf16.mxu0 0
      %676 = vmatpush1.bf16.msra.mxu0 0
      %677 = vmatprep.subr.bf16.mxu0 0
      %678 = vmatpush1.bf16.msra.mxu0 0
      %679 = vmatprep.subr.bf16.mxu0 0
      %680 = vmatpush1.bf16.msra.mxu0 0
      %681 = vmatprep.subr.bf16.mxu0 0
      %682 = vmatpush1.bf16.msra.mxu0 0
      %683 = vmatprep.subr.bf16.mxu0 0
      %684 = vmatpush1.bf16.msra.mxu0 0
      %685 = vmatprep.subr.bf16.mxu0 0
      %686 = vmatpush1.bf16.msra.mxu0 0
      %687 = vmatprep.subr.bf16.mxu0 0
      %688 = vmatpush1.bf16.msra.mxu0 0
      %689 = vmatprep.subr.bf16.mxu0 0
      %690 = vmatpush1.bf16.msra.mxu0 0
      %691 = vmatprep.subr.bf16.mxu0 0
      %692 = vmatpush1.bf16.msra.mxu0 0
      %693 = vmatprep.mubr.bf16.mxu0 0
      %694 = vmatmul.mubr.bf16.gmra.mrb[0].mxu0 %v659
      %v695 = vpop.f32.mrb[0].mxu0
      %v696 = vadd.f32 %v655, %v695
      %v697 = vpop.f32.mrb[0].mxu0
      %v698 = vpop.f32.mrb[0].mxu0
      %v699 = vadd.f32 %v655, %v698
      %v700 = vpop.f32.mrb[0].mxu0
      %701 = vdwg.mxu0
      %v702 = vpack.c.bf16 %v699, %v696
      %v703 = vld [vmem:[%s3] sm:$0xff]
      %v704 = vld [vmem:[%s3 + $0x8] sm:$0xff]
      %v705 = vld [vmem:[%s3 + $0x10] sm:$0xff]
      %v706 = vld [vmem:[%s3 + $0x18] sm:$0xff]
      %v707 = vpack.c.bf16 %v704, %v703
      %v708 = vpack.c.bf16 %v706, %v705
      %v709 = vld [vmem:[%s4] sm:$0x1]
      %v711 = vlaneseq
      %v712 = vshrl.u32 %v711, 7
      %v713 = vsub.s32 0, %v712
      %v714 = vrot.slane %v709, %v713
      %vm716 = vcmask 261120
      %v718 = vsel %vm716, %v702, 0
      %720 = vmatprep.subr.bf16.mxu0 0
      %721 = vmatpush1.bf16.msra.mxu0 %v707
      %722 = vmatprep.subr.bf16.mxu0 0
      %723 = vmatpush1.bf16.msra.mxu0 %v708
      %724 = vmatprep.subr.bf16.mxu0 0
      %725 = vmatpush1.bf16.msra.mxu0 0
      %726 = vmatprep.subr.bf16.mxu0 0
      %727 = vmatpush1.bf16.msra.mxu0 0
      %728 = vmatprep.subr.bf16.mxu0 0
      %729 = vmatpush1.bf16.msra.mxu0 0
      %730 = vmatprep.subr.bf16.mxu0 0
      %731 = vmatpush1.bf16.msra.mxu0 0
      %732 = vmatprep.subr.bf16.mxu0 0
      %733 = vmatpush1.bf16.msra.mxu0 0
      %734 = vmatprep.subr.bf16.mxu0 0
      %735 = vmatpush1.bf16.msra.mxu0 0
      %736 = vmatprep.subr.bf16.mxu0 0
      %737 = vmatpush1.bf16.msra.mxu0 0
      %738 = vmatprep.subr.bf16.mxu0 0
      %739 = vmatpush1.bf16.msra.mxu0 0
      %740 = vmatprep.subr.bf16.mxu0 0
      %741 = vmatpush1.bf16.msra.mxu0 0
      %742 = vmatprep.subr.bf16.mxu0 0
      %743 = vmatpush1.bf16.msra.mxu0 0
      %744 = vmatprep.subr.bf16.mxu0 0
      %745 = vmatpush1.bf16.msra.mxu0 0
      %746 = vmatprep.subr.bf16.mxu0 0
      %747 = vmatpush1.bf16.msra.mxu0 0
      %748 = vmatprep.subr.bf16.mxu0 0
      %749 = vmatpush1.bf16.msra.mxu0 0
      %750 = vmatprep.subr.bf16.mxu0 0
      %751 = vmatpush1.bf16.msra.mxu0 0
      %752 = vmatprep.mubr.bf16.mxu0 0
      %753 = vmatmul.mubr.bf16.gmra.mrb[0].mxu0 %v718
      %v754 = vpop.f32.mrb[0].mxu0
      %v755 = vadd.f32 %v714, %v754
      %v756 = vpop.f32.mrb[0].mxu0
      %v757 = vpop.f32.mrb[0].mxu0
      %v758 = vadd.f32 %v714, %v757
      %v759 = vpop.f32.mrb[0].mxu0
      %760 = vdwg.mxu0
      %v761 = vpack.c.bf16 %v758, %v755
      %763 = vrot.lane.b32.xlu0 %v761, 96
      %v764 = vpop.permute.xlu0 %763
      %vm765 = vcmask 64512
      %v767 = vsel %vm765, %v761, 0
      %v770 = vsel %vm765, %v764, 0
      %772 = vmatprep.subr.bf16.mxu0 0
      %773 = vmatpush1.bf16.xpose.msra.mxu0 %v770
      %774 = vmatprep.subr.bf16.mxu0 0
      %775 = vmatpush1.bf16.xpose.msra.mxu0 0
      %776 = vmatprep.subr.bf16.mxu0 0
      %777 = vmatpush1.bf16.xpose.msra.mxu0 0
      %778 = vmatprep.subr.bf16.mxu0 0
      %779 = vmatpush1.bf16.xpose.msra.mxu0 0
      %780 = vmatprep.subr.bf16.mxu0 0
      %781 = vmatpush1.bf16.xpose.msra.mxu0 0
      %782 = vmatprep.subr.bf16.mxu0 0
      %783 = vmatpush1.bf16.xpose.msra.mxu0 0
      %784 = vmatprep.subr.bf16.mxu0 0
      %785 = vmatpush1.bf16.xpose.msra.mxu0 0
      %786 = vmatprep.subr.bf16.mxu0 0
      %787 = vmatpush1.bf16.xpose.msra.mxu0 0
      %788 = vmatprep.subr.bf16.mxu0 0
      %789 = vmatpush1.bf16.xpose.msra.mxu0 0
      %790 = vmatprep.subr.bf16.mxu0 0
      %791 = vmatpush1.bf16.xpose.msra.mxu0 0
      %792 = vmatprep.subr.bf16.mxu0 0
      %793 = vmatpush1.bf16.xpose.msra.mxu0 0
      %794 = vmatprep.subr.bf16.mxu0 0
      %795 = vmatpush1.bf16.xpose.msra.mxu0 0
      %796 = vmatprep.subr.bf16.mxu0 0
      %797 = vmatpush1.bf16.xpose.msra.mxu0 0
      %798 = vmatprep.subr.bf16.mxu0 0
      %799 = vmatpush1.bf16.xpose.msra.mxu0 0
      %800 = vmatprep.subr.bf16.mxu0 0
      %801 = vmatpush1.bf16.xpose.msra.mxu0 0
      %802 = vmatprep.subr.bf16.mxu0 0
      %803 = vmatpush1.bf16.xpose.msra.mxu0 0
      %804 = vmatprep.mubr.bf16.mxu0 0
      %805 = vmatmul.mubr.bf16.gmra.mrb[0].mxu0 %v767
      %v806 = vpop.f32.mrb[0].mxu0
      %v807 = vadd.f32 0.0, %v806
      %v808 = vpop.f32.mrb[0].mxu0
      %v809 = vpop.f32.mrb[0].mxu0
      %v810 = vadd.f32 0.0, %v809
      %v811 = vpop.f32.mrb[0].mxu0
      %812 = vdwg.mxu0
      %v813 = vmul.f32 %v807, 0.35355338
      %v814 = vmul.f32 %v810, 0.35355338
      %vm815 = vcmask 72704
      %v816 = vsel %vm815, %v813, -inf
      %817 = vmax.xlane.f32.xlu0 %v816
      %v818 = vpop.xlane.xlu0 %817
      %vm819 = vcmask 65536
      %v820 = vsel %vm819, %v814, -inf
      %821 = vmax.xlane.f32.xlu0 %v820
      %v822 = vpop.xlane.xlu0 %821
      %v823 = vsub.f32 %v813, %v818
      %v824 = vsub.f32 %v814, %v822
      %v825 = vmul.f32 %v823, 1.442695
      %v826 = vpow.pop %v825
      %v827 = vmul.f32 %v824, 1.442695
      %v828 = vpow.pop %v827
      %v829 = vsel %vm815, %v826, 0.0
      %830 = vadd.xlane.f32.xlu0 %v829
      %v831 = vpop.xlane.xlu0 %830
      %v832 = vsel %vm819, %v828, 0.0
      %833 = vadd.xlane.f32.xlu0 %v832
      %v834 = vpop.xlane.xlu0 %833
      %v835 = vrcp.pop %v831
      %v836 = vrcp.pop %v834
      %v837 = vmul.f32 %v826, %v835
      %v838 = vmul.f32 %v828, %v836
      %839 = vst.msk [vmem:[%s642] sm:$0xff] %vm815, %v837
      %840 = vst.msk [vmem:[%s642 + $0x8] sm:$0x1] %vm819, %v838
      %v841 = vpack.c.bf16 %v838, %v837
      %842 = vrot.lane.b32.xlu0 %v761, 64
      %v843 = vpop.permute.xlu0 %842
      %v845 = vsel %vm815, %v841, 0
      %vm847 = vcmask 1043456
      %vm848 = vcmask 1044480
      %v849 = vsel %vm847, 4294967295, 65535
      %v850 = vsel %vm848, %v849, 0
      %v852 = vand.u32 %v843, %v850
      %854 = vmatprep.subr.bf16.mxu0 0
      %855 = vmatpush1.bf16.msra.mxu0 %v852
      %856 = vmatprep.subr.bf16.mxu0 0
      %857 = vmatpush1.bf16.msra.mxu0 0
      %858 = vmatprep.subr.bf16.mxu0 0
      %859 = vmatpush1.bf16.msra.mxu0 0
      %860 = vmatprep.subr.bf16.mxu0 0
      %861 = vmatpush1.bf16.msra.mxu0 0
      %862 = vmatprep.subr.bf16.mxu0 0
      %863 = vmatpush1.bf16.msra.mxu0 0
      %864 = vmatprep.subr.bf16.mxu0 0
      %865 = vmatpush1.bf16.msra.mxu0 0
      %866 = vmatprep.subr.bf16.mxu0 0
      %867 = vmatpush1.bf16.msra.mxu0 0
      %868 = vmatprep.subr.bf16.mxu0 0
      %869 = vmatpush1.bf16.msra.mxu0 0
      %870 = vmatprep.subr.bf16.mxu0 0
      %871 = vmatpush1.bf16.msra.mxu0 0
      %872 = vmatprep.subr.bf16.mxu0 0
      %873 = vmatpush1.bf16.msra.mxu0 0
      %874 = vmatprep.subr.bf16.mxu0 0
      %875 = vmatpush1.bf16.msra.mxu0 0
      %876 = vmatprep.subr.bf16.mxu0 0
      %877 = vmatpush1.bf16.msra.mxu0 0
      %878 = vmatprep.subr.bf16.mxu0 0
      %879 = vmatpush1.bf16.msra.mxu0 0
      %880 = vmatprep.subr.bf16.mxu0 0
      %881 = vmatpush1.bf16.msra.mxu0 0
      %882 = vmatprep.subr.bf16.mxu0 0
      %883 = vmatpush1.bf16.msra.mxu0 0
      %884 = vmatprep.subr.bf16.mxu0 0
      %885 = vmatpush1.bf16.msra.mxu0 0
      %886 = vmatprep.mubr.bf16.mxu0 0
      %887 = vmatmul.mubr.bf16.gmra.mrb[0].mxu0 %v845
      %v888 = vpop.f32.mrb[0].mxu0
      %v889 = vadd.f32 0.0, %v888
      %v890 = vpop.f32.mrb[0].mxu0
      %v891 = vpop.f32.mrb[0].mxu0
      %v892 = vadd.f32 0.0, %v891
      %v893 = vpop.f32.mrb[0].mxu0
      %894 = vdwg.mxu0
      %895 = vrot.lane.b32.xlu0 %v761, 120
      %v896 = vpop.permute.xlu0 %895
      %897 = vrot.lane.b32.xlu0 %v761, 88
      %v898 = vpop.permute.xlu0 %897
      %v900 = vsel %vm765, %v896, 0
      %v903 = vsel %vm765, %v898, 0
      %905 = vmatprep.subr.bf16.mxu0 0
      %906 = vmatpush1.bf16.xpose.msra.mxu0 %v903
      %907 = vmatprep.subr.bf16.mxu0 0
      %908 = vmatpush1.bf16.xpose.msra.mxu0 0
      %909 = vmatprep.subr.bf16.mxu0 0
      %910 = vmatpush1.bf16.xpose.msra.mxu0 0
      %911 = vmatprep.subr.bf16.mxu0 0
      %912 = vmatpush1.bf16.xpose.msra.mxu0 0
      %913 = vmatprep.subr.bf16.mxu0 0
      %914 = vmatpush1.bf16.xpose.msra.mxu0 0
      %915 = vmatprep.subr.bf16.mxu0 0
      %916 = vmatpush1.bf16.xpose.msra.mxu0 0
      %917 = vmatprep.subr.bf16.mxu0 0
      %918 = vmatpush1.bf16.xpose.msra.mxu0 0
      %919 = vmatprep.subr.bf16.mxu0 0
      %920 = vmatpush1.bf16.xpose.msra.mxu0 0
      %921 = vmatprep.subr.bf16.mxu0 0
      %922 = vmatpush1.bf16.xpose.msra.mxu0 0
      %923 = vmatprep.subr.bf16.mxu0 0
      %924 = vmatpush1.bf16.xpose.msra.mxu0 0
      %925 = vmatprep.subr.bf16.mxu0 0
      %926 = vmatpush1.bf16.xpose.msra.mxu0 0
      %927 = vmatprep.subr.bf16.mxu0 0
      %928 = vmatpush1.bf16.xpose.msra.mxu0 0
      %929 = vmatprep.subr.bf16.mxu0 0
      %930 = vmatpush1.bf16.xpose.msra.mxu0 0
      %931 = vmatprep.subr.bf16.mxu0 0
      %932 = vmatpush1.bf16.xpose.msra.mxu0 0
      %933 = vmatprep.subr.bf16.mxu0 0
      %934 = vmatpush1.bf16.xpose.msra.mxu0 0
      %935 = vmatprep.subr.bf16.mxu0 0
      %936 = vmatpush1.bf16.xpose.msra.mxu0 0
      %937 = vmatprep.mubr.bf16.mxu0 0
      %938 = vmatmul.mubr.bf16.gmra.mrb[0].mxu0 %v900
      %v939 = vpop.f32.mrb[0].mxu0
      %v940 = vadd.f32 0.0, %v939
      %v941 = vpop.f32.mrb[0].mxu0
      %v942 = vpop.f32.mrb[0].mxu0
      %v943 = vadd.f32 0.0, %v942
      %v944 = vpop.f32.mrb[0].mxu0
      %945 = vdwg.mxu0
      %v946 = vmul.f32 %v940, 0.35355338
      %v947 = vmul.f32 %v943, 0.35355338
      %v948 = vsel %vm815, %v946, -inf
      %949 = vmax.xlane.f32.xlu0 %v948
      %v950 = vpop.xlane.xlu0 %949
      %v951 = vsel %vm819, %v947, -inf
      %952 = vmax.xlane.f32.xlu0 %v951
      %v953 = vpop.xlane.xlu0 %952
      %v954 = vsub.f32 %v946, %v950
      %v955 = vsub.f32 %v947, %v953
      %v956 = vmul.f32 %v954, 1.442695
      %v957 = vpow.pop %v956
      %v958 = vmul.f32 %v955, 1.442695
      %v959 = vpow.pop %v958
      %v960 = vsel %vm815, %v957, 0.0
      %961 = vadd.xlane.f32.xlu0 %v960
      %v962 = vpop.xlane.xlu0 %961
      %v963 = vsel %vm819, %v959, 0.0
      %964 = vadd.xlane.f32.xlu0 %v963
      %v965 = vpop.xlane.xlu0 %964
      %v966 = vrcp.pop %v962
      %v967 = vrcp.pop %v965
      %v968 = vmul.f32 %v957, %v966
      %v969 = vmul.f32 %v959, %v967
      %s970 = scalar_lea.vmem %s642, 16
      %971 = vst.msk [vmem:[%s970] sm:$0xff] %vm815, %v968
      %972 = vst.msk [vmem:[%s970 + $0x8] sm:$0x1] %vm819, %v969
      %v973 = vpack.c.bf16 %v969, %v968
      %974 = vrot.lane.b32.xlu0 %v761, 56
      %v975 = vpop.permute.xlu0 %974
      %v977 = vsel %vm815, %v973, 0
      %v980 = vand.u32 %v975, %v850
      %982 = vmatprep.subr.bf16.mxu0 0
      %983 = vmatpush1.bf16.msra.mxu0 %v980
      %984 = vmatprep.subr.bf16.mxu0 0
      %985 = vmatpush1.bf16.msra.mxu0 0
      %986 = vmatprep.subr.bf16.mxu0 0
      %987 = vmatpush1.bf16.msra.mxu0 0
      %988 = vmatprep.subr.bf16.mxu0 0
      %989 = vmatpush1.bf16.msra.mxu0 0
      %990 = vmatprep.subr.bf16.mxu0 0
      %991 = vmatpush1.bf16.msra.mxu0 0
      %992 = vmatprep.subr.bf16.mxu0 0
      %993 = vmatpush1.bf16.msra.mxu0 0
      %994 = vmatprep.subr.bf16.mxu0 0
      %995 = vmatpush1.bf16.msra.mxu0 0
      %996 = vmatprep.subr.bf16.mxu0 0
      %997 = vmatpush1.bf16.msra.mxu0 0
      %998 = vmatprep.subr.bf16.mxu0 0
      %999 = vmatpush1.bf16.msra.mxu0 0
      %1000 = vmatprep.subr.bf16.mxu0 0
      %1001 = vmatpush1.bf16.msra.mxu0 0
      %1002 = vmatprep.subr.bf16.mxu0 0
      %1003 = vmatpush1.bf16.msra.mxu0 0
      %1004 = vmatprep.subr.bf16.mxu0 0
      %1005 = vmatpush1.bf16.msra.mxu0 0
      %1006 = vmatprep.subr.bf16.mxu0 0
      %1007 = vmatpush1.bf16.msra.mxu0 0
      %1008 = vmatprep.subr.bf16.mxu0 0
      %1009 = vmatpush1.bf16.msra.mxu0 0
      %1010 = vmatprep.subr.bf16.mxu0 0
      %1011 = vmatpush1.bf16.msra.mxu0 0
      %1012 = vmatprep.subr.bf16.mxu0 0
      %1013 = vmatpush1.bf16.msra.mxu0 0
      %1014 = vmatprep.mubr.bf16.mxu0 0
      %1015 = vmatmul.mubr.bf16.gmra.mrb[0].mxu0 %v977
      %v1016 = vpop.f32.mrb[0].mxu0
      %v1017 = vadd.f32 0.0, %v1016
      %v1018 = vpop.f32.mrb[0].mxu0
      %v1019 = vpop.f32.mrb[0].mxu0
      %v1020 = vadd.f32 0.0, %v1019
      %v1021 = vpop.f32.mrb[0].mxu0
      %1022 = vdwg.mxu0
      %1023 = vrot.lane.b32.xlu0 %v761, 112
      %v1024 = vpop.permute.xlu0 %1023
      %1025 = vrot.lane.b32.xlu0 %v761, 80
      %v1026 = vpop.permute.xlu0 %1025
      %v1028 = vsel %vm765, %v1024, 0
      %v1031 = vsel %vm765, %v1026, 0
      %1033 = vmatprep.subr.bf16.mxu0 0
      %1034 = vmatpush1.bf16.xpose.msra.mxu0 %v1031
      %1035 = vmatprep.subr.bf16.mxu0 0
      %1036 = vmatpush1.bf16.xpose.msra.mxu0 0
      %1037 = vmatprep.subr.bf16.mxu0 0
      %1038 = vmatpush1.bf16.xpose.msra.mxu0 0
      %1039 = vmatprep.subr.bf16.mxu0 0
      %1040 = vmatpush1.bf16.xpose.msra.mxu0 0
      %1041 = vmatprep.subr.bf16.mxu0 0
      %1042 = vmatpush1.bf16.xpose.msra.mxu0 0
      %1043 = vmatprep.subr.bf16.mxu0 0
      %1044 = vmatpush1.bf16.xpose.msra.mxu0 0
      %1045 = vmatprep.subr.bf16.mxu0 0
      %1046 = vmatpush1.bf16.xpose.msra.mxu0 0
      %1047 = vmatprep.subr.bf16.mxu0 0
      %1048 = vmatpush1.bf16.xpose.msra.mxu0 0
      %1049 = vmatprep.subr.bf16.mxu0 0
      %1050 = vmatpush1.bf16.xpose.msra.mxu0 0
      %1051 = vmatprep.subr.bf16.mxu0 0
      %1052 = vmatpush1.bf16.xpose.msra.mxu0 0
      %1053 = vmatprep.subr.bf16.mxu0 0
      %1054 = vmatpush1.bf16.xpose.msra.mxu0 0
      %1055 = vmatprep.subr.bf16.mxu0 0
      %1056 = vmatpush1.bf16.xpose.msra.mxu0 0
      %1057 = vmatprep.subr.bf16.mxu0 0
      %1058 = vmatpush1.bf16.xpose.msra.mxu0 0
      %1059 = vmatprep.subr.bf16.mxu0 0
      %1060 = vmatpush1.bf16.xpose.msra.mxu0 0
      %1061 = vmatprep.subr.bf16.mxu0 0
      %1062 = vmatpush1.bf16.xpose.msra.mxu0 0
      %1063 = vmatprep.subr.bf16.mxu0 0
      %1064 = vmatpush1.bf16.xpose.msra.mxu0 0
      %1065 = vmatprep.mubr.bf16.mxu0 0
      %1066 = vmatmul.mubr.bf16.gmra.mrb[0].mxu0 %v1028
      %v1067 = vpop.f32.mrb[0].mxu0
      %v1068 = vadd.f32 0.0, %v1067
      %v1069 = vpop.f32.mrb[0].mxu0
      %v1070 = vpop.f32.mrb[0].mxu0
      %v1071 = vadd.f32 0.0, %v1070
      %v1072 = vpop.f32.mrb[0].mxu0
      %1073 = vdwg.mxu0
      %v1074 = vmul.f32 %v1068, 0.35355338
      %v1075 = vmul.f32 %v1071, 0.35355338
      %v1076 = vsel %vm815, %v1074, -inf
      %1077 = vmax.xlane.f32.xlu0 %v1076
      %v1078 = vpop.xlane.xlu0 %1077
      %v1079 = vsel %vm819, %v1075, -inf
      %1080 = vmax.xlane.f32.xlu0 %v1079
      %v1081 = vpop.xlane.xlu0 %1080
      %v1082 = vsub.f32 %v1074, %v1078
      %v1083 = vsub.f32 %v1075, %v1081
      %v1084 = vmul.f32 %v1082, 1.442695
      %v1085 = vpow.pop %v1084
      %v1086 = vmul.f32 %v1083, 1.442695
      %v1087 = vpow.pop %v1086
      %v1088 = vsel %vm815, %v1085, 0.0
      %1089 = vadd.xlane.f32.xlu0 %v1088
      %v1090 = vpop.xlane.xlu0 %1089
      %v1091 = vsel %vm819, %v1087, 0.0
      %1092 = vadd.xlane.f32.xlu0 %v1091
      %v1093 = vpop.xlane.xlu0 %1092
      %v1094 = vrcp.pop %v1090
      %v1095 = vrcp.pop %v1093
      %v1096 = vmul.f32 %v1085, %v1094
      %v1097 = vmul.f32 %v1087, %v1095
      %s1098 = scalar_lea.vmem %s642, 32
      %1099 = vst.msk [vmem:[%s1098] sm:$0xff] %vm815, %v1096
      %1100 = vst.msk [vmem:[%s1098 + $0x8] sm:$0x1] %vm819, %v1097
      %v1101 = vpack.c.bf16 %v1097, %v1096
      %1102 = vrot.lane.b32.xlu0 %v761, 48
      %v1103 = vpop.permute.xlu0 %1102
      %v1105 = vsel %vm815, %v1101, 0
      %v1108 = vand.u32 %v1103, %v850
      %1110 = vmatprep.subr.bf16.mxu0 0
      %1111 = vmatpush1.bf16.msra.mxu0 %v1108
      %1112 = vmatprep.subr.bf16.mxu0 0
      %1113 = vmatpush1.bf16.msra.mxu0 0
      %1114 = vmatprep.subr.bf16.mxu0 0
      %1115 = vmatpush1.bf16.msra.mxu0 0
      %1116 = vmatprep.subr.bf16.mxu0 0
      %1117 = vmatpush1.bf16.msra.mxu0 0
      %1118 = vmatprep.subr.bf16.mxu0 0
      %1119 = vmatpush1.bf16.msra.mxu0 0
      %1120 = vmatprep.subr.bf16.mxu0 0
      %1121 = vmatpush1.bf16.msra.mxu0 0
      %1122 = vmatprep.subr.bf16.mxu0 0
      %1123 = vmatpush1.bf16.msra.mxu0 0
      %1124 = vmatprep.subr.bf16.mxu0 0
      %1125 = vmatpush1.bf16.msra.mxu0 0
      %1126 = vmatprep.subr.bf16.mxu0 0
      %1127 = vmatpush1.bf16.msra.mxu0 0
      %1128 = vmatprep.subr.bf16.mxu0 0
      %1129 = vmatpush1.bf16.msra.mxu0 0
      %1130 = vmatprep.subr.bf16.mxu0 0
      %1131 = vmatpush1.bf16.msra.mxu0 0
      %1132 = vmatprep.subr.bf16.mxu0 0
      %1133 = vmatpush1.bf16.msra.mxu0 0
      %1134 = vmatprep.subr.bf16.mxu0 0
      %1135 = vmatpush1.bf16.msra.mxu0 0
      %1136 = vmatprep.subr.bf16.mxu0 0
      %1137 = vmatpush1.bf16.msra.mxu0 0
      %1138 = vmatprep.subr.bf16.mxu0 0
      %1139 = vmatpush1.bf16.msra.mxu0 0
      %1140 = vmatprep.subr.bf16.mxu0 0
      %1141 = vmatpush1.bf16.msra.mxu0 0
      %1142 = vmatprep.mubr.bf16.mxu0 0
      %1143 = vmatmul.mubr.bf16.gmra.mrb[0].mxu0 %v1105
      %v1144 = vpop.f32.mrb[0].mxu0
      %v1145 = vadd.f32 0.0, %v1144
      %v1146 = vpop.f32.mrb[0].mxu0
      %v1147 = vpop.f32.mrb[0].mxu0
      %v1148 = vadd.f32 0.0, %v1147
      %v1149 = vpop.f32.mrb[0].mxu0
      %1150 = vdwg.mxu0
      %1151 = vrot.lane.b32.xlu0 %v761, 104
      %v1152 = vpop.permute.xlu0 %1151
      %1153 = vrot.lane.b32.xlu0 %v761, 72
      %v1154 = vpop.permute.xlu0 %1153
      %v1156 = vsel %vm765, %v1152, 0
      %v1159 = vsel %vm765, %v1154, 0
      %1161 = vmatprep.subr.bf16.mxu0 0
      %1162 = vmatpush1.bf16.xpose.msra.mxu0 %v1159
      %1163 = vmatprep.subr.bf16.mxu0 0
      %1164 = vmatpush1.bf16.xpose.msra.mxu0 0
      %1165 = vmatprep.subr.bf16.mxu0 0
      %1166 = vmatpush1.bf16.xpose.msra.mxu0 0
      %1167 = vmatprep.subr.bf16.mxu0 0
      %1168 = vmatpush1.bf16.xpose.msra.mxu0 0
      %1169 = vmatprep.subr.bf16.mxu0 0
      %1170 = vmatpush1.bf16.xpose.msra.mxu0 0
      %1171 = vmatprep.subr.bf16.mxu0 0
      %1172 = vmatpush1.bf16.xpose.msra.mxu0 0
      %1173 = vmatprep.subr.bf16.mxu0 0
      %1174 = vmatpush1.bf16.xpose.msra.mxu0 0
      %1175 = vmatprep.subr.bf16.mxu0 0
      %1176 = vmatpush1.bf16.xpose.msra.mxu0 0
      %1177 = vmatprep.subr.bf16.mxu0 0
      %1178 = vmatpush1.bf16.xpose.msra.mxu0 0
      %1179 = vmatprep.subr.bf16.mxu0 0
      %1180 = vmatpush1.bf16.xpose.msra.mxu0 0
      %1181 = vmatprep.subr.bf16.mxu0 0
      %1182 = vmatpush1.bf16.xpose.msra.mxu0 0
      %1183 = vmatprep.subr.bf16.mxu0 0
      %1184 = vmatpush1.bf16.xpose.msra.mxu0 0
      %1185 = vmatprep.subr.bf16.mxu0 0
      %1186 = vmatpush1.bf16.xpose.msra.mxu0 0
      %1187 = vmatprep.subr.bf16.mxu0 0
      %1188 = vmatpush1.bf16.xpose.msra.mxu0 0
      %1189 = vmatprep.subr.bf16.mxu0 0
      %1190 = vmatpush1.bf16.xpose.msra.mxu0 0
      %1191 = vmatprep.subr.bf16.mxu0 0
      %1192 = vmatpush1.bf16.xpose.msra.mxu0 0
      %1193 = vmatprep.mubr.bf16.mxu0 0
      %1194 = vmatmul.mubr.bf16.gmra.mrb[0].mxu0 %v1156
      %v1195 = vpop.f32.mrb[0].mxu0
      %v1196 = vadd.f32 0.0, %v1195
      %v1197 = vpop.f32.mrb[0].mxu0
      %v1198 = vpop.f32.mrb[0].mxu0
      %v1199 = vadd.f32 0.0, %v1198
      %v1200 = vpop.f32.mrb[0].mxu0
      %1201 = vdwg.mxu0
      %v1202 = vmul.f32 %v1196, 0.35355338
      %v1203 = vmul.f32 %v1199, 0.35355338
      %v1204 = vsel %vm815, %v1202, -inf
      %1205 = vmax.xlane.f32.xlu0 %v1204
      %v1206 = vpop.xlane.xlu0 %1205
      %v1207 = vsel %vm819, %v1203, -inf
      %1208 = vmax.xlane.f32.xlu0 %v1207
      %v1209 = vpop.xlane.xlu0 %1208
      %v1210 = vsub.f32 %v1202, %v1206
      %v1211 = vsub.f32 %v1203, %v1209
      %v1212 = vmul.f32 %v1210, 1.442695
      %v1213 = vpow.pop %v1212
      %v1214 = vmul.f32 %v1211, 1.442695
      %v1215 = vpow.pop %v1214
      %v1216 = vsel %vm815, %v1213, 0.0
      %1217 = vadd.xlane.f32.xlu0 %v1216
      %v1218 = vpop.xlane.xlu0 %1217
      %v1219 = vsel %vm819, %v1215, 0.0
      %1220 = vadd.xlane.f32.xlu0 %v1219
      %v1221 = vpop.xlane.xlu0 %1220
      %v1222 = vrcp.pop %v1218
      %v1223 = vrcp.pop %v1221
      %v1224 = vmul.f32 %v1213, %v1222
      %v1225 = vmul.f32 %v1215, %v1223
      %s1226 = scalar_lea.vmem %s642, 48
      %1227 = vst.msk [vmem:[%s1226] sm:$0xff] %vm815, %v1224
      %1228 = vst.msk [vmem:[%s1226 + $0x8] sm:$0x1] %vm819, %v1225
      %v1229 = vpack.c.bf16 %v1225, %v1224
      %1230 = vrot.lane.b32.xlu0 %v761, 40
      %v1231 = vpop.permute.xlu0 %1230
      %v1233 = vsel %vm815, %v1229, 0
      %v1236 = vand.u32 %v1231, %v850
      %1238 = vmatprep.subr.bf16.mxu0 0
      %1239 = vmatpush1.bf16.msra.mxu0 %v1236
      %1240 = vmatprep.subr.bf16.mxu0 0
      %1241 = vmatpush1.bf16.msra.mxu0 0
      %1242 = vmatprep.subr.bf16.mxu0 0
      %1243 = vmatpush1.bf16.msra.mxu0 0
      %1244 = vmatprep.subr.bf16.mxu0 0
      %1245 = vmatpush1.bf16.msra.mxu0 0
      %1246 = vmatprep.subr.bf16.mxu0 0
      %1247 = vmatpush1.bf16.msra.mxu0 0
      %1248 = vmatprep.subr.bf16.mxu0 0
      %1249 = vmatpush1.bf16.msra.mxu0 0
      %1250 = vmatprep.subr.bf16.mxu0 0
      %1251 = vmatpush1.bf16.msra.mxu0 0
      %1252 = vmatprep.subr.bf16.mxu0 0
      %1253 = vmatpush1.bf16.msra.mxu0 0
      %1254 = vmatprep.subr.bf16.mxu0 0
      %1255 = vmatpush1.bf16.msra.mxu0 0
      %1256 = vmatprep.subr.bf16.mxu0 0
      %1257 = vmatpush1.bf16.msra.mxu0 0
      %1258 = vmatprep.subr.bf16.mxu0 0
      %1259 = vmatpush1.bf16.msra.mxu0 0
      %1260 = vmatprep.subr.bf16.mxu0 0
      %1261 = vmatpush1.bf16.msra.mxu0 0
      %1262 = vmatprep.subr.bf16.mxu0 0
      %1263 = vmatpush1.bf16.msra.mxu0 0
      %1264 = vmatprep.subr.bf16.mxu0 0
      %1265 = vmatpush1.bf16.msra.mxu0 0
      %1266 = vmatprep.subr.bf16.mxu0 0
      %1267 = vmatpush1.bf16.msra.mxu0 0
      %1268 = vmatprep.subr.bf16.mxu0 0
      %1269 = vmatpush1.bf16.msra.mxu0 0
      %1270 = vmatprep.mubr.bf16.mxu0 0
      %1271 = vmatmul.mubr.bf16.gmra.mrb[0].mxu0 %v1233
      %v1272 = vpop.f32.mrb[0].mxu0
      %v1273 = vadd.f32 0.0, %v1272
      %v1274 = vpop.f32.mrb[0].mxu0
      %v1275 = vpop.f32.mrb[0].mxu0
      %v1276 = vadd.f32 0.0, %v1275
      %v1277 = vpop.f32.mrb[0].mxu0
      %1278 = vdwg.mxu0
      %1281 = vrot.lane.b32.xlu0 %v1017, 8
      %v1282 = vpop.permute.xlu0 %1281
      %1283 = vrot.lane.b32.xlu0 %v1020, 8
      %v1284 = vpop.permute.xlu0 %1283
      %1289 = vrot.lane.b32.xlu0 %v1145, 16
      %v1290 = vpop.permute.xlu0 %1289
      %1291 = vrot.lane.b32.xlu0 %v1148, 16
      %v1292 = vpop.permute.xlu0 %1291
      %1297 = vrot.lane.b32.xlu0 %v1273, 24
      %v1298 = vpop.permute.xlu0 %1297
      %1299 = vrot.lane.b32.xlu0 %v1276, 24
      %v1300 = vpop.permute.xlu0 %1299
      %v1303 = vsel %vm765, %v889, %v1282
      %v1304 = vsel %vm765, %v892, %v1284
      %v1305 = vsel %vm657, %v1303, %v1290
      %v1306 = vsel %vm657, %v1304, %v1292
      %vm1307 = vcmask 195584
      %v1308 = vsel %vm1307, %v1305, %v1298
      %v1309 = vsel %vm1307, %v1306, %v1300
      %v1310 = vpack.c.bf16 %v1309, %v1308
      %v1311 = vld [vmem:[%s5] sm:$0xff]
      %v1312 = vld [vmem:[%s5 + $0x8] sm:$0xff]
      %v1313 = vld [vmem:[%s5 + $0x10] sm:$0xff]
      %v1314 = vld [vmem:[%s5 + $0x18] sm:$0xff]
      %v1315 = vpack.c.bf16 %v1312, %v1311
      %v1316 = vpack.c.bf16 %v1314, %v1313
      %v1317 = vld [vmem:[%s6] sm:$0x1]
      %v1319 = vlaneseq
      %v1320 = vshrl.u32 %v1319, 7
      %v1321 = vsub.s32 0, %v1320
      %v1322 = vrot.slane %v1317, %v1321
      %v1325 = vsel %vm716, %v1310, 0
      %1327 = vmatprep.subr.bf16.mxu0 0
      %1328 = vmatpush1.bf16.msra.mxu0 %v1315
      %1329 = vmatprep.subr.bf16.mxu0 0
      %1330 = vmatpush1.bf16.msra.mxu0 %v1316
      %1331 = vmatprep.subr.bf16.mxu0 0
      %1332 = vmatpush1.bf16.msra.mxu0 0
      %1333 = vmatprep.subr.bf16.mxu0 0
      %1334 = vmatpush1.bf16.msra.mxu0 0
      %1335 = vmatprep.subr.bf16.mxu0 0
      %1336 = vmatpush1.bf16.msra.mxu0 0
      %1337 = vmatprep.subr.bf16.mxu0 0
      %1338 = vmatpush1.bf16.msra.mxu0 0
      %1339 = vmatprep.subr.bf16.mxu0 0
      %1340 = vmatpush1.bf16.msra.mxu0 0
      %1341 = vmatprep.subr.bf16.mxu0 0
      %1342 = vmatpush1.bf16.msra.mxu0 0
      %1343 = vmatprep.subr.bf16.mxu0 0
      %1344 = vmatpush1.bf16.msra.mxu0 0
      %1345 = vmatprep.subr.bf16.mxu0 0
      %1346 = vmatpush1.bf16.msra.mxu0 0
      %1347 = vmatprep.subr.bf16.mxu0 0
      %1348 = vmatpush1.bf16.msra.mxu0 0
      %1349 = vmatprep.subr.bf16.mxu0 0
      %1350 = vmatpush1.bf16.msra.mxu0 0
      %1351 = vmatprep.subr.bf16.mxu0 0
      %1352 = vmatpush1.bf16.msra.mxu0 0
      %1353 = vmatprep.subr.bf16.mxu0 0
      %1354 = vmatpush1.bf16.msra.mxu0 0
      %1355 = vmatprep.subr.bf16.mxu0 0
      %1356 = vmatpush1.bf16.msra.mxu0 0
      %1357 = vmatprep.subr.bf16.mxu0 0
      %1358 = vmatpush1.bf16.msra.mxu0 0
      %1359 = vmatprep.mubr.bf16.mxu0 0
      %1360 = vmatmul.mubr.bf16.gmra.mrb[0].mxu0 %v1325
      %v1361 = vpop.f32.mrb[0].mxu0
      %v1362 = vadd.f32 %v1322, %v1361
      %v1363 = vpop.f32.mrb[0].mxu0
      %v1364 = vpop.f32.mrb[0].mxu0
      %v1365 = vadd.f32 %v1322, %v1364
      %v1366 = vpop.f32.mrb[0].mxu0
      %1367 = vdwg.mxu0
      %v1368 = vadd.f32 %v696, %v1362
      %v1369 = vadd.f32 %v699, %v1365
      %v1370 = vsel %vm716, %v1368, 0.0
      %1371 = vadd.xlane.f32.xlu0 %v1370
      %v1372 = vpop.xlane.xlu0 %1371
      %vm1373 = vcmask 253952
      %v1374 = vsel %vm1373, %v1369, 0.0
      %1375 = vadd.xlane.f32.xlu0 %v1374
      %v1376 = vpop.xlane.xlu0 %1375
      %v1377 = vrcp.pop 32.0
      %v1378 = vmul.f32 %v1372, %v1377
      %v1379 = vmul.f32 %v1376, %v1377
      %v1380 = vsub.f32 %v1368, %v1378
      %v1381 = vsub.f32 %v1369, %v1379
      %v1382 = vmul.f32 %v1380, %v1380
      %v1383 = vmul.f32 %v1381, %v1381
      %v1384 = vsel %vm716, %v1382, 0.0
      %1385 = vadd.xlane.f32.xlu0 %v1384
      %v1386 = vpop.xlane.xlu0 %1385
      %v1387 = vsel %vm1373, %v1383, 0.0
      %1388 = vadd.xlane.f32.xlu0 %v1387
      %v1389 = vpop.xlane.xlu0 %1388
      %v1390 = vmul.f32 %v1386, %v1377
      %v1391 = vmul.f32 %v1389, %v1377
      %v1392 = vadd.f32 %v1390, 1e-05
      %v1393 = vadd.f32 %v1391, 1e-05
      %v1394 = vrsqrt.pop %v1392
      %v1395 = vrsqrt.pop %v1393
      %v1396 = vmul.f32 %v1380, %v1394
      %v1397 = vmul.f32 %v1381, %v1395
      %v1398 = vld [vmem:[%s7] sm:$0x1]
      %v1400 = vlaneseq
      %v1401 = vshrl.u32 %v1400, 7
      %v1402 = vsub.s32 0, %v1401
      %v1403 = vrot.slane %v1398, %v1402
      %v1405 = vmul.f32 %v1396, %v1403
      %v1406 = vmul.f32 %v1397, %v1403
      %v1407 = vld [vmem:[%s8] sm:$0x1]
      %v1409 = vlaneseq
      %v1410 = vshrl.u32 %v1409, 7
      %v1411 = vsub.s32 0, %v1410
      %v1412 = vrot.slane %v1407, %v1411
      %v1414 = vadd.f32 %v1405, %v1412
      %v1415 = vadd.f32 %v1406, %v1412
      %v1416 = vpack.c.bf16 %v1415, %v1414
      %v1417 = vld [vmem:[%s9] sm:$0xff]
      %v1418 = vld [vmem:[%s9 + $0x8] sm:$0xff]
      %v1419 = vld [vmem:[%s9 + $0x10] sm:$0xff]
      %v1420 = vld [vmem:[%s9 + $0x18] sm:$0xff]
      %v1421 = vpack.c.bf16 %v1418, %v1417
      %v1422 = vpack.c.bf16 %v1420, %v1419
      %v1423 = vld [vmem:[%s10] sm:$0x1]
      %v1425 = vlaneseq
      %v1426 = vshrl.u32 %v1425, 7
      %v1427 = vsub.s32 0, %v1426
      %v1428 = vrot.slane %v1423, %v1427
      %v1431 = vsel %vm716, %v1416, 0
      %1433 = vmatprep.subr.bf16.mxu0 0
      %1434 = vmatpush1.bf16.msra.mxu0 %v1421
      %1435 = vmatprep.subr.bf16.mxu0 0
      %1436 = vmatpush1.bf16.msra.mxu0 %v1422
      %1437 = vmatprep.subr.bf16.mxu0 0
      %1438 = vmatpush1.bf16.msra.mxu0 0
      %1439 = vmatprep.subr.bf16.mxu0 0
      %1440 = vmatpush1.bf16.msra.mxu0 0
      %1441 = vmatprep.subr.bf16.mxu0 0
      %1442 = vmatpush1.bf16.msra.mxu0 0
      %1443 = vmatprep.subr.bf16.mxu0 0
      %1444 = vmatpush1.bf16.msra.mxu0 0
      %1445 = vmatprep.subr.bf16.mxu0 0
      %1446 = vmatpush1.bf16.msra.mxu0 0
      %1447 = vmatprep.subr.bf16.mxu0 0
      %1448 = vmatpush1.bf16.msra.mxu0 0
      %1449 = vmatprep.subr.bf16.mxu0 0
      %1450 = vmatpush1.bf16.msra.mxu0 0
      %1451 = vmatprep.subr.bf16.mxu0 0
      %1452 = vmatpush1.bf16.msra.mxu0 0
      %1453 = vmatprep.subr.bf16.mxu0 0
      %1454 = vmatpush1.bf16.msra.mxu0 0
      %1455 = vmatprep.subr.bf16.mxu0 0
      %1456 = vmatpush1.bf16.msra.mxu0 0
      %1457 = vmatprep.subr.bf16.mxu0 0
      %1458 = vmatpush1.bf16.msra.mxu0 0
      %1459 = vmatprep.subr.bf16.mxu0 0
      %1460 = vmatpush1.bf16.msra.mxu0 0
      %1461 = vmatprep.subr.bf16.mxu0 0
      %1462 = vmatpush1.bf16.msra.mxu0 0
      %1463 = vmatprep.subr.bf16.mxu0 0
      %1464 = vmatpush1.bf16.msra.mxu0 0
      %1465 = vmatprep.mubr.bf16.mxu0 0
      %1466 = vmatmul.mubr.bf16.gmra.mrb[0].mxu0 %v1431
      %v1467 = vpop.f32.mrb[0].mxu0
      %v1468 = vadd.f32 %v1428, %v1467
      %v1469 = vpop.f32.mrb[0].mxu0
      %v1470 = vpop.f32.mrb[0].mxu0
      %v1471 = vadd.f32 %v1428, %v1470
      %v1472 = vpop.f32.mrb[0].mxu0
      %1473 = vdwg.mxu0
      %v1474 = vmax.f32 %v1468, 0.0
      %v1475 = vmax.f32 %v1471, 0.0
      %v1476 = vpack.c.bf16 %v1475, %v1474
      %v1477 = vld [vmem:[%s11] sm:$0xff]
      %v1478 = vld [vmem:[%s11 + $0x8] sm:$0xff]
      %v1479 = vld [vmem:[%s11 + $0x10] sm:$0xff]
      %v1480 = vld [vmem:[%s11 + $0x18] sm:$0xff]
      %v1481 = vld [vmem:[%s11 + $0x20] sm:$0xff]
      %v1482 = vld [vmem:[%s11 + $0x28] sm:$0xff]
      %v1483 = vld [vmem:[%s11 + $0x30] sm:$0xff]
      %v1484 = vld [vmem:[%s11 + $0x38] sm:$0xff]
      %v1485 = vld [vmem:[%s11 + $0x40] sm:$0xff]
      %v1486 = vld [vmem:[%s11 + $0x48] sm:$0xff]
      %v1487 = vld [vmem:[%s11 + $0x50] sm:$0xff]
      %v1488 = vld [vmem:[%s11 + $0x58] sm:$0xff]
      %v1489 = vld [vmem:[%s11 + $0x60] sm:$0xff]
      %v1490 = vld [vmem:[%s11 + $0x68] sm:$0xff]
      %v1491 = vld [vmem:[%s11 + $0x70] sm:$0xff]
      %v1492 = vld [vmem:[%s11 + $0x78] sm:$0xff]
      %v1493 = vpack.c.bf16 %v1478, %v1477
      %v1494 = vpack.c.bf16 %v1480, %v1479
      %v1495 = vpack.c.bf16 %v1482, %v1481
      %v1496 = vpack.c.bf16 %v1484, %v1483
      %v1497 = vpack.c.bf16 %v1486, %v1485
      %v1498 = vpack.c.bf16 %v1488, %v1487
      %v1499 = vpack.c.bf16 %v1490, %v1489
      %v1500 = vpack.c.bf16 %v1492, %v1491
      %v1501 = vld [vmem:[%s12] sm:$0x1]
      %v1503 = vlaneseq
      %v1504 = vshrl.u32 %v1503, 7
      %v1505 = vsub.s32 0, %v1504
      %v1506 = vrot.slane %v1501, %v1505
      %1508 = vmatprep.subr.bf16.mxu0 0
      %1509 = vmatpush1.bf16.msra.mxu0 %v1493
      %1510 = vmatprep.subr.bf16.mxu0 0
      %1511 = vmatpush1.bf16.msra.mxu0 %v1494
      %1512 = vmatprep.subr.bf16.mxu0 0
      %1513 = vmatpush1.bf16.msra.mxu0 %v1495
      %1514 = vmatprep.subr.bf16.mxu0 0
      %1515 = vmatpush1.bf16.msra.mxu0 %v1496
      %1516 = vmatprep.subr.bf16.mxu0 0
      %1517 = vmatpush1.bf16.msra.mxu0 %v1497
      %1518 = vmatprep.subr.bf16.mxu0 0
      %1519 = vmatpush1.bf16.msra.mxu0 %v1498
      %1520 = vmatprep.subr.bf16.mxu0 0
      %1521 = vmatpush1.bf16.msra.mxu0 %v1499
      %1522 = vmatprep.subr.bf16.mxu0 0
      %1523 = vmatpush1.bf16.msra.mxu0 %v1500
      %1524 = vmatprep.subr.bf16.mxu0 0
      %1525 = vmatpush1.bf16.msra.mxu0 0
      %1526 = vmatprep.subr.bf16.mxu0 0
      %1527 = vmatpush1.bf16.msra.mxu0 0
      %1528 = vmatprep.subr.bf16.mxu0 0
      %1529 = vmatpush1.bf16.msra.mxu0 0
      %1530 = vmatprep.subr.bf16.mxu0 0
      %1531 = vmatpush1.bf16.msra.mxu0 0
      %1532 = vmatprep.subr.bf16.mxu0 0
      %1533 = vmatpush1.bf16.msra.mxu0 0
      %1534 = vmatprep.subr.bf16.mxu0 0
      %1535 = vmatpush1.bf16.msra.mxu0 0
      %1536 = vmatprep.subr.bf16.mxu0 0
      %1537 = vmatpush1.bf16.msra.mxu0 0
      %1538 = vmatprep.subr.bf16.mxu0 0
      %1539 = vmatpush1.bf16.msra.mxu0 0
      %1540 = vmatprep.mubr.bf16.mxu0 0
      %1541 = vmatmul.mubr.bf16.gmra.mrb[0].mxu0 %v1476
      %v1542 = vpop.f32.mrb[0].mxu0
      %v1543 = vadd.f32 %v1506, %v1542
      %v1544 = vpop.f32.mrb[0].mxu0
      %v1545 = vpop.f32.mrb[0].mxu0
      %v1546 = vadd.f32 %v1506, %v1545
      %v1547 = vpop.f32.mrb[0].mxu0
      %1548 = vdwg.mxu0
      %v1549 = vadd.f32 %v1414, %v1543
      %v1550 = vadd.f32 %v1415, %v1546
      %v1551 = vsel %vm716, %v1549, 0.0
      %1552 = vadd.xlane.f32.xlu0 %v1551
      %v1553 = vpop.xlane.xlu0 %1552
      %v1554 = vsel %vm1373, %v1550, 0.0
      %1555 = vadd.xlane.f32.xlu0 %v1554
      %v1556 = vpop.xlane.xlu0 %1555
      %v1557 = vmul.f32 %v1553, %v1377
      %v1558 = vmul.f32 %v1556, %v1377
      %v1559 = vsub.f32 %v1549, %v1557
      %v1560 = vsub.f32 %v1550, %v1558
      %v1561 = vmul.f32 %v1559, %v1559
      %v1562 = vmul.f32 %v1560, %v1560
      %v1563 = vsel %vm716, %v1561, 0.0
      %1564 = vadd.xlane.f32.xlu0 %v1563
      %v1565 = vpop.xlane.xlu0 %1564
      %v1566 = vsel %vm1373, %v1562, 0.0
      %1567 = vadd.xlane.f32.xlu0 %v1566
      %v1568 = vpop.xlane.xlu0 %1567
      %v1569 = vmul.f32 %v1565, %v1377
      %v1570 = vmul.f32 %v1568, %v1377
      %v1571 = vadd.f32 %v1569, 1e-05
      %v1572 = vadd.f32 %v1570, 1e-05
      %v1573 = vrsqrt.pop %v1571
      %v1574 = vrsqrt.pop %v1572
      %v1575 = vmul.f32 %v1559, %v1573
      %v1576 = vmul.f32 %v1560, %v1574
      %v1577 = vld [vmem:[%s13] sm:$0x1]
      %v1579 = vlaneseq
      %v1580 = vshrl.u32 %v1579, 7
      %v1581 = vsub.s32 0, %v1580
      %v1582 = vrot.slane %v1577, %v1581
      %v1584 = vmul.f32 %v1575, %v1582
      %v1585 = vmul.f32 %v1576, %v1582
      %v1586 = vld [vmem:[%s14] sm:$0x1]
      %v1588 = vlaneseq
      %v1589 = vshrl.u32 %v1588, 7
      %v1590 = vsub.s32 0, %v1589
      %v1591 = vrot.slane %v1586, %v1590
      %v1593 = vadd.f32 %v1584, %v1591
      %v1594 = vadd.f32 %v1585, %v1591
      %v1595 = vsel %vm716, %v1593, 0.0
      %1596 = vadd.xlane.f32.xlu0 %v1595
      %v1597 = vpop.xlane.xlu0 %1596
      %v1598 = vsel %vm1373, %v1594, 0.0
      %1599 = vadd.xlane.f32.xlu0 %v1598
      %v1600 = vpop.xlane.xlu0 %1599
      %v1601 = vmul.f32 %v1597, %v1377
      %v1602 = vmul.f32 %v1600, %v1377
      %v1603 = vsub.f32 %v1593, %v1601
      %v1604 = vsub.f32 %v1594, %v1602
      %v1605 = vmul.f32 %v1603, %v1603
      %v1606 = vmul.f32 %v1604, %v1604
      %v1607 = vsel %vm716, %v1605, 0.0
      %1608 = vadd.xlane.f32.xlu0 %v1607
      %v1609 = vpop.xlane.xlu0 %1608
      %v1610 = vsel %vm1373, %v1606, 0.0
      %1611 = vadd.xlane.f32.xlu0 %v1610
      %v1612 = vpop.xlane.xlu0 %1611
      %v1613 = vmul.f32 %v1609, %v1377
      %v1614 = vmul.f32 %v1612, %v1377
      %v1615 = vadd.f32 %v1613, 1e-05
      %v1616 = vadd.f32 %v1614, 1e-05
      %v1617 = vrsqrt.pop %v1615
      %v1618 = vrsqrt.pop %v1616
      %v1619 = vmul.f32 %v1603, %v1617
      %v1620 = vmul.f32 %v1604, %v1618
      %v1621 = vld [vmem:[%s15] sm:$0x1]
      %v1623 = vlaneseq
      %v1624 = vshrl.u32 %v1623, 7
      %v1625 = vsub.s32 0, %v1624
      %v1626 = vrot.slane %v1621, %v1625
      %v1628 = vmul.f32 %v1619, %v1626
      %v1629 = vmul.f32 %v1620, %v1626
      %v1630 = vld [vmem:[%s16] sm:$0x1]
      %v1632 = vlaneseq
      %v1633 = vshrl.u32 %v1632, 7
      %v1634 = vsub.s32 0, %v1633
      %v1635 = vrot.slane %v1630, %v1634
      %v1637 = vadd.f32 %v1628, %v1635
      %v1638 = vadd.f32 %v1629, %v1635
      %v1639 = vpack.c.bf16 %v1638, %v1637
      %v1640 = vld [vmem:[%s17] sm:$0xff]
      %v1641 = vld [vmem:[%s17 + $0x8] sm:$0xff]
      %v1642 = vld [vmem:[%s17 + $0x10] sm:$0xff]
      %v1643 = vld [vmem:[%s17 + $0x18] sm:$0xff]
      %v1644 = vpack.c.bf16 %v1641, %v1640
      %v1645 = vpack.c.bf16 %v1643, %v1642
      %v1646 = vld [vmem:[%s18] sm:$0x1]
      %v1648 = vlaneseq
      %v1649 = vshrl.u32 %v1648, 7
      %v1650 = vsub.s32 0, %v1649
      %v1651 = vrot.slane %v1646, %v1650
      %v1654 = vsel %vm716, %v1639, 0
      %1656 = vmatprep.subr.bf16.mxu0 0
      %1657 = vmatpush1.bf16.msra.mxu0 %v1644
      %1658 = vmatprep.subr.bf16.mxu0 0
      %1659 = vmatpush1.bf16.msra.mxu0 %v1645
      %1660 = vmatprep.subr.bf16.mxu0 0
      %1661 = vmatpush1.bf16.msra.mxu0 0
      %1662 = vmatprep.subr.bf16.mxu0 0
      %1663 = vmatpush1.bf16.msra.mxu0 0
      %1664 = vmatprep.subr.bf16.mxu0 0
      %1665 = vmatpush1.bf16.msra.mxu0 0
      %1666 = vmatprep.subr.bf16.mxu0 0
      %1667 = vmatpush1.bf16.msra.mxu0 0
      %1668 = vmatprep.subr.bf16.mxu0 0
      %1669 = vmatpush1.bf16.msra.mxu0 0
      %1670 = vmatprep.subr.bf16.mxu0 0
      %1671 = vmatpush1.bf16.msra.mxu0 0
      %1672 = vmatprep.subr.bf16.mxu0 0
      %1673 = vmatpush1.bf16.msra.mxu0 0
      %1674 = vmatprep.subr.bf16.mxu0 0
      %1675 = vmatpush1.bf16.msra.mxu0 0
      %1676 = vmatprep.subr.bf16.mxu0 0
      %1677 = vmatpush1.bf16.msra.mxu0 0
      %1678 = vmatprep.subr.bf16.mxu0 0
      %1679 = vmatpush1.bf16.msra.mxu0 0
      %1680 = vmatprep.subr.bf16.mxu0 0
      %1681 = vmatpush1.bf16.msra.mxu0 0
      %1682 = vmatprep.subr.bf16.mxu0 0
      %1683 = vmatpush1.bf16.msra.mxu0 0
      %1684 = vmatprep.subr.bf16.mxu0 0
      %1685 = vmatpush1.bf16.msra.mxu0 0
      %1686 = vmatprep.subr.bf16.mxu0 0
      %1687 = vmatpush1.bf16.msra.mxu0 0
      %1688 = vmatprep.mubr.bf16.mxu0 0
      %1689 = vmatmul.mubr.bf16.gmra.mrb[0].mxu0 %v1654
      %v1690 = vpop.f32.mrb[0].mxu0
      %v1691 = vadd.f32 %v1651, %v1690
      %v1692 = vpop.f32.mrb[0].mxu0
      %v1693 = vpop.f32.mrb[0].mxu0
      %v1694 = vadd.f32 %v1651, %v1693
      %v1695 = vpop.f32.mrb[0].mxu0
      %1696 = vdwg.mxu0
      %1697 = vst.msk [vmem:[%s637] sm:$0xff] %vm657, %v1691
      %vm1698 = vcmask 122880
      %1699 = vst.msk [vmem:[%s637 + $0x8] sm:$0x1] %vm1698, %v1694
      %p1700 = scmp.lt.s32.totalorder %s32, 1
      %s1701 = scalar_select %p1700, %s32, 1
      %s1702 = smul.addr %s1701, 2
      %s1703 = smul.addr %s1702, 8
      %s1704 = scalar_lea.vmem %s19, %s1703
      %p1705 = scmp.lt.s32.totalorder %s32, 1
      %s1706 = scalar_select %p1705, %s32, 1
      %s1707 = smul.addr %s1706, 8
      %s1708 = smul.addr %s1707, 8
      %s1709 = scalar_lea.vmem %s20, %s1708
      // Predicated region
      $region97: #{gtformer_block.2} parent=95 // pred_check
        %p1710 = pneg %p454
      $region98: #{gtformer_block.2} parent=95 // pred_check_branch
        %1712 = sbr.rel (%p1710) target = $region100
      $region99: #{gtformer_block.2} parent=95 // pred_region
        _
      $region100: #{gtformer_block.2} parent=95 // pred_fallthru
        _
      // Predicated region
      $region101: #{gtformer_block.2} parent=95 // pred_check
        %p1713 = pneg %p480
      $region102: #{gtformer_block.2} parent=95 // pred_check_branch
        %1715 = sbr.rel (%p1713) target = $region104
      $region103: #{gtformer_block.2} parent=95 // pred_region
        _
      $region104: #{gtformer_block.2} parent=95 // pred_fallthru
        _
    $region96: #{gtformer_block.2} parent=5 // pred_fallthru
      _
    %p1716 = scmp.le.s32.totalorder 2, %s27
    // Predicated region
    $region105: #{gtformer_block.2} parent=5 // pred_check
      %p1717 = pneg %p1716
    $region106: #{gtformer_block.2} parent=5 // pred_check_branch
      %1719 = sbr.rel (%p1717) target = $region108
    $region107: #{gtformer_block.2} parent=5 // pred_region
      %s1720 = ssub.s32 %s27, 2
      // Predicated region
      $region109: #{gtformer_block.2} parent=107 // pred_check
        %p1721 = pneg %p460
      $region110: #{gtformer_block.2} parent=107 // pred_check_branch
        %1723 = sbr.rel (%p1721) target = $region112
      $region111: #{gtformer_block.2} parent=107 // pred_region
        %p1724 = scmp.lt.s32.totalorder %s33, 1
        %s1725 = scalar_select %p1724, %s33, 1
        %s1726 = smul.addr %s1725, 2
        %s1727 = smul.addr %s1726, 8
        %s1728 = scalar_lea.vmem %s19, %s1727
      $region112: #{gtformer_block.2} parent=107 // pred_fallthru
        _
      // Predicated region
      $region113: #{gtformer_block.2} parent=107 // pred_check
        %p1729 = pneg %p486
      $region114: #{gtformer_block.2} parent=107 // pred_check_branch
        %1731 = sbr.rel (%p1729) target = $region116
      $region115: #{gtformer_block.2} parent=107 // pred_region
        %p1732 = scmp.lt.s32.totalorder %s33, 1
        %s1733 = scalar_select %p1732, %s33, 1
        %s1734 = smul.addr %s1733, 8
        %s1735 = smul.addr %s1734, 8
        %s1736 = scalar_lea.vmem %s20, %s1735
      $region116: #{gtformer_block.2} parent=107 // pred_fallthru
        _
    $region108: #{gtformer_block.2} parent=5 // pred_fallthru
      _
  $region6: #{gtformer_block.2} parent=0 // loop_footer
    %s31 = sadd.s32 1, %s27
  $region7: #{gtformer_block.2} parent=0 // loop_footer_branch
    %26 = sbr.rel target = $region3
  $region8: #{gtformer_block.2} parent=0 // loop_exit
    _

// kernel: gtformer_block.3
$region0: #{gtformer_block.3}
  #allocation0 [shape = 'u32[]', space=smem, size = 0x4, offset = 0x4, fixed_abs, tag = 'smem constant byte address 0x4 - core index']
  #allocation1 [shape = 'u32[144,128]{1,0:T(1,128)}', space=vmem, size = 0x12000, scoped, tag = 'internal scratch']
  %s0 = inlined_call_operand.vmem [shape: f32[2,16,9], index: 0, kind: input, shape index: {}]
  %s1 = inlined_call_operand.vmem [shape: f32[9,32], index: 1, kind: input, shape index: {}]
  %s2 = inlined_call_operand.vmem [shape: f32[1,32], index: 2, kind: input, shape index: {}]
  %s3 = inlined_call_operand.vmem [shape: f32[32,96], index: 3, kind: input, shape index: {}]
  %s4 = inlined_call_operand.vmem [shape: f32[1,96], index: 4, kind: input, shape index: {}]
  %s5 = inlined_call_operand.vmem [shape: f32[32,32], index: 5, kind: input, shape index: {}]
  %s6 = inlined_call_operand.vmem [shape: f32[1,32], index: 6, kind: input, shape index: {}]
  %s7 = inlined_call_operand.vmem [shape: f32[1,32], index: 7, kind: input, shape index: {}]
  %s8 = inlined_call_operand.vmem [shape: f32[1,32], index: 8, kind: input, shape index: {}]
  %s9 = inlined_call_operand.vmem [shape: f32[32,128], index: 9, kind: input, shape index: {}]
  %s10 = inlined_call_operand.vmem [shape: f32[1,128], index: 10, kind: input, shape index: {}]
  %s11 = inlined_call_operand.vmem [shape: f32[128,32], index: 11, kind: input, shape index: {}]
  %s12 = inlined_call_operand.vmem [shape: f32[1,32], index: 12, kind: input, shape index: {}]
  %s13 = inlined_call_operand.vmem [shape: f32[1,32], index: 13, kind: input, shape index: {}]
  %s14 = inlined_call_operand.vmem [shape: f32[1,32], index: 14, kind: input, shape index: {}]
  %s15 = inlined_call_operand.vmem [shape: f32[1,32], index: 15, kind: input, shape index: {}]
  %s16 = inlined_call_operand.vmem [shape: f32[1,32], index: 16, kind: input, shape index: {}]
  %s17 = inlined_call_operand.vmem [shape: f32[32,9], index: 17, kind: input, shape index: {}]
  %s18 = inlined_call_operand.vmem [shape: f32[1,9], index: 18, kind: input, shape index: {}]
  %s19 = inlined_call_operand.vmem [shape: f32[2,16,9], index: 19, kind: output, shape index: {0}]
  %s20 = inlined_call_operand.hbm [shape: f32[2,4,16,16], index: 20, kind: output, shape index: {1}]
  %21 = xla_tuple %s19, %s20
  %s22 = sld [smem:[#allocation0]]
  $region117: #{gtformer_block.3} parent=0
    _
  %s24 = ssub.s32 1, %s22
  %s25 = scalar_select 0, %s24, %s22
  $region1: #{gtformer_block.3} parent=0
    #allocation2 [shape = 'u8[65536]{0}', space=vmem, size = 0x10000, scoped, tag = 'output window, operand 1']
    #allocation3 [shape = 's32[2]{0}', space=sflag, size = 0x8, scoped, tag = 'scoped memory for gtformer_block.3']
    %26 = vsyncpa [#allocation3], 0
    %s27 = scalar_lea.sflag [#allocation3], 1
    %28 = vsyncpa %s27, 0
    loop: start=0, step=1, limit=4
    $region2: #{gtformer_block.3} parent=1 // loop_pre_header
      _
    $region3: #{gtformer_block.3} parent=1 // loop_header
      %s30 = sphi 0, %s34
      %p31 = scmp.ge.s32.totalorder %s30, 4
      %s40 = sphi 0, %s42
      %s43 = sphi 0, %s40
      %s44 = sphi 0, %s43
      %s60 = sphi 0, %s44
      %s64 = sphi 0, %s64
      %s66 = sphi 0, %s64
      %s67 = sphi 0, %s66
      %s81 = sphi 0, %s67
      %s85 = sphi 0, %s85
      %s87 = sphi 0, %s85
      %s88 = sphi 0, %s87
      %s102 = sphi 0, %s88
      %s106 = sphi 0, %s106
      %s108 = sphi 0, %s106
      %s109 = sphi 0, %s108
      %s123 = sphi 0, %s109
      %s127 = sphi 0, %s127
      %s129 = sphi 0, %s127
      %s130 = sphi 0, %s129
      %s144 = sphi 0, %s130
      %s148 = sphi 0, %s148
      %s150 = sphi 0, %s148
      %s151 = sphi 0, %s150
      %s165 = sphi 0, %s151
      %s169 = sphi 0, %s169
      %s171 = sphi 0, %s169
      %s172 = sphi 0, %s171
      %s186 = sphi 0, %s172
      %s190 = sphi 0, %s190
      %s192 = sphi 0, %s190
      %s193 = sphi 0, %s192
      %s207 = sphi 0, %s193
      %s211 = sphi 0, %s211
      %s213 = sphi 0, %s211
      %s214 = sphi 0, %s213
      %s228 = sphi 0, %s214
      %s232 = sphi 0, %s232
      %s234 = sphi 0, %s232
      %s235 = sphi 0, %s234
      %s249 = sphi 0, %s235
      %s253 = sphi 0, %s253
      %s255 = sphi 0, %s253
      %s256 = sphi 0, %s255
      %s270 = sphi 0, %s256
      %s274 = sphi 0, %s274
      %s276 = sphi 0, %s274
      %s277 = sphi 0, %s276
      %s291 = sphi 0, %s277
      %s295 = sphi 0, %s295
      %s297 = sphi 0, %s295
      %s298 = sphi 0, %s297
      %s312 = sphi 0, %s298
      %s316 = sphi 0, %s316
      %s318 = sphi 0, %s316
      %s319 = sphi 0, %s318
      %s333 = sphi 0, %s319
      %s337 = sphi 0, %s337
      %s339 = sphi 0, %s337
      %s340 = sphi 0, %s339
      %s354 = sphi 0, %s340
      %s358 = sphi 0, %s358
      %s360 = sphi 0, %s358
      %s361 = sphi 0, %s360
      %s375 = sphi 0, %s361
      %s379 = sphi 0, %s379
      %s381 = sphi 0, %s379
      %s382 = sphi 0, %s381
      %s396 = sphi 0, %s382
      %s400 = sphi 0, %s400
      %s402 = sphi 0, %s400
      %s403 = sphi 0, %s402
      %s417 = sphi 0, %s403
      %s421 = sphi 0, %s421
      %s423 = sphi 0, %s421
      %s424 = sphi 0, %s423
      %s438 = sphi 0, %s424
      %s444 = sphi 0, %s446
      %s447 = sphi 0, %s444
      %s448 = sphi 0, %s447
      %s464 = sphi 0, %s448
      %s470 = sphi 0, %s472
      %s473 = sphi 0, %s470
      %s474 = sphi 0, %s473
      %s490 = sphi 0, %s474
    $region4: #{gtformer_block.3} parent=1 // loop_header_branch
      %33 = sbr.rel (%p31) target = $region8
    $region5: #{gtformer_block.3} parent=1 // loop_body
      %s35 = ssub.s32 %s30, 1
      %s36 = ssub.s32 %s30, 2
      %s37 = sadd.s32 %s30, 1
      %s38 = ssub.s32 %s30, %s37
      %p39 = scmp.eq.s32.totalorder %s38, 0
      %s41 = sadd.s32 %s40, 1
      %s42 = scalar_select %p39, %s40, %s41
      %p45 = pneg %p39
      %p46 = scmp.eq.s32.totalorder %s30, 1
      %p47 = por %p45, %p46
      %p48 = scmp.ne.s32.totalorder %s40, %s43
      %p49 = scmp.eq.s32.totalorder %s30, 0
      %p50 = por %p48, %p49
      %p51 = scmp.ne.s32.totalorder %s40, %s43
      %p52 = scmp.eq.s32.totalorder %s35, 1
      %p53 = por %p51, %p52
      %p54 = scmp.ne.s32.totalorder %s43, %s44
      %p55 = scmp.eq.s32.totalorder %s35, 0
      %p56 = por %p54, %p55
      %p57 = scmp.ne.s32.totalorder %s43, %s44
      %p58 = scmp.eq.s32.totalorder %s36, 1
      %p59 = por %p57, %p58
      %p61 = scmp.ne.s32.totalorder %s44, %s60
      %p62 = scmp.eq.s32.totalorder %s36, 0
      %p63 = por %p61, %p62
      %s65 = sadd.s32 %s64, 1
      %p68 = scmp.eq.s32.totalorder %s30, 1
      %p69 = scmp.ne.s32.totalorder %s64, %s66
      %p70 = scmp.eq.s32.totalorder %s30, 0
      %p71 = por %p69, %p70
      %p72 = scmp.ne.s32.totalorder %s64, %s66
      %p73 = scmp.eq.s32.totalorder %s35, 1
      %p74 = por %p72, %p73
      %p75 = scmp.ne.s32.totalorder %s66, %s67
      %p76 = scmp.eq.s32.totalorder %s35, 0
      %p77 = por %p75, %p76
      %p78 = scmp.ne.s32.totalorder %s66, %s67
      %p79 = scmp.eq.s32.totalorder %s36, 1
      %p80 = por %p78, %p79
      %p82 = scmp.ne.s32.totalorder %s67, %s81
      %p83 = scmp.eq.s32.totalorder %s36, 0
      %p84 = por %p82, %p83
      %s86 = sadd.s32 %s85, 1
      %p89 = scmp.eq.s32.totalorder %s30, 1
      %p90 = scmp.ne.s32.totalorder %s85, %s87
      %p91 = scmp.eq.s32.totalorder %s30, 0
      %p92 = por %p90, %p91
      %p93 = scmp.ne.s32.totalorder %s85, %s87
      %p94 = scmp.eq.s32.totalorder %s35, 1
      %p95 = por %p93, %p94
      %p96 = scmp.ne.s32.totalorder %s87, %s88
      %p97 = scmp.eq.s32.totalorder %s35, 0
      %p98 = por %p96, %p97
      %p99 = scmp.ne.s32.totalorder %s87, %s88
      %p100 = scmp.eq.s32.totalorder %s36, 1
      %p101 = por %p99, %p100
      %p103 = scmp.ne.s32.totalorder %s88, %s102
      %p104 = scmp.eq.s32.totalorder %s36, 0
      %p105 = por %p103, %p104
      %s107 = sadd.s32 %s106, 1
      %p110 = scmp.eq.s32.totalorder %s30, 1
      %p111 = scmp.ne.s32.totalorder %s106, %s108
      %p112 = scmp.eq.s32.totalorder %s30, 0
      %p113 = por %p111, %p112
      %p114 = scmp.ne.s32.totalorder %s106, %s108
      %p115 = scmp.eq.s32.totalorder %s35, 1
      %p116 = por %p114, %p115
      %p117 = scmp.ne.s32.totalorder %s108, %s109
      %p118 = scmp.eq.s32.totalorder %s35, 0
      %p119 = por %p117, %p118
      %p120 = scmp.ne.s32.totalorder %s108, %s109
      %p121 = scmp.eq.s32.totalorder %s36, 1
      %p122 = por %p120, %p121
      %p124 = scmp.ne.s32.totalorder %s109, %s123
      %p125 = scmp.eq.s32.totalorder %s36, 0
      %p126 = por %p124, %p125
      %s128 = sadd.s32 %s127, 1
      %p131 = scmp.eq.s32.totalorder %s30, 1
      %p132 = scmp.ne.s32.totalorder %s127, %s129
      %p133 = scmp.eq.s32.totalorder %s30, 0
      %p134 = por %p132, %p133
      %p135 = scmp.ne.s32.totalorder %s127, %s129
      %p136 = scmp.eq.s32.totalorder %s35, 1
      %p137 = por %p135, %p136
      %p138 = scmp.ne.s32.totalorder %s129, %s130
      %p139 = scmp.eq.s32.totalorder %s35, 0
      %p140 = por %p138, %p139
      %p141 = scmp.ne.s32.totalorder %s129, %s130
      %p142 = scmp.eq.s32.totalorder %s36, 1
      %p143 = por %p141, %p142
      %p145 = scmp.ne.s32.totalorder %s130, %s144
      %p146 = scmp.eq.s32.totalorder %s36, 0
      %p147 = por %p145, %p146
      %s149 = sadd.s32 %s148, 1
      %p152 = scmp.eq.s32.totalorder %s30, 1
      %p153 = scmp.ne.s32.totalorder %s148, %s150
      %p154 = scmp.eq.s32.totalorder %s30, 0
      %p155 = por %p153, %p154
      %p156 = scmp.ne.s32.totalorder %s148, %s150
      %p157 = scmp.eq.s32.totalorder %s35, 1
      %p158 = por %p156, %p157
      %p159 = scmp.ne.s32.totalorder %s150, %s151
      %p160 = scmp.eq.s32.totalorder %s35, 0
      %p161 = por %p159, %p160
      %p162 = scmp.ne.s32.totalorder %s150, %s151
      %p163 = scmp.eq.s32.totalorder %s36, 1
      %p164 = por %p162, %p163
      %p166 = scmp.ne.s32.totalorder %s151, %s165
      %p167 = scmp.eq.s32.totalorder %s36, 0
      %p168 = por %p166, %p167
      %s170 = sadd.s32 %s169, 1
      %p173 = scmp.eq.s32.totalorder %s30, 1
      %p174 = scmp.ne.s32.totalorder %s169, %s171
      %p175 = scmp.eq.s32.totalorder %s30, 0
      %p176 = por %p174, %p175
      %p177 = scmp.ne.s32.totalorder %s169, %s171
      %p178 = scmp.eq.s32.totalorder %s35, 1
      %p179 = por %p177, %p178
      %p180 = scmp.ne.s32.totalorder %s171, %s172
      %p181 = scmp.eq.s32.totalorder %s35, 0
      %p182 = por %p180, %p181
      %p183 = scmp.ne.s32.totalorder %s171, %s172
      %p184 = scmp.eq.s32.totalorder %s36, 1
      %p185 = por %p183, %p184
      %p187 = scmp.ne.s32.totalorder %s172, %s186
      %p188 = scmp.eq.s32.totalorder %s36, 0
      %p189 = por %p187, %p188
      %s191 = sadd.s32 %s190, 1
      %p194 = scmp.eq.s32.totalorder %s30, 1
      %p195 = scmp.ne.s32.totalorder %s190, %s192
      %p196 = scmp.eq.s32.totalorder %s30, 0
      %p197 = por %p195, %p196
      %p198 = scmp.ne.s32.totalorder %s190, %s192
      %p199 = scmp.eq.s32.totalorder %s35, 1
      %p200 = por %p198, %p199
      %p201 = scmp.ne.s32.totalorder %s192, %s193
      %p202 = scmp.eq.s32.totalorder %s35, 0
      %p203 = por %p201, %p202
      %p204 = scmp.ne.s32.totalorder %s192, %s193
      %p205 = scmp.eq.s32.totalorder %s36, 1
      %p206 = por %p204, %p205
      %p208 = scmp.ne.s32.totalorder %s193, %s207
      %p209 = scmp.eq.s32.totalorder %s36, 0
      %p210 = por %p208, %p209
      %s212 = sadd.s32 %s211, 1
      %p215 = scmp.eq.s32.totalorder %s30, 1
      %p216 = scmp.ne.s32.totalorder %s211, %s213
      %p217 = scmp.eq.s32.totalorder %s30, 0
      %p218 = por %p216, %p217
      %p219 = scmp.ne.s32.totalorder %s211, %s213
      %p220 = scmp.eq.s32.totalorder %s35, 1
      %p221 = por %p219, %p220
      %p222 = scmp.ne.s32.totalorder %s213, %s214
      %p223 = scmp.eq.s32.totalorder %s35, 0
      %p224 = por %p222, %p223
      %p225 = scmp.ne.s32.totalorder %s213, %s214
      %p226 = scmp.eq.s32.totalorder %s36, 1
      %p227 = por %p225, %p226
      %p229 = scmp.ne.s32.totalorder %s214, %s228
      %p230 = scmp.eq.s32.totalorder %s36, 0
      %p231 = por %p229, %p230
      %s233 = sadd.s32 %s232, 1
      %p236 = scmp.eq.s32.totalorder %s30, 1
      %p237 = scmp.ne.s32.totalorder %s232, %s234
      %p238 = scmp.eq.s32.totalorder %s30, 0
      %p239 = por %p237, %p238
      %p240 = scmp.ne.s32.totalorder %s232, %s234
      %p241 = scmp.eq.s32.totalorder %s35, 1
      %p242 = por %p240, %p241
      %p243 = scmp.ne.s32.totalorder %s234, %s235
      %p244 = scmp.eq.s32.totalorder %s35, 0
      %p245 = por %p243, %p244
      %p246 = scmp.ne.s32.totalorder %s234, %s235
      %p247 = scmp.eq.s32.totalorder %s36, 1
      %p248 = por %p246, %p247
      %p250 = scmp.ne.s32.totalorder %s235, %s249
      %p251 = scmp.eq.s32.totalorder %s36, 0
      %p252 = por %p250, %p251
      %s254 = sadd.s32 %s253, 1
      %p257 = scmp.eq.s32.totalorder %s30, 1
      %p258 = scmp.ne.s32.totalorder %s253, %s255
      %p259 = scmp.eq.s32.totalorder %s30, 0
      %p260 = por %p258, %p259
      %p261 = scmp.ne.s32.totalorder %s253, %s255
      %p262 = scmp.eq.s32.totalorder %s35, 1
      %p263 = por %p261, %p262
      %p264 = scmp.ne.s32.totalorder %s255, %s256
      %p265 = scmp.eq.s32.totalorder %s35, 0
      %p266 = por %p264, %p265
      %p267 = scmp.ne.s32.totalorder %s255, %s256
      %p268 = scmp.eq.s32.totalorder %s36, 1
      %p269 = por %p267, %p268
      %p271 = scmp.ne.s32.totalorder %s256, %s270
      %p272 = scmp.eq.s32.totalorder %s36, 0
      %p273 = por %p271, %p272
      %s275 = sadd.s32 %s274, 1
      %p278 = scmp.eq.s32.totalorder %s30, 1
      %p279 = scmp.ne.s32.totalorder %s274, %s276
      %p280 = scmp.eq.s32.totalorder %s30, 0
      %p281 = por %p279, %p280
      %p282 = scmp.ne.s32.totalorder %s274, %s276
      %p283 = scmp.eq.s32.totalorder %s35, 1
      %p284 = por %p282, %p283
      %p285 = scmp.ne.s32.totalorder %s276, %s277
      %p286 = scmp.eq.s32.totalorder %s35, 0
      %p287 = por %p285, %p286
      %p288 = scmp.ne.s32.totalorder %s276, %s277
      %p289 = scmp.eq.s32.totalorder %s36, 1
      %p290 = por %p288, %p289
      %p292 = scmp.ne.s32.totalorder %s277, %s291
      %p293 = scmp.eq.s32.totalorder %s36, 0
      %p294 = por %p292, %p293
      %s296 = sadd.s32 %s295, 1
      %p299 = scmp.eq.s32.totalorder %s30, 1
      %p300 = scmp.ne.s32.totalorder %s295, %s297
      %p301 = scmp.eq.s32.totalorder %s30, 0
      %p302 = por %p300, %p301
      %p303 = scmp.ne.s32.totalorder %s295, %s297
      %p304 = scmp.eq.s32.totalorder %s35, 1
      %p305 = por %p303, %p304
      %p306 = scmp.ne.s32.totalorder %s297, %s298
      %p307 = scmp.eq.s32.totalorder %s35, 0
      %p308 = por %p306, %p307
      %p309 = scmp.ne.s32.totalorder %s297, %s298
      %p310 = scmp.eq.s32.totalorder %s36, 1
      %p311 = por %p309, %p310
      %p313 = scmp.ne.s32.totalorder %s298, %s312
      %p314 = scmp.eq.s32.totalorder %s36, 0
      %p315 = por %p313, %p314
      %s317 = sadd.s32 %s316, 1
      %p320 = scmp.eq.s32.totalorder %s30, 1
      %p321 = scmp.ne.s32.totalorder %s316, %s318
      %p322 = scmp.eq.s32.totalorder %s30, 0
      %p323 = por %p321, %p322
      %p324 = scmp.ne.s32.totalorder %s316, %s318
      %p325 = scmp.eq.s32.totalorder %s35, 1
      %p326 = por %p324, %p325
      %p327 = scmp.ne.s32.totalorder %s318, %s319
      %p328 = scmp.eq.s32.totalorder %s35, 0
      %p329 = por %p327, %p328
      %p330 = scmp.ne.s32.totalorder %s318, %s319
      %p331 = scmp.eq.s32.totalorder %s36, 1
      %p332 = por %p330, %p331
      %p334 = scmp.ne.s32.totalorder %s319, %s333
      %p335 = scmp.eq.s32.totalorder %s36, 0
      %p336 = por %p334, %p335
      %s338 = sadd.s32 %s337, 1
      %p341 = scmp.eq.s32.totalorder %s30, 1
      %p342 = scmp.ne.s32.totalorder %s337, %s339
      %p343 = scmp.eq.s32.totalorder %s30, 0
      %p344 = por %p342, %p343
      %p345 = scmp.ne.s32.totalorder %s337, %s339
      %p346 = scmp.eq.s32.totalorder %s35, 1
      %p347 = por %p345, %p346
      %p348 = scmp.ne.s32.totalorder %s339, %s340
      %p349 = scmp.eq.s32.totalorder %s35, 0
      %p350 = por %p348, %p349
      %p351 = scmp.ne.s32.totalorder %s339, %s340
      %p352 = scmp.eq.s32.totalorder %s36, 1
      %p353 = por %p351, %p352
      %p355 = scmp.ne.s32.totalorder %s340, %s354
      %p356 = scmp.eq.s32.totalorder %s36, 0
      %p357 = por %p355, %p356
      %s359 = sadd.s32 %s358, 1
      %p362 = scmp.eq.s32.totalorder %s30, 1
      %p363 = scmp.ne.s32.totalorder %s358, %s360
      %p364 = scmp.eq.s32.totalorder %s30, 0
      %p365 = por %p363, %p364
      %p366 = scmp.ne.s32.totalorder %s358, %s360
      %p367 = scmp.eq.s32.totalorder %s35, 1
      %p368 = por %p366, %p367
      %p369 = scmp.ne.s32.totalorder %s360, %s361
      %p370 = scmp.eq.s32.totalorder %s35, 0
      %p371 = por %p369, %p370
      %p372 = scmp.ne.s32.totalorder %s360, %s361
      %p373 = scmp.eq.s32.totalorder %s36, 1
      %p374 = por %p372, %p373
      %p376 = scmp.ne.s32.totalorder %s361, %s375
      %p377 = scmp.eq.s32.totalorder %s36, 0
      %p378 = por %p376, %p377
      %s380 = sadd.s32 %s379, 1
      %p383 = scmp.eq.s32.totalorder %s30, 1
      %p384 = scmp.ne.s32.totalorder %s379, %s381
      %p385 = scmp.eq.s32.totalorder %s30, 0
      %p386 = por %p384, %p385
      %p387 = scmp.ne.s32.totalorder %s379, %s381
      %p388 = scmp.eq.s32.totalorder %s35, 1
      %p389 = por %p387, %p388
      %p390 = scmp.ne.s32.totalorder %s381, %s382
      %p391 = scmp.eq.s32.totalorder %s35, 0
      %p392 = por %p390, %p391
      %p393 = scmp.ne.s32.totalorder %s381, %s382
      %p394 = scmp.eq.s32.totalorder %s36, 1
      %p395 = por %p393, %p394
      %p397 = scmp.ne.s32.totalorder %s382, %s396
      %p398 = scmp.eq.s32.totalorder %s36, 0
      %p399 = por %p397, %p398
      %s401 = sadd.s32 %s400, 1
      %p404 = scmp.eq.s32.totalorder %s30, 1
      %p405 = scmp.ne.s32.totalorder %s400, %s402
      %p406 = scmp.eq.s32.totalorder %s30, 0
      %p407 = por %p405, %p406
      %p408 = scmp.ne.s32.totalorder %s400, %s402
      %p409 = scmp.eq.s32.totalorder %s35, 1
      %p410 = por %p408, %p409
      %p411 = scmp.ne.s32.totalorder %s402, %s403
      %p412 = scmp.eq.s32.totalorder %s35, 0
      %p413 = por %p411, %p412
      %p414 = scmp.ne.s32.totalorder %s402, %s403
      %p415 = scmp.eq.s32.totalorder %s36, 1
      %p416 = por %p414, %p415
      %p418 = scmp.ne.s32.totalorder %s403, %s417
      %p419 = scmp.eq.s32.totalorder %s36, 0
      %p420 = por %p418, %p419
      %s422 = sadd.s32 %s421, 1
      %p425 = scmp.eq.s32.totalorder %s30, 1
      %p426 = scmp.ne.s32.totalorder %s421, %s423
      %p427 = scmp.eq.s32.totalorder %s30, 0
      %p428 = por %p426, %p427
      %p429 = scmp.ne.s32.totalorder %s421, %s423
      %p430 = scmp.eq.s32.totalorder %s35, 1
      %p431 = por %p429, %p430
      %p432 = scmp.ne.s32.totalorder %s423, %s424
      %p433 = scmp.eq.s32.totalorder %s35, 0
      %p434 = por %p432, %p433
      %p435 = scmp.ne.s32.totalorder %s423, %s424
      %p436 = scmp.eq.s32.totalorder %s36, 1
      %p437 = por %p435, %p436
      %p439 = scmp.ne.s32.totalorder %s424, %s438
      %p440 = scmp.eq.s32.totalorder %s36, 0
      %p441 = por %p439, %p440
      %s442 = ssub.s32 %s30, %s37
      %p443 = scmp.eq.s32.totalorder %s442, 0
      %s445 = sadd.s32 %s444, 1
      %s446 = scalar_select %p443, %s444, %s445
      %p449 = pneg %p443
      %p450 = scmp.eq.s32.totalorder %s30, 1
      %p451 = por %p449, %p450
      %p452 = scmp.ne.s32.totalorder %s444, %s447
      %p453 = scmp.eq.s32.totalorder %s30, 0
      %p454 = por %p452, %p453
      %p455 = scmp.ne.s32.totalorder %s444, %s447
      %p456 = scmp.eq.s32.totalorder %s35, 1
      %p457 = por %p455, %p456
      %p458 = scmp.ne.s32.totalorder %s447, %s448
      %p459 = scmp.eq.s32.totalorder %s35, 0
      %p460 = por %p458, %p459
      %p461 = scmp.ne.s32.totalorder %s447, %s448
      %p462 = scmp.eq.s32.totalorder %s36, 1
      %p463 = por %p461, %p462
      %p465 = scmp.ne.s32.totalorder %s448, %s464
      %p466 = scmp.eq.s32.totalorder %s36, 0
      %p467 = por %p465, %p466
      %s468 = ssub.s32 %s30, %s37
      %p469 = scmp.eq.s32.totalorder %s468, 0
      %s471 = sadd.s32 %s470, 1
      %s472 = scalar_select %p469, %s470, %s471
      %p475 = pneg %p469
      %p476 = scmp.eq.s32.totalorder %s30, 1
      %p477 = por %p475, %p476
      %p478 = scmp.ne.s32.totalorder %s470, %s473
      %p479 = scmp.eq.s32.totalorder %s30, 0
      %p480 = por %p478, %p479
      %p481 = scmp.ne.s32.totalorder %s470, %s473
      %p482 = scmp.eq.s32.totalorder %s35, 1
      %p483 = por %p481, %p482
      %p484 = scmp.ne.s32.totalorder %s473, %s474
      %p485 = scmp.eq.s32.totalorder %s35, 0
      %p486 = por %p484, %p485
      %p487 = scmp.ne.s32.totalorder %s473, %s474
      %p488 = scmp.eq.s32.totalorder %s36, 1
      %p489 = por %p487, %p488
      %p491 = scmp.ne.s32.totalorder %s474, %s490
      %p492 = scmp.eq.s32.totalorder %s36, 0
      %p493 = por %p491, %p492
      %p494 = scmp.le.s32.totalorder 1, %s30
      %p495 = scmp.lt.s32.totalorder %s30, 3
      %p496 = pnand %p494, %p495
      %p497 = pneg %p496
      // Predicated region
      $region9: #{gtformer_block.3} parent=5 // pred_check
        _
      $region10: #{gtformer_block.3} parent=5 // pred_check_branch
        %499 = sbr.rel (%p496) target = $region12
      $region11: #{gtformer_block.3} parent=5 // pred_region
        %s500 = ssub.s32 %s30, 1
        // Predicated region
        $region13: #{gtformer_block.3} parent=11 // pred_check
          %p501 = pneg %p77
        $region14: #{gtformer_block.3} parent=11 // pred_check_branch
          %503 = sbr.rel (%p501) target = $region16
        $region15: #{gtformer_block.3} parent=11 // pred_region
          _
        $region16: #{gtformer_block.3} parent=11 // pred_fallthru
          _
        // Predicated region
        $region17: #{gtformer_block.3} parent=11 // pred_check
          %p504 = pneg %p98
        $region18: #{gtformer_block.3} parent=11 // pred_check_branch
          %506 = sbr.rel (%p504) target = $region20
        $region19: #{gtformer_block.3} parent=11 // pred_region
          _
        $region20: #{gtformer_block.3} parent=11 // pred_fallthru
          _
        // Predicated region
        $region21: #{gtformer_block.3} parent=11 // pred_check
          %p507 = pneg %p119
        $region22: #{gtformer_block.3} parent=11 // pred_check_branch
          %509 = sbr.rel (%p507) target = $region24
        $region23: #{gtformer_block.3} parent=11 // pred_region
          _
        $region24: #{gtformer_block.3} parent=11 // pred_fallthru
          _
        // Predicated region
        $region25: #{gtformer_block.3} parent=11 // pred_check
          %p510 = pneg %p140
        $region26: #{gtformer_block.3} parent=11 // pred_check_branch
          %512 = sbr.rel (%p510) target = $region28
        $region27: #{gtformer_block.3} parent=11 // pred_region
          _
        $region28: #{gtformer_block.3} parent=11 // pred_fallthru
          _
        // Predicated region
        $region29: #{gtformer_block.3} parent=11 // pred_check
          %p513 = pneg %p161
        $region30: #{gtformer_block.3} parent=11 // pred_check_branch
          %515 = sbr.rel (%p513) target = $region32
        $region31: #{gtformer_block.3} parent=11 // pred_region
          _
        $region32: #{gtformer_block.3} parent=11 // pred_fallthru
          _
        // Predicated region
        $region33: #{gtformer_block.3} parent=11 // pred_check
          %p516 = pneg %p182
        $region34: #{gtformer_block.3} parent=11 // pred_check_branch
          %518 = sbr.rel (%p516) target = $region36
        $region35: #{gtformer_block.3} parent=11 // pred_region
          _
        $region36: #{gtformer_block.3} parent=11 // pred_fallthru
          _
        // Predicated region
        $region37: #{gtformer_block.3} parent=11 // pred_check
          %p519 = pneg %p203
        $region38: #{gtformer_block.3} parent=11 // pred_check_branch
          %521 = sbr.rel (%p519) target = $region40
        $region39: #{gtformer_block.3} parent=11 // pred_region
          _
        $region40: #{gtformer_block.3} parent=11 // pred_fallthru
          _
        // Predicated region
        $region41: #{gtformer_block.3} parent=11 // pred_check
          %p522 = pneg %p224
        $region42: #{gtformer_block.3} parent=11 // pred_check_branch
          %524 = sbr.rel (%p522) target = $region44
        $region43: #{gtformer_block.3} parent=11 // pred_region
          _
        $region44: #{gtformer_block.3} parent=11 // pred_fallthru
          _
        // Predicated region
        $region45: #{gtformer_block.3} parent=11 // pred_check
          %p525 = pneg %p245
        $region46: #{gtformer_block.3} parent=11 // pred_check_branch
          %527 = sbr.rel (%p525) target = $region48
        $region47: #{gtformer_block.3} parent=11 // pred_region
          _
        $region48: #{gtformer_block.3} parent=11 // pred_fallthru
          _
        // Predicated region
        $region49: #{gtformer_block.3} parent=11 // pred_check
          %p528 = pneg %p266
        $region50: #{gtformer_block.3} parent=11 // pred_check_branch
          %530 = sbr.rel (%p528) target = $region52
        $region51: #{gtformer_block.3} parent=11 // pred_region
          _
        $region52: #{gtformer_block.3} parent=11 // pred_fallthru
          _
        // Predicated region
        $region53: #{gtformer_block.3} parent=11 // pred_check
          %p531 = pneg %p287
        $region54: #{gtformer_block.3} parent=11 // pred_check_branch
          %533 = sbr.rel (%p531) target = $region56
        $region55: #{gtformer_block.3} parent=11 // pred_region
          _
        $region56: #{gtformer_block.3} parent=11 // pred_fallthru
          _
        // Predicated region
        $region57: #{gtformer_block.3} parent=11 // pred_check
          %p534 = pneg %p308
        $region58: #{gtformer_block.3} parent=11 // pred_check_branch
          %536 = sbr.rel (%p534) target = $region60
        $region59: #{gtformer_block.3} parent=11 // pred_region
          _
        $region60: #{gtformer_block.3} parent=11 // pred_fallthru
          _
        // Predicated region
        $region61: #{gtformer_block.3} parent=11 // pred_check
          %p537 = pneg %p329
        $region62: #{gtformer_block.3} parent=11 // pred_check_branch
          %539 = sbr.rel (%p537) target = $region64
        $region63: #{gtformer_block.3} parent=11 // pred_region
          _
        $region64: #{gtformer_block.3} parent=11 // pred_fallthru
          _
        // Predicated region
        $region65: #{gtformer_block.3} parent=11 // pred_check
          %p540 = pneg %p350
        $region66: #{gtformer_block.3} parent=11 // pred_check_branch
          %542 = sbr.rel (%p540) target = $region68
        $region67: #{gtformer_block.3} parent=11 // pred_region
          _
        $region68: #{gtformer_block.3} parent=11 // pred_fallthru
          _
        // Predicated region
        $region69: #{gtformer_block.3} parent=11 // pred_check
          %p543 = pneg %p371
        $region70: #{gtformer_block.3} parent=11 // pred_check_branch
          %545 = sbr.rel (%p543) target = $region72
        $region71: #{gtformer_block.3} parent=11 // pred_region
          _
        $region72: #{gtformer_block.3} parent=11 // pred_fallthru
          _
        // Predicated region
        $region73: #{gtformer_block.3} parent=11 // pred_check
          %p546 = pneg %p392
        $region74: #{gtformer_block.3} parent=11 // pred_check_branch
          %548 = sbr.rel (%p546) target = $region76
        $region75: #{gtformer_block.3} parent=11 // pred_region
          _
        $region76: #{gtformer_block.3} parent=11 // pred_fallthru
          _
        // Predicated region
        $region77: #{gtformer_block.3} parent=11 // pred_check
          %p549 = pneg %p413
        $region78: #{gtformer_block.3} parent=11 // pred_check_branch
          %551 = sbr.rel (%p549) target = $region80
        $region79: #{gtformer_block.3} parent=11 // pred_region
          _
        $region80: #{gtformer_block.3} parent=11 // pred_fallthru
          _
        // Predicated region
        $region81: #{gtformer_block.3} parent=11 // pred_check
          %p552 = pneg %p434
        $region82: #{gtformer_block.3} parent=11 // pred_check_branch
          %554 = sbr.rel (%p552) target = $region84
        $region83: #{gtformer_block.3} parent=11 // pred_region
          _
        $region84: #{gtformer_block.3} parent=11 // pred_fallthru
          _
      $region12: #{gtformer_block.3} parent=5 // pred_fallthru
        _
      %p555 = scmp.lt.s32.totalorder %s30, 2
      // Predicated region
      $region85: #{gtformer_block.3} parent=5 // pred_check
        %p556 = pneg %p555
      $region86: #{gtformer_block.3} parent=5 // pred_check_branch
        %558 = sbr.rel (%p556) target = $region88
      $region87: #{gtformer_block.3} parent=5 // pred_region
        // Predicated region
        $region89: #{gtformer_block.3} parent=87 // pred_check
          %p559 = pneg %p50
        $region90: #{gtformer_block.3} parent=87 // pred_check_branch
          %561 = sbr.rel (%p559) target = $region92
        $region91: #{gtformer_block.3} parent=87 // pred_region
          %p562 = scmp.lt.s32.totalorder %s30, 1
          %s563 = scalar_select %p562, %s30, 1
          %s564 = smul.addr %s563, 2
          %s565 = smul.addr %s564, 8
          %s566 = scalar_lea.vmem %s0, %s565
        $region92: #{gtformer_block.3} parent=87 // pred_fallthru
          _
      $region88: #{gtformer_block.3} parent=5 // pred_fallthru
        _
      %p567 = scmp.le.s32.totalorder 1, %s30
      %p568 = scmp.lt.s32.totalorder %s30, 3
      %p569 = pnand %p567, %p568
      %p570 = pneg %p569
      // Predicated region
      $region93: #{gtformer_block.3} parent=5 // pred_check
        _
      $region94: #{gtformer_block.3} parent=5 // pred_check_branch
        %572 = sbr.rel (%p569) target = $region96
      $region95: #{gtformer_block.3} parent=5 // pred_region
        %s573 = ssub.s32 %s30, 1
        %p574 = scmp.lt.s32.totalorder %s35, 1
        %s575 = scalar_select %p574, %s35, 1
        %s576 = smul.addr %s575, 2
        %s577 = smul.addr %s576, 8
        %s578 = scalar_lea.vmem %s0, %s577
        %p579 = pneg %p56
        %p580 = pneg %p53
        %p581 = pneg %p77
        %p582 = pneg %p74
        %p583 = pneg %p98
        %p584 = pneg %p95
        %p585 = pneg %p119
        %p586 = pneg %p116
        %p587 = pneg %p140
        %p588 = pneg %p137
        %p589 = pneg %p161
        %p590 = pneg %p158
        %p591 = pneg %p182
        %p592 = pneg %p179
        %p593 = pneg %p203
        %p594 = pneg %p200
        %p595 = pneg %p224
        %p596 = pneg %p221
        %p597 = pneg %p245
        %p598 = pneg %p242
        %p599 = pneg %p266
        %p600 = pneg %p263
        %p601 = pneg %p287
        %p602 = pneg %p284
        %p603 = pneg %p308
        %p604 = pneg %p305
        %p605 = pneg %p329
        %p606 = pneg %p326
        %p607 = pneg %p350
        %p608 = pneg %p347
        %p609 = pneg %p371
        %p610 = pneg %p368
        %p611 = pneg %p392
        %p612 = pneg %p389
        %p613 = pneg %p413
        %p614 = pneg %p410
        %p615 = pneg %p434
        %p616 = pneg %p431
        %p617 = pneg %p460
        %p618 = pneg %p457
        %p619 = scmp.lt.s32.totalorder %s35, 1
        %s620 = scalar_select %p619, %s35, 1
        %s621 = smul.addr %s620, 2
        %s622 = smul.addr %s621, 8
        %s623 = scalar_lea.vmem %s19, %s622
        %p624 = pneg %p486
        %p625 = pneg %p483
        %s626 = sand.u32 %s473, 1
        %s627 = scalar_lea.sflag [#allocation3], %s626
        %s628 = sand.u32 %s473, 1
        %s629 = smul.addr %s628, 64
        %s630 = scalar_lea.vmem [#allocation2], %s629
        %p631 = scmp.lt.s32.totalorder %s35, 1
        %s632 = scalar_select %p631, %s35, 1
        %s633 = smul.addr %s632, 2
        %s634 = smul.addr %s633, 8
        %s635 = scalar_lea.vmem %s0, %s634
        %p636 = scmp.lt.s32.totalorder %s35, 1
        %s637 = scalar_select %p636, %s35, 1
        %s638 = smul.addr %s637, 2
        %s639 = smul.addr %s638, 8
        %s640 = scalar_lea.vmem %s19, %s639
        %v642 = vld [vmem:[%s635] sm:$0xff]
        %v643 = vld [vmem:[%s635 + $0x8] sm:$0xff]
        %v644 = vpack.c.bf16 %v643, %v642
        %v645 = vld [vmem:[%s1] sm:$0xff]
        %v646 = vld [vmem:[%s1 + $0x8] sm:$0x1]
        %v647 = vpack.c.bf16 %v646, %v645
        %v648 = vld [vmem:[%s2] sm:$0x1]
        %v650 = vlaneseq
        %v651 = vshrl.u32 %v650, 7
        %v652 = vsub.s32 0, %v651
        %v653 = vrot.slane %v648, %v652
        %vm655 = vcmask 72704
        %v657 = vsel %vm655, %v644, 0
        %vm659 = vcmask 1043456
        %vm660 = vcmask 1044480
        %v661 = vsel %vm659, 4294967295, 65535
        %v662 = vsel %vm660, %v661, 0
        %v664 = vand.u32 %v647, %v662
        %666 = vmatprep.subr.bf16.mxu0 0
        %667 = vmatpush1.bf16.msra.mxu0 %v664
        %668 = vmatprep.subr.bf16.mxu0 0
        %669 = vmatpush1.bf16.msra.mxu0 0
        %670 = vmatprep.subr.bf16.mxu0 0
        %671 = vmatpush1.bf16.msra.mxu0 0
        %672 = vmatprep.subr.bf16.mxu0 0
        %673 = vmatpush1.bf16.msra.mxu0 0
        %674 = vmatprep.subr.bf16.mxu0 0
        %675 = vmatpush1.bf16.msra.mxu0 0
        %676 = vmatprep.subr.bf16.mxu0 0
        %677 = vmatpush1.bf16.msra.mxu0 0
        %678 = vmatprep.subr.bf16.mxu0 0
        %679 = vmatpush1.bf16.msra.mxu0 0
        %680 = vmatprep.subr.bf16.mxu0 0
        %681 = vmatpush1.bf16.msra.mxu0 0
        %682 = vmatprep.subr.bf16.mxu0 0
        %683 = vmatpush1.bf16.msra.mxu0 0
        %684 = vmatprep.subr.bf16.mxu0 0
        %685 = vmatpush1.bf16.msra.mxu0 0
        %686 = vmatprep.subr.bf16.mxu0 0
        %687 = vmatpush1.bf16.msra.mxu0 0
        %688 = vmatprep.subr.bf16.mxu0 0
        %689 = vmatpush1.bf16.msra.mxu0 0
        %690 = vmatprep.subr.bf16.mxu0 0
        %691 = vmatpush1.bf16.msra.mxu0 0
        %692 = vmatprep.subr.bf16.mxu0 0
        %693 = vmatpush1.bf16.msra.mxu0 0
        %694 = vmatprep.subr.bf16.mxu0 0
        %695 = vmatpush1.bf16.msra.mxu0 0
        %696 = vmatprep.subr.bf16.mxu0 0
        %697 = vmatpush1.bf16.msra.mxu0 0
        %698 = vmatprep.mubr.bf16.mxu0 0
        %699 = vmatmul.mubr.bf16.gmra.mrb[0].mxu0 %v657
        %v700 = vpop.f32.mrb[0].mxu0
        %v701 = vadd.f32 %v653, %v700
        %v702 = vpop.f32.mrb[0].mxu0
        %v703 = vpop.f32.mrb[0].mxu0
        %v704 = vadd.f32 %v653, %v703
        %v705 = vpop.f32.mrb[0].mxu0
        %706 = vdwg.mxu0
        %v707 = vpack.c.bf16 %v704, %v701
        %v708 = vld [vmem:[%s3] sm:$0xff]
        %v709 = vld [vmem:[%s3 + $0x8] sm:$0xff]
        %v710 = vld [vmem:[%s3 + $0x10] sm:$0xff]
        %v711 = vld [vmem:[%s3 + $0x18] sm:$0xff]
        %v712 = vpack.c.bf16 %v709, %v708
        %v713 = vpack.c.bf16 %v711, %v710
        %v714 = vld [vmem:[%s4] sm:$0x1]
        %v716 = vlaneseq
        %v717 = vshrl.u32 %v716, 7
        %v718 = vsub.s32 0, %v717
        %v719 = vrot.slane %v714, %v718
        %vm721 = vcmask 261120
        %v723 = vsel %vm721, %v707, 0
        %725 = vmatprep.subr.bf16.mxu0 0
        %726 = vmatpush1.bf16.msra.mxu0 %v712
        %727 = vmatprep.subr.bf16.mxu0 0
        %728 = vmatpush1.bf16.msra.mxu0 %v713
        %729 = vmatprep.subr.bf16.mxu0 0
        %730 = vmatpush1.bf16.msra.mxu0 0
        %731 = vmatprep.subr.bf16.mxu0 0
        %732 = vmatpush1.bf16.msra.mxu0 0
        %733 = vmatprep.subr.bf16.mxu0 0
        %734 = vmatpush1.bf16.msra.mxu0 0
        %735 = vmatprep.subr.bf16.mxu0 0
        %736 = vmatpush1.bf16.msra.mxu0 0
        %737 = vmatprep.subr.bf16.mxu0 0
        %738 = vmatpush1.bf16.msra.mxu0 0
        %739 = vmatprep.subr.bf16.mxu0 0
        %740 = vmatpush1.bf16.msra.mxu0 0
        %741 = vmatprep.subr.bf16.mxu0 0
        %742 = vmatpush1.bf16.msra.mxu0 0
        %743 = vmatprep.subr.bf16.mxu0 0
        %744 = vmatpush1.bf16.msra.mxu0 0
        %745 = vmatprep.subr.bf16.mxu0 0
        %746 = vmatpush1.bf16.msra.mxu0 0
        %747 = vmatprep.subr.bf16.mxu0 0
        %748 = vmatpush1.bf16.msra.mxu0 0
        %749 = vmatprep.subr.bf16.mxu0 0
        %750 = vmatpush1.bf16.msra.mxu0 0
        %751 = vmatprep.subr.bf16.mxu0 0
        %752 = vmatpush1.bf16.msra.mxu0 0
        %753 = vmatprep.subr.bf16.mxu0 0
        %754 = vmatpush1.bf16.msra.mxu0 0
        %755 = vmatprep.subr.bf16.mxu0 0
        %756 = vmatpush1.bf16.msra.mxu0 0
        %757 = vmatprep.mubr.bf16.mxu0 0
        %758 = vmatmul.mubr.bf16.gmra.mrb[0].mxu0 %v723
        %v759 = vpop.f32.mrb[0].mxu0
        %v760 = vadd.f32 %v719, %v759
        %v761 = vpop.f32.mrb[0].mxu0
        %v762 = vpop.f32.mrb[0].mxu0
        %v763 = vadd.f32 %v719, %v762
        %v764 = vpop.f32.mrb[0].mxu0
        %765 = vdwg.mxu0
        %v766 = vpack.c.bf16 %v763, %v760
        %768 = vrot.lane.b32.xlu0 %v766, 96
        %v769 = vpop.permute.xlu0 %768
        %vm770 = vcmask 64512
        %v772 = vsel %vm770, %v766, 0
        %v775 = vsel %vm770, %v769, 0
        %777 = vmatprep.subr.bf16.mxu0 0
        %778 = vmatpush1.bf16.xpose.msra.mxu0 %v775
        %779 = vmatprep.subr.bf16.mxu0 0
        %780 = vmatpush1.bf16.xpose.msra.mxu0 0
        %781 = vmatprep.subr.bf16.mxu0 0
        %782 = vmatpush1.bf16.xpose.msra.mxu0 0
        %783 = vmatprep.subr.bf16.mxu0 0
        %784 = vmatpush1.bf16.xpose.msra.mxu0 0
        %785 = vmatprep.subr.bf16.mxu0 0
        %786 = vmatpush1.bf16.xpose.msra.mxu0 0
        %787 = vmatprep.subr.bf16.mxu0 0
        %788 = vmatpush1.bf16.xpose.msra.mxu0 0
        %789 = vmatprep.subr.bf16.mxu0 0
        %790 = vmatpush1.bf16.xpose.msra.mxu0 0
        %791 = vmatprep.subr.bf16.mxu0 0
        %792 = vmatpush1.bf16.xpose.msra.mxu0 0
        %793 = vmatprep.subr.bf16.mxu0 0
        %794 = vmatpush1.bf16.xpose.msra.mxu0 0
        %795 = vmatprep.subr.bf16.mxu0 0
        %796 = vmatpush1.bf16.xpose.msra.mxu0 0
        %797 = vmatprep.subr.bf16.mxu0 0
        %798 = vmatpush1.bf16.xpose.msra.mxu0 0
        %799 = vmatprep.subr.bf16.mxu0 0
        %800 = vmatpush1.bf16.xpose.msra.mxu0 0
        %801 = vmatprep.subr.bf16.mxu0 0
        %802 = vmatpush1.bf16.xpose.msra.mxu0 0
        %803 = vmatprep.subr.bf16.mxu0 0
        %804 = vmatpush1.bf16.xpose.msra.mxu0 0
        %805 = vmatprep.subr.bf16.mxu0 0
        %806 = vmatpush1.bf16.xpose.msra.mxu0 0
        %807 = vmatprep.subr.bf16.mxu0 0
        %808 = vmatpush1.bf16.xpose.msra.mxu0 0
        %809 = vmatprep.mubr.bf16.mxu0 0
        %810 = vmatmul.mubr.bf16.gmra.mrb[0].mxu0 %v772
        %v811 = vpop.f32.mrb[0].mxu0
        %v812 = vadd.f32 0.0, %v811
        %v813 = vpop.f32.mrb[0].mxu0
        %v814 = vpop.f32.mrb[0].mxu0
        %v815 = vadd.f32 0.0, %v814
        %v816 = vpop.f32.mrb[0].mxu0
        %817 = vdwg.mxu0
        %v818 = vmul.f32 %v812, 0.35355338
        %v819 = vmul.f32 %v815, 0.35355338
        %vm820 = vcmask 130048
        %v821 = vsel %vm820, %v818, -inf
        %822 = vmax.xlane.f32.xlu0 %v821
        %v823 = vpop.xlane.xlu0 %822
        %v824 = vsel %vm820, %v819, -inf
        %825 = vmax.xlane.f32.xlu0 %v824
        %v826 = vpop.xlane.xlu0 %825
        %v827 = vsub.f32 %v818, %v823
        %v828 = vsub.f32 %v819, %v826
        %v829 = vmul.f32 %v827, 1.442695
        %v830 = vpow.pop %v829
        %v831 = vmul.f32 %v828, 1.442695
        %v832 = vpow.pop %v831
        %v833 = vsel %vm820, %v830, 0.0
        %834 = vadd.xlane.f32.xlu0 %v833
        %v835 = vpop.xlane.xlu0 %834
        %v836 = vsel %vm820, %v832, 0.0
        %837 = vadd.xlane.f32.xlu0 %v836
        %v838 = vpop.xlane.xlu0 %837
        %v839 = vrcp.pop %v835
        %v840 = vrcp.pop %v838
        %v841 = vmul.f32 %v830, %v839
        %v842 = vmul.f32 %v832, %v840
        %843 = vst.msk [vmem:[%s630] sm:$0xff] %vm820, %v841
        %844 = vst.msk [vmem:[%s630 + $0x8] sm:$0xff] %vm820, %v842
        %v845 = vpack.c.bf16 %v842, %v841
        %846 = vrot.lane.b32.xlu0 %v766, 64
        %v847 = vpop.permute.xlu0 %846
        %v850 = vsel %vm820, %v845, 0
        %852 = vmatprep.subr.bf16.mxu0 0
        %853 = vmatpush1.bf16.msra.mxu0 %v847
        %854 = vmatprep.subr.bf16.mxu0 0
        %855 = vmatpush1.bf16.msra.mxu0 0
        %856 = vmatprep.subr.bf16.mxu0 0
        %857 = vmatpush1.bf16.msra.mxu0 0
        %858 = vmatprep.subr.bf16.mxu0 0
        %859 = vmatpush1.bf16.msra.mxu0 0
        %860 = vmatprep.subr.bf16.mxu0 0
        %861 = vmatpush1.bf16.msra.mxu0 0
        %862 = vmatprep.subr.bf16.mxu0 0
        %863 = vmatpush1.bf16.msra.mxu0 0
        %864 = vmatprep.subr.bf16.mxu0 0
        %865 = vmatpush1.bf16.msra.mxu0 0
        %866 = vmatprep.subr.bf16.mxu0 0
        %867 = vmatpush1.bf16.msra.mxu0 0
        %868 = vmatprep.subr.bf16.mxu0 0
        %869 = vmatpush1.bf16.msra.mxu0 0
        %870 = vmatprep.subr.bf16.mxu0 0
        %871 = vmatpush1.bf16.msra.mxu0 0
        %872 = vmatprep.subr.bf16.mxu0 0
        %873 = vmatpush1.bf16.msra.mxu0 0
        %874 = vmatprep.subr.bf16.mxu0 0
        %875 = vmatpush1.bf16.msra.mxu0 0
        %876 = vmatprep.subr.bf16.mxu0 0
        %877 = vmatpush1.bf16.msra.mxu0 0
        %878 = vmatprep.subr.bf16.mxu0 0
        %879 = vmatpush1.bf16.msra.mxu0 0
        %880 = vmatprep.subr.bf16.mxu0 0
        %881 = vmatpush1.bf16.msra.mxu0 0
        %882 = vmatprep.subr.bf16.mxu0 0
        %883 = vmatpush1.bf16.msra.mxu0 0
        %884 = vmatprep.mubr.bf16.mxu0 0
        %885 = vmatmul.mubr.bf16.gmra.mrb[0].mxu0 %v850
        %v886 = vpop.f32.mrb[0].mxu0
        %v887 = vadd.f32 0.0, %v886
        %v888 = vpop.f32.mrb[0].mxu0
        %v889 = vpop.f32.mrb[0].mxu0
        %v890 = vadd.f32 0.0, %v889
        %v891 = vpop.f32.mrb[0].mxu0
        %892 = vdwg.mxu0
        %893 = vrot.lane.b32.xlu0 %v766, 120
        %v894 = vpop.permute.xlu0 %893
        %895 = vrot.lane.b32.xlu0 %v766, 88
        %v896 = vpop.permute.xlu0 %895
        %v898 = vsel %vm770, %v894, 0
        %v901 = vsel %vm770, %v896, 0
        %903 = vmatprep.subr.bf16.mxu0 0
        %904 = vmatpush1.bf16.xpose.msra.mxu0 %v901
        %905 = vmatprep.subr.bf16.mxu0 0
        %906 = vmatpush1.bf16.xpose.msra.mxu0 0
        %907 = vmatprep.subr.bf16.mxu0 0
        %908 = vmatpush1.bf16.xpose.msra.mxu0 0
        %909 = vmatprep.subr.bf16.mxu0 0
        %910 = vmatpush1.bf16.xpose.msra.mxu0 0
        %911 = vmatprep.subr.bf16.mxu0 0
        %912 = vmatpush1.bf16.xpose.msra.mxu0 0
        %913 = vmatprep.subr.bf16.mxu0 0
        %914 = vmatpush1.bf16.xpose.msra.mxu0 0
        %915 = vmatprep.subr.bf16.mxu0 0
        %916 = vmatpush1.bf16.xpose.msra.mxu0 0
        %917 = vmatprep.subr.bf16.mxu0 0
        %918 = vmatpush1.bf16.xpose.msra.mxu0 0
        %919 = vmatprep.subr.bf16.mxu0 0
        %920 = vmatpush1.bf16.xpose.msra.mxu0 0
        %921 = vmatprep.subr.bf16.mxu0 0
        %922 = vmatpush1.bf16.xpose.msra.mxu0 0
        %923 = vmatprep.subr.bf16.mxu0 0
        %924 = vmatpush1.bf16.xpose.msra.mxu0 0
        %925 = vmatprep.subr.bf16.mxu0 0
        %926 = vmatpush1.bf16.xpose.msra.mxu0 0
        %927 = vmatprep.subr.bf16.mxu0 0
        %928 = vmatpush1.bf16.xpose.msra.mxu0 0
        %929 = vmatprep.subr.bf16.mxu0 0
        %930 = vmatpush1.bf16.xpose.msra.mxu0 0
        %931 = vmatprep.subr.bf16.mxu0 0
        %932 = vmatpush1.bf16.xpose.msra.mxu0 0
        %933 = vmatprep.subr.bf16.mxu0 0
        %934 = vmatpush1.bf16.xpose.msra.mxu0 0
        %935 = vmatprep.mubr.bf16.mxu0 0
        %936 = vmatmul.mubr.bf16.gmra.mrb[0].mxu0 %v898
        %v937 = vpop.f32.mrb[0].mxu0
        %v938 = vadd.f32 0.0, %v937
        %v939 = vpop.f32.mrb[0].mxu0
        %v940 = vpop.f32.mrb[0].mxu0
        %v941 = vadd.f32 0.0, %v940
        %v942 = vpop.f32.mrb[0].mxu0
        %943 = vdwg.mxu0
        %v944 = vmul.f32 %v938, 0.35355338
        %v945 = vmul.f32 %v941, 0.35355338
        %v946 = vsel %vm820, %v944, -inf
        %947 = vmax.xlane.f32.xlu0 %v946
        %v948 = vpop.xlane.xlu0 %947
        %v949 = vsel %vm820, %v945, -inf
        %950 = vmax.xlane.f32.xlu0 %v949
        %v951 = vpop.xlane.xlu0 %950
        %v952 = vsub.f32 %v944, %v948
        %v953 = vsub.f32 %v945, %v951
        %v954 = vmul.f32 %v952, 1.442695
        %v955 = vpow.pop %v954
        %v956 = vmul.f32 %v953, 1.442695
        %v957 = vpow.pop %v956
        %v958 = vsel %vm820, %v955, 0.0
        %959 = vadd.xlane.f32.xlu0 %v958
        %v960 = vpop.xlane.xlu0 %959
        %v961 = vsel %vm820, %v957, 0.0
        %962 = vadd.xlane.f32.xlu0 %v961
        %v963 = vpop.xlane.xlu0 %962
        %v964 = vrcp.pop %v960
        %v965 = vrcp.pop %v963
        %v966 = vmul.f32 %v955, %v964
        %v967 = vmul.f32 %v957, %v965
        %s968 = scalar_lea.vmem %s630, 16 [#allocation2]
        %969 = vst.msk [vmem:[%s968] sm:$0xff] %vm820, %v966
        %970 = vst.msk [vmem:[%s968 + $0x8] sm:$0xff] %vm820, %v967
        %v971 = vpack.c.bf16 %v967, %v966
        %972 = vrot.lane.b32.xlu0 %v766, 56
        %v973 = vpop.permute.xlu0 %972
        %v976 = vsel %vm820, %v971, 0
        %978 = vmatprep.subr.bf16.mxu0 0
        %979 = vmatpush1.bf16.msra.mxu0 %v973
        %980 = vmatprep.subr.bf16.mxu0 0
        %981 = vmatpush1.bf16.msra.mxu0 0
        %982 = vmatprep.subr.bf16.mxu0 0
        %983 = vmatpush1.bf16.msra.mxu0 0
        %984 = vmatprep.subr.bf16.mxu0 0
        %985 = vmatpush1.bf16.msra.mxu0 0
        %986 = vmatprep.subr.bf16.mxu0 0
        %987 = vmatpush1.bf16.msra.mxu0 0
        %988 = vmatprep.subr.bf16.mxu0 0
        %989 = vmatpush1.bf16.msra.mxu0 0
        %990 = vmatprep.subr.bf16.mxu0 0
        %991 = vmatpush1.bf16.msra.mxu0 0
        %992 = vmatprep.subr.bf16.mxu0 0
        %993 = vmatpush1.bf16.msra.mxu0 0
        %994 = vmatprep.subr.bf16.mxu0 0
        %995 = vmatpush1.bf16.msra.mxu0 0
        %996 = vmatprep.subr.bf16.mxu0 0
        %997 = vmatpush1.bf16.msra.mxu0 0
        %998 = vmatprep.subr.bf16.mxu0 0
        %999 = vmatpush1.bf16.msra.mxu0 0
        %1000 = vmatprep.subr.bf16.mxu0 0
        %1001 = vmatpush1.bf16.msra.mxu0 0
        %1002 = vmatprep.subr.bf16.mxu0 0
        %1003 = vmatpush1.bf16.msra.mxu0 0
        %1004 = vmatprep.subr.bf16.mxu0 0
        %1005 = vmatpush1.bf16.msra.mxu0 0
        %1006 = vmatprep.subr.bf16.mxu0 0
        %1007 = vmatpush1.bf16.msra.mxu0 0
        %1008 = vmatprep.subr.bf16.mxu0 0
        %1009 = vmatpush1.bf16.msra.mxu0 0
        %1010 = vmatprep.mubr.bf16.mxu0 0
        %1011 = vmatmul.mubr.bf16.gmra.mrb[0].mxu0 %v976
        %v1012 = vpop.f32.mrb[0].mxu0
        %v1013 = vadd.f32 0.0, %v1012
        %v1014 = vpop.f32.mrb[0].mxu0
        %v1015 = vpop.f32.mrb[0].mxu0
        %v1016 = vadd.f32 0.0, %v1015
        %v1017 = vpop.f32.mrb[0].mxu0
        %1018 = vdwg.mxu0
        %1019 = vrot.lane.b32.xlu0 %v766, 112
        %v1020 = vpop.permute.xlu0 %1019
        %1021 = vrot.lane.b32.xlu0 %v766, 80
        %v1022 = vpop.permute.xlu0 %1021
        %v1024 = vsel %vm770, %v1020, 0
        %v1027 = vsel %vm770, %v1022, 0
        %1029 = vmatprep.subr.bf16.mxu0 0
        %1030 = vmatpush1.bf16.xpose.msra.mxu0 %v1027
        %1031 = vmatprep.subr.bf16.mxu0 0
        %1032 = vmatpush1.bf16.xpose.msra.mxu0 0
        %1033 = vmatprep.subr.bf16.mxu0 0
        %1034 = vmatpush1.bf16.xpose.msra.mxu0 0
        %1035 = vmatprep.subr.bf16.mxu0 0
        %1036 = vmatpush1.bf16.xpose.msra.mxu0 0
        %1037 = vmatprep.subr.bf16.mxu0 0
        %1038 = vmatpush1.bf16.xpose.msra.mxu0 0
        %1039 = vmatprep.subr.bf16.mxu0 0
        %1040 = vmatpush1.bf16.xpose.msra.mxu0 0
        %1041 = vmatprep.subr.bf16.mxu0 0
        %1042 = vmatpush1.bf16.xpose.msra.mxu0 0
        %1043 = vmatprep.subr.bf16.mxu0 0
        %1044 = vmatpush1.bf16.xpose.msra.mxu0 0
        %1045 = vmatprep.subr.bf16.mxu0 0
        %1046 = vmatpush1.bf16.xpose.msra.mxu0 0
        %1047 = vmatprep.subr.bf16.mxu0 0
        %1048 = vmatpush1.bf16.xpose.msra.mxu0 0
        %1049 = vmatprep.subr.bf16.mxu0 0
        %1050 = vmatpush1.bf16.xpose.msra.mxu0 0
        %1051 = vmatprep.subr.bf16.mxu0 0
        %1052 = vmatpush1.bf16.xpose.msra.mxu0 0
        %1053 = vmatprep.subr.bf16.mxu0 0
        %1054 = vmatpush1.bf16.xpose.msra.mxu0 0
        %1055 = vmatprep.subr.bf16.mxu0 0
        %1056 = vmatpush1.bf16.xpose.msra.mxu0 0
        %1057 = vmatprep.subr.bf16.mxu0 0
        %1058 = vmatpush1.bf16.xpose.msra.mxu0 0
        %1059 = vmatprep.subr.bf16.mxu0 0
        %1060 = vmatpush1.bf16.xpose.msra.mxu0 0
        %1061 = vmatprep.mubr.bf16.mxu0 0
        %1062 = vmatmul.mubr.bf16.gmra.mrb[0].mxu0 %v1024
        %v1063 = vpop.f32.mrb[0].mxu0
        %v1064 = vadd.f32 0.0, %v1063
        %v1065 = vpop.f32.mrb[0].mxu0
        %v1066 = vpop.f32.mrb[0].mxu0
        %v1067 = vadd.f32 0.0, %v1066
        %v1068 = vpop.f32.mrb[0].mxu0
        %1069 = vdwg.mxu0
        %v1070 = vmul.f32 %v1064, 0.35355338
        %v1071 = vmul.f32 %v1067, 0.35355338
        %v1072 = vsel %vm820, %v1070, -inf
        %1073 = vmax.xlane.f32.xlu0 %v1072
        %v1074 = vpop.xlane.xlu0 %1073
        %v1075 = vsel %vm820, %v1071, -inf
        %1076 = vmax.xlane.f32.xlu0 %v1075
        %v1077 = vpop.xlane.xlu0 %1076
        %v1078 = vsub.f32 %v1070, %v1074
        %v1079 = vsub.f32 %v1071, %v1077
        %v1080 = vmul.f32 %v1078, 1.442695
        %v1081 = vpow.pop %v1080
        %v1082 = vmul.f32 %v1079, 1.442695
        %v1083 = vpow.pop %v1082
        %v1084 = vsel %vm820, %v1081, 0.0
        %1085 = vadd.xlane.f32.xlu0 %v1084
        %v1086 = vpop.xlane.xlu0 %1085
        %v1087 = vsel %vm820, %v1083, 0.0
        %1088 = vadd.xlane.f32.xlu0 %v1087
        %v1089 = vpop.xlane.xlu0 %1088
        %v1090 = vrcp.pop %v1086
        %v1091 = vrcp.pop %v1089
        %v1092 = vmul.f32 %v1081, %v1090
        %v1093 = vmul.f32 %v1083, %v1091
        %s1094 = scalar_lea.vmem %s630, 32 [#allocation2]
        %1095 = vst.msk [vmem:[%s1094] sm:$0xff] %vm820, %v1092
        %1096 = vst.msk [vmem:[%s1094 + $0x8] sm:$0xff] %vm820, %v1093
        %v1097 = vpack.c.bf16 %v1093, %v1092
        %1098 = vrot.lane.b32.xlu0 %v766, 48
        %v1099 = vpop.permute.xlu0 %1098
        %v1102 = vsel %vm820, %v1097, 0
        %1104 = vmatprep.subr.bf16.mxu0 0
        %1105 = vmatpush1.bf16.msra.mxu0 %v1099
        %1106 = vmatprep.subr.bf16.mxu0 0
        %1107 = vmatpush1.bf16.msra.mxu0 0
        %1108 = vmatprep.subr.bf16.mxu0 0
        %1109 = vmatpush1.bf16.msra.mxu0 0
        %1110 = vmatprep.subr.bf16.mxu0 0
        %1111 = vmatpush1.bf16.msra.mxu0 0
        %1112 = vmatprep.subr.bf16.mxu0 0
        %1113 = vmatpush1.bf16.msra.mxu0 0
        %1114 = vmatprep.subr.bf16.mxu0 0
        %1115 = vmatpush1.bf16.msra.mxu0 0
        %1116 = vmatprep.subr.bf16.mxu0 0
        %1117 = vmatpush1.bf16.msra.mxu0 0
        %1118 = vmatprep.subr.bf16.mxu0 0
        %1119 = vmatpush1.bf16.msra.mxu0 0
        %1120 = vmatprep.subr.bf16.mxu0 0
        %1121 = vmatpush1.bf16.msra.mxu0 0
        %1122 = vmatprep.subr.bf16.mxu0 0
        %1123 = vmatpush1.bf16.msra.mxu0 0
        %1124 = vmatprep.subr.bf16.mxu0 0
        %1125 = vmatpush1.bf16.msra.mxu0 0
        %1126 = vmatprep.subr.bf16.mxu0 0
        %1127 = vmatpush1.bf16.msra.mxu0 0
        %1128 = vmatprep.subr.bf16.mxu0 0
        %1129 = vmatpush1.bf16.msra.mxu0 0
        %1130 = vmatprep.subr.bf16.mxu0 0
        %1131 = vmatpush1.bf16.msra.mxu0 0
        %1132 = vmatprep.subr.bf16.mxu0 0
        %1133 = vmatpush1.bf16.msra.mxu0 0
        %1134 = vmatprep.subr.bf16.mxu0 0
        %1135 = vmatpush1.bf16.msra.mxu0 0
        %1136 = vmatprep.mubr.bf16.mxu0 0
        %1137 = vmatmul.mubr.bf16.gmra.mrb[0].mxu0 %v1102
        %v1138 = vpop.f32.mrb[0].mxu0
        %v1139 = vadd.f32 0.0, %v1138
        %v1140 = vpop.f32.mrb[0].mxu0
        %v1141 = vpop.f32.mrb[0].mxu0
        %v1142 = vadd.f32 0.0, %v1141
        %v1143 = vpop.f32.mrb[0].mxu0
        %1144 = vdwg.mxu0
        %1145 = vrot.lane.b32.xlu0 %v766, 104
        %v1146 = vpop.permute.xlu0 %1145
        %1147 = vrot.lane.b32.xlu0 %v766, 72
        %v1148 = vpop.permute.xlu0 %1147
        %v1150 = vsel %vm770, %v1146, 0
        %v1153 = vsel %vm770, %v1148, 0
        %1155 = vmatprep.subr.bf16.mxu0 0
        %1156 = vmatpush1.bf16.xpose.msra.mxu0 %v1153
        %1157 = vmatprep.subr.bf16.mxu0 0
        %1158 = vmatpush1.bf16.xpose.msra.mxu0 0
        %1159 = vmatprep.subr.bf16.mxu0 0
        %1160 = vmatpush1.bf16.xpose.msra.mxu0 0
        %1161 = vmatprep.subr.bf16.mxu0 0
        %1162 = vmatpush1.bf16.xpose.msra.mxu0 0
        %1163 = vmatprep.subr.bf16.mxu0 0
        %1164 = vmatpush1.bf16.xpose.msra.mxu0 0
        %1165 = vmatprep.subr.bf16.mxu0 0
        %1166 = vmatpush1.bf16.xpose.msra.mxu0 0
        %1167 = vmatprep.subr.bf16.mxu0 0
        %1168 = vmatpush1.bf16.xpose.msra.mxu0 0
        %1169 = vmatprep.subr.bf16.mxu0 0
        %1170 = vmatpush1.bf16.xpose.msra.mxu0 0
        %1171 = vmatprep.subr.bf16.mxu0 0
        %1172 = vmatpush1.bf16.xpose.msra.mxu0 0
        %1173 = vmatprep.subr.bf16.mxu0 0
        %1174 = vmatpush1.bf16.xpose.msra.mxu0 0
        %1175 = vmatprep.subr.bf16.mxu0 0
        %1176 = vmatpush1.bf16.xpose.msra.mxu0 0
        %1177 = vmatprep.subr.bf16.mxu0 0
        %1178 = vmatpush1.bf16.xpose.msra.mxu0 0
        %1179 = vmatprep.subr.bf16.mxu0 0
        %1180 = vmatpush1.bf16.xpose.msra.mxu0 0
        %1181 = vmatprep.subr.bf16.mxu0 0
        %1182 = vmatpush1.bf16.xpose.msra.mxu0 0
        %1183 = vmatprep.subr.bf16.mxu0 0
        %1184 = vmatpush1.bf16.xpose.msra.mxu0 0
        %1185 = vmatprep.subr.bf16.mxu0 0
        %1186 = vmatpush1.bf16.xpose.msra.mxu0 0
        %1187 = vmatprep.mubr.bf16.mxu0 0
        %1188 = vmatmul.mubr.bf16.gmra.mrb[0].mxu0 %v1150
        %v1189 = vpop.f32.mrb[0].mxu0
        %v1190 = vadd.f32 0.0, %v1189
        %v1191 = vpop.f32.mrb[0].mxu0
        %v1192 = vpop.f32.mrb[0].mxu0
        %v1193 = vadd.f32 0.0, %v1192
        %v1194 = vpop.f32.mrb[0].mxu0
        %1195 = vdwg.mxu0
        %v1196 = vmul.f32 %v1190, 0.35355338
        %v1197 = vmul.f32 %v1193, 0.35355338
        %v1198 = vsel %vm820, %v1196, -inf
        %1199 = vmax.xlane.f32.xlu0 %v1198
        %v1200 = vpop.xlane.xlu0 %1199
        %v1201 = vsel %vm820, %v1197, -inf
        %1202 = vmax.xlane.f32.xlu0 %v1201
        %v1203 = vpop.xlane.xlu0 %1202
        %v1204 = vsub.f32 %v1196, %v1200
        %v1205 = vsub.f32 %v1197, %v1203
        %v1206 = vmul.f32 %v1204, 1.442695
        %v1207 = vpow.pop %v1206
        %v1208 = vmul.f32 %v1205, 1.442695
        %v1209 = vpow.pop %v1208
        %v1210 = vsel %vm820, %v1207, 0.0
        %1211 = vadd.xlane.f32.xlu0 %v1210
        %v1212 = vpop.xlane.xlu0 %1211
        %v1213 = vsel %vm820, %v1209, 0.0
        %1214 = vadd.xlane.f32.xlu0 %v1213
        %v1215 = vpop.xlane.xlu0 %1214
        %v1216 = vrcp.pop %v1212
        %v1217 = vrcp.pop %v1215
        %v1218 = vmul.f32 %v1207, %v1216
        %v1219 = vmul.f32 %v1209, %v1217
        %s1220 = scalar_lea.vmem %s630, 48 [#allocation2]
        %1221 = vst.msk [vmem:[%s1220] sm:$0xff] %vm820, %v1218
        %1222 = vst.msk [vmem:[%s1220 + $0x8] sm:$0xff] %vm820, %v1219
        %v1223 = vpack.c.bf16 %v1219, %v1218
        %1224 = vrot.lane.b32.xlu0 %v766, 40
        %v1225 = vpop.permute.xlu0 %1224
        %v1228 = vsel %vm820, %v1223, 0
        %1230 = vmatprep.subr.bf16.mxu0 0
        %1231 = vmatpush1.bf16.msra.mxu0 %v1225
        %1232 = vmatprep.subr.bf16.mxu0 0
        %1233 = vmatpush1.bf16.msra.mxu0 0
        %1234 = vmatprep.subr.bf16.mxu0 0
        %1235 = vmatpush1.bf16.msra.mxu0 0
        %1236 = vmatprep.subr.bf16.mxu0 0
        %1237 = vmatpush1.bf16.msra.mxu0 0
        %1238 = vmatprep.subr.bf16.mxu0 0
        %1239 = vmatpush1.bf16.msra.mxu0 0
        %1240 = vmatprep.subr.bf16.mxu0 0
        %1241 = vmatpush1.bf16.msra.mxu0 0
        %1242 = vmatprep.subr.bf16.mxu0 0
        %1243 = vmatpush1.bf16.msra.mxu0 0
        %1244 = vmatprep.subr.bf16.mxu0 0
        %1245 = vmatpush1.bf16.msra.mxu0 0
        %1246 = vmatprep.subr.bf16.mxu0 0
        %1247 = vmatpush1.bf16.msra.mxu0 0
        %1248 = vmatprep.subr.bf16.mxu0 0
        %1249 = vmatpush1.bf16.msra.mxu0 0
        %1250 = vmatprep.subr.bf16.mxu0 0
        %1251 = vmatpush1.bf16.msra.mxu0 0
        %1252 = vmatprep.subr.bf16.mxu0 0
        %1253 = vmatpush1.bf16.msra.mxu0 0
        %1254 = vmatprep.subr.bf16.mxu0 0
        %1255 = vmatpush1.bf16.msra.mxu0 0
        %1256 = vmatprep.subr.bf16.mxu0 0
        %1257 = vmatpush1.bf16.msra.mxu0 0
        %1258 = vmatprep.subr.bf16.mxu0 0
        %1259 = vmatpush1.bf16.msra.mxu0 0
        %1260 = vmatprep.subr.bf16.mxu0 0
        %1261 = vmatpush1.bf16.msra.mxu0 0
        %1262 = vmatprep.mubr.bf16.mxu0 0
        %1263 = vmatmul.mubr.bf16.gmra.mrb[0].mxu0 %v1228
        %v1264 = vpop.f32.mrb[0].mxu0
        %v1265 = vadd.f32 0.0, %v1264
        %v1266 = vpop.f32.mrb[0].mxu0
        %v1267 = vpop.f32.mrb[0].mxu0
        %v1268 = vadd.f32 0.0, %v1267
        %v1269 = vpop.f32.mrb[0].mxu0
        %1270 = vdwg.mxu0
        %1273 = vrot.lane.b32.xlu0 %v1013, 8
        %v1274 = vpop.permute.xlu0 %1273
        %1275 = vrot.lane.b32.xlu0 %v1016, 8
        %v1276 = vpop.permute.xlu0 %1275
        %1281 = vrot.lane.b32.xlu0 %v1139, 16
        %v1282 = vpop.permute.xlu0 %1281
        %1283 = vrot.lane.b32.xlu0 %v1142, 16
        %v1284 = vpop.permute.xlu0 %1283
        %1289 = vrot.lane.b32.xlu0 %v1265, 24
        %v1290 = vpop.permute.xlu0 %1289
        %1291 = vrot.lane.b32.xlu0 %v1268, 24
        %v1292 = vpop.permute.xlu0 %1291
        %v1295 = vsel %vm770, %v887, %v1274
        %v1296 = vsel %vm770, %v890, %v1276
        %v1297 = vsel %vm820, %v1295, %v1282
        %v1298 = vsel %vm820, %v1296, %v1284
        %vm1299 = vcmask 195584
        %v1300 = vsel %vm1299, %v1297, %v1290
        %v1301 = vsel %vm1299, %v1298, %v1292
        %v1302 = vpack.c.bf16 %v1301, %v1300
        %v1303 = vld [vmem:[%s5] sm:$0xff]
        %v1304 = vld [vmem:[%s5 + $0x8] sm:$0xff]
        %v1305 = vld [vmem:[%s5 + $0x10] sm:$0xff]
        %v1306 = vld [vmem:[%s5 + $0x18] sm:$0xff]
        %v1307 = vpack.c.bf16 %v1304, %v1303
        %v1308 = vpack.c.bf16 %v1306, %v1305
        %v1309 = vld [vmem:[%s6] sm:$0x1]
        %v1311 = vlaneseq
        %v1312 = vshrl.u32 %v1311, 7
        %v1313 = vsub.s32 0, %v1312
        %v1314 = vrot.slane %v1309, %v1313
        %v1317 = vsel %vm721, %v1302, 0
        %1319 = vmatprep.subr.bf16.mxu0 0
        %1320 = vmatpush1.bf16.msra.mxu0 %v1307
        %1321 = vmatprep.subr.bf16.mxu0 0
        %1322 = vmatpush1.bf16.msra.mxu0 %v1308
        %1323 = vmatprep.subr.bf16.mxu0 0
        %1324 = vmatpush1.bf16.msra.mxu0 0
        %1325 = vmatprep.subr.bf16.mxu0 0
        %1326 = vmatpush1.bf16.msra.mxu0 0
        %1327 = vmatprep.subr.bf16.mxu0 0
        %1328 = vmatpush1.bf16.msra.mxu0 0
        %1329 = vmatprep.subr.bf16.mxu0 0
        %1330 = vmatpush1.bf16.msra.mxu0 0
        %1331 = vmatprep.subr.bf16.mxu0 0
        %1332 = vmatpush1.bf16.msra.mxu0 0
        %1333 = vmatprep.subr.bf16.mxu0 0
        %1334 = vmatpush1.bf16.msra.mxu0 0
        %1335 = vmatprep.subr.bf16.mxu0 0
        %1336 = vmatpush1.bf16.msra.mxu0 0
        %1337 = vmatprep.subr.bf16.mxu0 0
        %1338 = vmatpush1.bf16.msra.mxu0 0
        %1339 = vmatprep.subr.bf16.mxu0 0
        %1340 = vmatpush1.bf16.msra.mxu0 0
        %1341 = vmatprep.subr.bf16.mxu0 0
        %1342 = vmatpush1.bf16.msra.mxu0 0
        %1343 = vmatprep.subr.bf16.mxu0 0
        %1344 = vmatpush1.bf16.msra.mxu0 0
        %1345 = vmatprep.subr.bf16.mxu0 0
        %1346 = vmatpush1.bf16.msra.mxu0 0
        %1347 = vmatprep.subr.bf16.mxu0 0
        %1348 = vmatpush1.bf16.msra.mxu0 0
        %1349 = vmatprep.subr.bf16.mxu0 0
        %1350 = vmatpush1.bf16.msra.mxu0 0
        %1351 = vmatprep.mubr.bf16.mxu0 0
        %1352 = vmatmul.mubr.bf16.gmra.mrb[0].mxu0 %v1317
        %v1353 = vpop.f32.mrb[0].mxu0
        %v1354 = vadd.f32 %v1314, %v1353
        %v1355 = vpop.f32.mrb[0].mxu0
        %v1356 = vpop.f32.mrb[0].mxu0
        %v1357 = vadd.f32 %v1314, %v1356
        %v1358 = vpop.f32.mrb[0].mxu0
        %1359 = vdwg.mxu0
        %v1360 = vadd.f32 %v701, %v1354
        %v1361 = vadd.f32 %v704, %v1357
        %v1362 = vsel %vm721, %v1360, 0.0
        %1363 = vadd.xlane.f32.xlu0 %v1362
        %v1364 = vpop.xlane.xlu0 %1363
        %v1365 = vsel %vm721, %v1361, 0.0
        %1366 = vadd.xlane.f32.xlu0 %v1365
        %v1367 = vpop.xlane.xlu0 %1366
        %v1368 = vrcp.pop 32.0
        %v1369 = vmul.f32 %v1364, %v1368
        %v1370 = vmul.f32 %v1367, %v1368
        %v1371 = vsub.f32 %v1360, %v1369
        %v1372 = vsub.f32 %v1361, %v1370
        %v1373 = vmul.f32 %v1371, %v1371
        %v1374 = vmul.f32 %v1372, %v1372
        %v1375 = vsel %vm721, %v1373, 0.0
        %1376 = vadd.xlane.f32.xlu0 %v1375
        %v1377 = vpop.xlane.xlu0 %1376
        %v1378 = vsel %vm721, %v1374, 0.0
        %1379 = vadd.xlane.f32.xlu0 %v1378
        %v1380 = vpop.xlane.xlu0 %1379
        %v1381 = vmul.f32 %v1377, %v1368
        %v1382 = vmul.f32 %v1380, %v1368
        %v1383 = vadd.f32 %v1381, 1e-05
        %v1384 = vadd.f32 %v1382, 1e-05
        %v1385 = vrsqrt.pop %v1383
        %v1386 = vrsqrt.pop %v1384
        %v1387 = vmul.f32 %v1371, %v1385
        %v1388 = vmul.f32 %v1372, %v1386
        %v1389 = vld [vmem:[%s7] sm:$0x1]
        %v1391 = vlaneseq
        %v1392 = vshrl.u32 %v1391, 7
        %v1393 = vsub.s32 0, %v1392
        %v1394 = vrot.slane %v1389, %v1393
        %v1396 = vmul.f32 %v1387, %v1394
        %v1397 = vmul.f32 %v1388, %v1394
        %v1398 = vld [vmem:[%s8] sm:$0x1]
        %v1400 = vlaneseq
        %v1401 = vshrl.u32 %v1400, 7
        %v1402 = vsub.s32 0, %v1401
        %v1403 = vrot.slane %v1398, %v1402
        %v1405 = vadd.f32 %v1396, %v1403
        %v1406 = vadd.f32 %v1397, %v1403
        %v1407 = vpack.c.bf16 %v1406, %v1405
        %v1408 = vld [vmem:[%s9] sm:$0xff]
        %v1409 = vld [vmem:[%s9 + $0x8] sm:$0xff]
        %v1410 = vld [vmem:[%s9 + $0x10] sm:$0xff]
        %v1411 = vld [vmem:[%s9 + $0x18] sm:$0xff]
        %v1412 = vpack.c.bf16 %v1409, %v1408
        %v1413 = vpack.c.bf16 %v1411, %v1410
        %v1414 = vld [vmem:[%s10] sm:$0x1]
        %v1416 = vlaneseq
        %v1417 = vshrl.u32 %v1416, 7
        %v1418 = vsub.s32 0, %v1417
        %v1419 = vrot.slane %v1414, %v1418
        %v1422 = vsel %vm721, %v1407, 0
        %1424 = vmatprep.subr.bf16.mxu0 0
        %1425 = vmatpush1.bf16.msra.mxu0 %v1412
        %1426 = vmatprep.subr.bf16.mxu0 0
        %1427 = vmatpush1.bf16.msra.mxu0 %v1413
        %1428 = vmatprep.subr.bf16.mxu0 0
        %1429 = vmatpush1.bf16.msra.mxu0 0
        %1430 = vmatprep.subr.bf16.mxu0 0
        %1431 = vmatpush1.bf16.msra.mxu0 0
        %1432 = vmatprep.subr.bf16.mxu0 0
        %1433 = vmatpush1.bf16.msra.mxu0 0
        %1434 = vmatprep.subr.bf16.mxu0 0
        %1435 = vmatpush1.bf16.msra.mxu0 0
        %1436 = vmatprep.subr.bf16.mxu0 0
        %1437 = vmatpush1.bf16.msra.mxu0 0
        %1438 = vmatprep.subr.bf16.mxu0 0
        %1439 = vmatpush1.bf16.msra.mxu0 0
        %1440 = vmatprep.subr.bf16.mxu0 0
        %1441 = vmatpush1.bf16.msra.mxu0 0
        %1442 = vmatprep.subr.bf16.mxu0 0
        %1443 = vmatpush1.bf16.msra.mxu0 0
        %1444 = vmatprep.subr.bf16.mxu0 0
        %1445 = vmatpush1.bf16.msra.mxu0 0
        %1446 = vmatprep.subr.bf16.mxu0 0
        %1447 = vmatpush1.bf16.msra.mxu0 0
        %1448 = vmatprep.subr.bf16.mxu0 0
        %1449 = vmatpush1.bf16.msra.mxu0 0
        %1450 = vmatprep.subr.bf16.mxu0 0
        %1451 = vmatpush1.bf16.msra.mxu0 0
        %1452 = vmatprep.subr.bf16.mxu0 0
        %1453 = vmatpush1.bf16.msra.mxu0 0
        %1454 = vmatprep.subr.bf16.mxu0 0
        %1455 = vmatpush1.bf16.msra.mxu0 0
        %1456 = vmatprep.mubr.bf16.mxu0 0
        %1457 = vmatmul.mubr.bf16.gmra.mrb[0].mxu0 %v1422
        %v1458 = vpop.f32.mrb[0].mxu0
        %v1459 = vadd.f32 %v1419, %v1458
        %v1460 = vpop.f32.mrb[0].mxu0
        %v1461 = vpop.f32.mrb[0].mxu0
        %v1462 = vadd.f32 %v1419, %v1461
        %v1463 = vpop.f32.mrb[0].mxu0
        %1464 = vdwg.mxu0
        %v1465 = vmax.f32 %v1459, 0.0
        %v1466 = vmax.f32 %v1462, 0.0
        %v1467 = vpack.c.bf16 %v1466, %v1465
        %v1468 = vld [vmem:[%s11] sm:$0xff]
        %v1469 = vld [vmem:[%s11 + $0x8] sm:$0xff]
        %v1470 = vld [vmem:[%s11 + $0x10] sm:$0xff]
        %v1471 = vld [vmem:[%s11 + $0x18] sm:$0xff]
        %v1472 = vld [vmem:[%s11 + $0x20] sm:$0xff]
        %v1473 = vld [vmem:[%s11 + $0x28] sm:$0xff]
        %v1474 = vld [vmem:[%s11 + $0x30] sm:$0xff]
        %v1475 = vld [vmem:[%s11 + $0x38] sm:$0xff]
        %v1476 = vld [vmem:[%s11 + $0x40] sm:$0xff]
        %v1477 = vld [vmem:[%s11 + $0x48] sm:$0xff]
        %v1478 = vld [vmem:[%s11 + $0x50] sm:$0xff]
        %v1479 = vld [vmem:[%s11 + $0x58] sm:$0xff]
        %v1480 = vld [vmem:[%s11 + $0x60] sm:$0xff]
        %v1481 = vld [vmem:[%s11 + $0x68] sm:$0xff]
        %v1482 = vld [vmem:[%s11 + $0x70] sm:$0xff]
        %v1483 = vld [vmem:[%s11 + $0x78] sm:$0xff]
        %v1484 = vpack.c.bf16 %v1469, %v1468
        %v1485 = vpack.c.bf16 %v1471, %v1470
        %v1486 = vpack.c.bf16 %v1473, %v1472
        %v1487 = vpack.c.bf16 %v1475, %v1474
        %v1488 = vpack.c.bf16 %v1477, %v1476
        %v1489 = vpack.c.bf16 %v1479, %v1478
        %v1490 = vpack.c.bf16 %v1481, %v1480
        %v1491 = vpack.c.bf16 %v1483, %v1482
        %v1492 = vld [vmem:[%s12] sm:$0x1]
        %v1494 = vlaneseq
        %v1495 = vshrl.u32 %v1494, 7
        %v1496 = vsub.s32 0, %v1495
        %v1497 = vrot.slane %v1492, %v1496
        %1499 = vmatprep.subr.bf16.mxu0 0
        %1500 = vmatpush1.bf16.msra.mxu0 %v1484
        %1501 = vmatprep.subr.bf16.mxu0 0
        %1502 = vmatpush1.bf16.msra.mxu0 %v1485
        %1503 = vmatprep.subr.bf16.mxu0 0
        %1504 = vmatpush1.bf16.msra.mxu0 %v1486
        %1505 = vmatprep.subr.bf16.mxu0 0
        %1506 = vmatpush1.bf16.msra.mxu0 %v1487
        %1507 = vmatprep.subr.bf16.mxu0 0
        %1508 = vmatpush1.bf16.msra.mxu0 %v1488
        %1509 = vmatprep.subr.bf16.mxu0 0
        %1510 = vmatpush1.bf16.msra.mxu0 %v1489
        %1511 = vmatprep.subr.bf16.mxu0 0
        %1512 = vmatpush1.bf16.msra.mxu0 %v1490
        %1513 = vmatprep.subr.bf16.mxu0 0
        %1514 = vmatpush1.bf16.msra.mxu0 %v1491
        %1515 = vmatprep.subr.bf16.mxu0 0
        %1516 = vmatpush1.bf16.msra.mxu0 0
        %1517 = vmatprep.subr.bf16.mxu0 0
        %1518 = vmatpush1.bf16.msra.mxu0 0
        %1519 = vmatprep.subr.bf16.mxu0 0
        %1520 = vmatpush1.bf16.msra.mxu0 0
        %1521 = vmatprep.subr.bf16.mxu0 0
        %1522 = vmatpush1.bf16.msra.mxu0 0
        %1523 = vmatprep.subr.bf16.mxu0 0
        %1524 = vmatpush1.bf16.msra.mxu0 0
        %1525 = vmatprep.subr.bf16.mxu0 0
        %1526 = vmatpush1.bf16.msra.mxu0 0
        %1527 = vmatprep.subr.bf16.mxu0 0
        %1528 = vmatpush1.bf16.msra.mxu0 0
        %1529 = vmatprep.subr.bf16.mxu0 0
        %1530 = vmatpush1.bf16.msra.mxu0 0
        %1531 = vmatprep.mubr.bf16.mxu0 0
        %1532 = vmatmul.mubr.bf16.gmra.mrb[0].mxu0 %v1467
        %v1533 = vpop.f32.mrb[0].mxu0
        %v1534 = vadd.f32 %v1497, %v1533
        %v1535 = vpop.f32.mrb[0].mxu0
        %v1536 = vpop.f32.mrb[0].mxu0
        %v1537 = vadd.f32 %v1497, %v1536
        %v1538 = vpop.f32.mrb[0].mxu0
        %1539 = vdwg.mxu0
        %v1540 = vadd.f32 %v1405, %v1534
        %v1541 = vadd.f32 %v1406, %v1537
        %v1542 = vsel %vm721, %v1540, 0.0
        %1543 = vadd.xlane.f32.xlu0 %v1542
        %v1544 = vpop.xlane.xlu0 %1543
        %v1545 = vsel %vm721, %v1541, 0.0
        %1546 = vadd.xlane.f32.xlu0 %v1545
        %v1547 = vpop.xlane.xlu0 %1546
        %v1548 = vmul.f32 %v1544, %v1368
        %v1549 = vmul.f32 %v1547, %v1368
        %v1550 = vsub.f32 %v1540, %v1548
        %v1551 = vsub.f32 %v1541, %v1549
        %v1552 = vmul.f32 %v1550, %v1550
        %v1553 = vmul.f32 %v1551, %v1551
        %v1554 = vsel %vm721, %v1552, 0.0
        %1555 = vadd.xlane.f32.xlu0 %v1554
        %v1556 = vpop.xlane.xlu0 %1555
        %v1557 = vsel %vm721, %v1553, 0.0
        %1558 = vadd.xlane.f32.xlu0 %v1557
        %v1559 = vpop.xlane.xlu0 %1558
        %v1560 = vmul.f32 %v1556, %v1368
        %v1561 = vmul.f32 %v1559, %v1368
        %v1562 = vadd.f32 %v1560, 1e-05
        %v1563 = vadd.f32 %v1561, 1e-05
        %v1564 = vrsqrt.pop %v1562
        %v1565 = vrsqrt.pop %v1563
        %v1566 = vmul.f32 %v1550, %v1564
        %v1567 = vmul.f32 %v1551, %v1565
        %v1568 = vld [vmem:[%s13] sm:$0x1]
        %v1570 = vlaneseq
        %v1571 = vshrl.u32 %v1570, 7
        %v1572 = vsub.s32 0, %v1571
        %v1573 = vrot.slane %v1568, %v1572
        %v1575 = vmul.f32 %v1566, %v1573
        %v1576 = vmul.f32 %v1567, %v1573
        %v1577 = vld [vmem:[%s14] sm:$0x1]
        %v1579 = vlaneseq
        %v1580 = vshrl.u32 %v1579, 7
        %v1581 = vsub.s32 0, %v1580
        %v1582 = vrot.slane %v1577, %v1581
        %v1584 = vadd.f32 %v1575, %v1582
        %v1585 = vadd.f32 %v1576, %v1582
        %v1586 = vsel %vm721, %v1584, 0.0
        %1587 = vadd.xlane.f32.xlu0 %v1586
        %v1588 = vpop.xlane.xlu0 %1587
        %v1589 = vsel %vm721, %v1585, 0.0
        %1590 = vadd.xlane.f32.xlu0 %v1589
        %v1591 = vpop.xlane.xlu0 %1590
        %v1592 = vmul.f32 %v1588, %v1368
        %v1593 = vmul.f32 %v1591, %v1368
        %v1594 = vsub.f32 %v1584, %v1592
        %v1595 = vsub.f32 %v1585, %v1593
        %v1596 = vmul.f32 %v1594, %v1594
        %v1597 = vmul.f32 %v1595, %v1595
        %v1598 = vsel %vm721, %v1596, 0.0
        %1599 = vadd.xlane.f32.xlu0 %v1598
        %v1600 = vpop.xlane.xlu0 %1599
        %v1601 = vsel %vm721, %v1597, 0.0
        %1602 = vadd.xlane.f32.xlu0 %v1601
        %v1603 = vpop.xlane.xlu0 %1602
        %v1604 = vmul.f32 %v1600, %v1368
        %v1605 = vmul.f32 %v1603, %v1368
        %v1606 = vadd.f32 %v1604, 1e-05
        %v1607 = vadd.f32 %v1605, 1e-05
        %v1608 = vrsqrt.pop %v1606
        %v1609 = vrsqrt.pop %v1607
        %v1610 = vmul.f32 %v1594, %v1608
        %v1611 = vmul.f32 %v1595, %v1609
        %v1612 = vld [vmem:[%s15] sm:$0x1]
        %v1614 = vlaneseq
        %v1615 = vshrl.u32 %v1614, 7
        %v1616 = vsub.s32 0, %v1615
        %v1617 = vrot.slane %v1612, %v1616
        %v1619 = vmul.f32 %v1610, %v1617
        %v1620 = vmul.f32 %v1611, %v1617
        %v1621 = vld [vmem:[%s16] sm:$0x1]
        %v1623 = vlaneseq
        %v1624 = vshrl.u32 %v1623, 7
        %v1625 = vsub.s32 0, %v1624
        %v1626 = vrot.slane %v1621, %v1625
        %v1628 = vadd.f32 %v1619, %v1626
        %v1629 = vadd.f32 %v1620, %v1626
        %v1630 = vpack.c.bf16 %v1629, %v1628
        %v1631 = vld [vmem:[%s17] sm:$0xff]
        %v1632 = vld [vmem:[%s17 + $0x8] sm:$0xff]
        %v1633 = vld [vmem:[%s17 + $0x10] sm:$0xff]
        %v1634 = vld [vmem:[%s17 + $0x18] sm:$0xff]
        %v1635 = vpack.c.bf16 %v1632, %v1631
        %v1636 = vpack.c.bf16 %v1634, %v1633
        %v1637 = vld [vmem:[%s18] sm:$0x1]
        %v1639 = vlaneseq
        %v1640 = vshrl.u32 %v1639, 7
        %v1641 = vsub.s32 0, %v1640
        %v1642 = vrot.slane %v1637, %v1641
        %v1645 = vsel %vm721, %v1630, 0
        %1647 = vmatprep.subr.bf16.mxu0 0
        %1648 = vmatpush1.bf16.msra.mxu0 %v1635
        %1649 = vmatprep.subr.bf16.mxu0 0
        %1650 = vmatpush1.bf16.msra.mxu0 %v1636
        %1651 = vmatprep.subr.bf16.mxu0 0
        %1652 = vmatpush1.bf16.msra.mxu0 0
        %1653 = vmatprep.subr.bf16.mxu0 0
        %1654 = vmatpush1.bf16.msra.mxu0 0
        %1655 = vmatprep.subr.bf16.mxu0 0
        %1656 = vmatpush1.bf16.msra.mxu0 0
        %1657 = vmatprep.subr.bf16.mxu0 0
        %1658 = vmatpush1.bf16.msra.mxu0 0
        %1659 = vmatprep.subr.bf16.mxu0 0
        %1660 = vmatpush1.bf16.msra.mxu0 0
        %1661 = vmatprep.subr.bf16.mxu0 0
        %1662 = vmatpush1.bf16.msra.mxu0 0
        %1663 = vmatprep.subr.bf16.mxu0 0
        %1664 = vmatpush1.bf16.msra.mxu0 0
        %1665 = vmatprep.subr.bf16.mxu0 0
        %1666 = vmatpush1.bf16.msra.mxu0 0
        %1667 = vmatprep.subr.bf16.mxu0 0
        %1668 = vmatpush1.bf16.msra.mxu0 0
        %1669 = vmatprep.subr.bf16.mxu0 0
        %1670 = vmatpush1.bf16.msra.mxu0 0
        %1671 = vmatprep.subr.bf16.mxu0 0
        %1672 = vmatpush1.bf16.msra.mxu0 0
        %1673 = vmatprep.subr.bf16.mxu0 0
        %1674 = vmatpush1.bf16.msra.mxu0 0
        %1675 = vmatprep.subr.bf16.mxu0 0
        %1676 = vmatpush1.bf16.msra.mxu0 0
        %1677 = vmatprep.subr.bf16.mxu0 0
        %1678 = vmatpush1.bf16.msra.mxu0 0
        %1679 = vmatprep.mubr.bf16.mxu0 0
        %1680 = vmatmul.mubr.bf16.gmra.mrb[0].mxu0 %v1645
        %v1681 = vpop.f32.mrb[0].mxu0
        %v1682 = vadd.f32 %v1642, %v1681
        %v1683 = vpop.f32.mrb[0].mxu0
        %v1684 = vpop.f32.mrb[0].mxu0
        %v1685 = vadd.f32 %v1642, %v1684
        %v1686 = vpop.f32.mrb[0].mxu0
        %1687 = vdwg.mxu0
        %1688 = vst.msk [vmem:[%s640] sm:$0xff] %vm655, %v1682
        %1689 = vst.msk [vmem:[%s640 + $0x8] sm:$0xff] %vm655, %v1685
        %p1690 = scmp.lt.s32.totalorder %s35, 1
        %s1691 = scalar_select %p1690, %s35, 1
        %s1692 = smul.addr %s1691, 2
        %s1693 = smul.addr %s1692, 8
        %s1694 = scalar_lea.vmem %s19, %s1693
        %s1695 = sand.u32 %s473, 1
        %s1696 = scalar_lea.sflag [#allocation3], %s1695
        %s1697 = sand.u32 %s473, 1
        %s1698 = smul.addr %s1697, 64
        %s1699 = scalar_lea.vmem [#allocation2], %s1698
        // Predicated region
        $region97: #{gtformer_block.3} parent=95 // pred_check
          %p1700 = pneg %p457
        $region98: #{gtformer_block.3} parent=95 // pred_check_branch
          %1702 = sbr.rel (%p1700) target = $region100
        $region99: #{gtformer_block.3} parent=95 // pred_region
          _
        $region100: #{gtformer_block.3} parent=95 // pred_fallthru
          _
        // Predicated region
        $region101: #{gtformer_block.3} parent=95 // pred_check
          %p1703 = pneg %p483
        $region102: #{gtformer_block.3} parent=95 // pred_check_branch
          %1705 = sbr.rel (%p1703) target = $region104
        $region103: #{gtformer_block.3} parent=95 // pred_region
          %s1707 = ssub.s32 1024, 1024
          %1708 = vsyncadd %s1696, %s1707
          %s1709 = smul.addr %s35, 8
          %s1710 = smul.addr %s1709, 128
          %s1711 = scalar_lea.hbm %s20, %s1710
          %s1712 = sshll.u32 %s1699, 4
          %s1713 = int_to_ptr.vmem [resolvable:$true] %s1712
          %1718 = dma.vmem_to_hbm [thread:$0]  %s1713, 1024, %s1711, %s1696, 128, 128, 8
        $region104: #{gtformer_block.3} parent=95 // pred_fallthru
          _
      $region96: #{gtformer_block.3} parent=5 // pred_fallthru
        _
      %p1719 = scmp.le.s32.totalorder 2, %s30
      // Predicated region
      $region105: #{gtformer_block.3} parent=5 // pred_check
        %p1720 = pneg %p1719
      $region106: #{gtformer_block.3} parent=5 // pred_check_branch
        %1722 = sbr.rel (%p1720) target = $region108
      $region107: #{gtformer_block.3} parent=5 // pred_region
        %s1723 = ssub.s32 %s30, 2
        // Predicated region
        $region109: #{gtformer_block.3} parent=107 // pred_check
          %p1724 = pneg %p463
        $region110: #{gtformer_block.3} parent=107 // pred_check_branch
          %1726 = sbr.rel (%p1724) target = $region112
        $region111: #{gtformer_block.3} parent=107 // pred_region
          %p1727 = scmp.lt.s32.totalorder %s36, 1
          %s1728 = scalar_select %p1727, %s36, 1
          %s1729 = smul.addr %s1728, 2
          %s1730 = smul.addr %s1729, 8
          %s1731 = scalar_lea.vmem %s19, %s1730
        $region112: #{gtformer_block.3} parent=107 // pred_fallthru
          _
        // Predicated region
        $region113: #{gtformer_block.3} parent=107 // pred_check
          %p1732 = pneg %p489
        $region114: #{gtformer_block.3} parent=107 // pred_check_branch
          %1734 = sbr.rel (%p1732) target = $region116
        $region115: #{gtformer_block.3} parent=107 // pred_region
          %s1735 = sand.u32 %s474, 1
          %s1736 = scalar_lea.sflag [#allocation3], %s1735
          %s1737 = sand.u32 %s474, 1
          %s1738 = smul.addr %s1737, 64
          %s1739 = scalar_lea.vmem [#allocation2], %s1738
          %1740 = dma.done %s1736, 1024
        $region116: #{gtformer_block.3} parent=107 // pred_fallthru
          _
      $region108: #{gtformer_block.3} parent=5 // pred_fallthru
        _
    $region6: #{gtformer_block.3} parent=1 // loop_footer
      %s34 = sadd.s32 1, %s30
    $region7: #{gtformer_block.3} parent=1 // loop_footer_branch
      %29 = sbr.rel target = $region3
    $region8: #{gtformer_block.3} parent=1 // loop_exit
      _
    %1741 = vsyncpa [#allocation3], 1
    %s1742 = scalar_lea.sflag [#allocation3], 1
    %1743 = vsyncpa %s1742, 1

</llo_original>
